<compile_context>
chip_gen: v6e
topology: v6e:2x2x1
jax: 0.10.0
libtpu: 0.0.40
codegen_flags: <defaults>
</compile_context>

<pallas_src>
import functools

import jax
import jax.numpy as jnp
import numpy as np
from jax.experimental import pallas as pl
from jax.experimental.pallas import tpu as pltpu


# ---------------------------------------------------------------------------
# Kernel 1: 3x3 convolution, stride 1, padding 1, no bias  (branch1, cifar)
# ---------------------------------------------------------------------------

def _conv3x3_kernel(x_ref, w_ref, o_ref, *, H, W, Cin, Cout):
    # x_ref: (1, H+2, W+2, Cin)   zero-padded NHWC image (one batch element)
    # w_ref: (3, 3, Cin, Cout)    weights, lane dim = Cout
    # o_ref: (1, H*W, Cout)       flattened-spatial output
    acc = jnp.zeros((H * W, Cout), dtype=jnp.float32)
    for kh in range(3):
        for kw in range(3):
            patch = x_ref[0, kh:kh + H, kw:kw + W, :]     # (H, W, Cin)
            patch2d = patch.reshape(H * W, Cin)           # lane dim unchanged
            acc = acc + jnp.dot(patch2d, w_ref[kh, kw, :, :],
                                preferred_element_type=jnp.float32)
    o_ref[0, :, :] = acc.astype(o_ref.dtype)


def conv3x3_same(x_nchw, weight_oihw):
    """Conv2d(kernel=3, stride=1, padding=1, bias=False). Returns NHWC output."""
    N, Cin, H, W = x_nchw.shape
    Cout = weight_oihw.shape[0]
    dtype = x_nchw.dtype

    # NHWC + spatial zero-padding of 1 (wrapper-side layout plumbing).
    x_nhwc = jnp.transpose(x_nchw, (0, 2, 3, 1))
    xp = jnp.pad(x_nhwc, ((0, 0), (1, 1), (1, 1), (0, 0)))
    # (kh, kw, Cin, Cout): matches PyTorch OIHW weights, transposed for matmul.
    w = jnp.transpose(weight_oihw, (2, 3, 1, 0)).astype(dtype)

    # Pad the contraction (channel) dim up to a multiple of 8 (zeros change
    # nothing) instead of any divisor search -> aligned K / sublane packing.
    cin_pad = (-Cin) % 8
    if cin_pad:
        xp = jnp.pad(xp, ((0, 0), (0, 0), (0, 0), (0, cin_pad)))
        w = jnp.pad(w, ((0, 0), (0, 0), (0, cin_pad), (0, 0)))
    Cin_p = Cin + cin_pad

    kernel = functools.partial(_conv3x3_kernel, H=H, W=W, Cin=Cin_p, Cout=Cout)

    itemsize = jnp.dtype(dtype).itemsize
    cost = pl.CostEstimate(
        flops=2 * N * H * W * 9 * Cin_p * Cout,
        transcendentals=0,
        bytes_accessed=(xp.size + w.size + N * H * W * Cout) * itemsize,
    )

    y = pl.pallas_call(
        kernel,
        out_shape=jax.ShapeDtypeStruct((N, H * W, Cout), dtype),
        grid_spec=pltpu.PrefetchScalarGridSpec(
            num_scalar_prefetch=0,
            # One full image per grid step; "parallel" lets v7x megacore split
            # the batch across its two TensorCores.
            grid=(N,),
            in_specs=[
                pl.BlockSpec((1, H + 2, W + 2, Cin_p), lambda n: (n, 0, 0, 0)),
                pl.BlockSpec((3, 3, Cin_p, Cout), lambda n: (0, 0, 0, 0)),
            ],
            out_specs=pl.BlockSpec((1, H * W, Cout), lambda n: (n, 0, 0)),
        ),
        compiler_params=pltpu.CompilerParams(
            dimension_semantics=("parallel",),
        ),
        cost_estimate=cost,
    )(xp, w)

    return y.reshape(N, H, W, Cout)


# ---------------------------------------------------------------------------
# Kernel 2: MaxPool2d(kernel_size=3, stride=2, padding=1)   (branch2)
# ---------------------------------------------------------------------------

def _maxpool3x3_s2_kernel(x_ref, o_ref, *, Ho, Wo):
    # x_ref: (4, 1, Hh, Wh, C) -- even/odd parity planes of the (-inf)-padded
    #        NHWC image; plane index = 2*h_parity + w_parity.
    # o_ref: (1, Ho, Wo, C)
    # Padded row 2*ho+kh lives in plane with parity (kh & 1) at half-index
    # ho + kh//2, so stride-2 pooling becomes nine unit-stride slices.
    m = None
    for hp, dh in ((0, 0), (1, 0), (0, 1)):
        for wp, dw in ((0, 0), (1, 0), (0, 1)):
            v = x_ref[2 * hp + wp, 0, dh:dh + Ho, dw:dw + Wo, :]
            m = v if m is None else jnp.maximum(m, v)
    o_ref[0, :, :, :] = m.astype(o_ref.dtype)


def maxpool3x3_s2_p1(y_nhwc):
    """MaxPool2d(kernel_size=3, stride=2, padding=1) on an NHWC tensor."""
    N, H, W, C = y_nhwc.shape
    assert H % 2 == 0 and W % 2 == 0, "parity-split pooling expects even H, W"
    Ho = (H - 1) // 2 + 1
    Wo = (W - 1) // 2 + 1

    # PyTorch max-pool padding is implicit -inf padding.
    P = jnp.pad(y_nhwc, ((0, 0), (1, 1), (1, 1), (0, 0)),
                constant_values=float("-inf"))
    Hh, Wh = (H + 2) // 2, (W + 2) // 2
    # Split padded H/W into (half-index, parity) and move both parities to a
    # leading plane axis: (4, N, Hh, Wh, C). Pure wrapper-side layout plumbing.
    P = P.reshape(N, Hh, 2, Wh, 2, C)
    P = jnp.transpose(P, (2, 4, 0, 1, 3, 5)).reshape(4, N, Hh, Wh, C)

    kernel = functools.partial(_maxpool3x3_s2_kernel, Ho=Ho, Wo=Wo)
    itemsize = jnp.dtype(y_nhwc.dtype).itemsize
    cost = pl.CostEstimate(
        flops=9 * N * Ho * Wo * C,
        transcendentals=0,
        bytes_accessed=(P.size + N * Ho * Wo * C) * itemsize,
    )

    out = pl.pallas_call(
        kernel,
        out_shape=jax.ShapeDtypeStruct((N, Ho, Wo, C), y_nhwc.dtype),
        grid_spec=pltpu.PrefetchScalarGridSpec(
            num_scalar_prefetch=0,
            grid=(N,),
            in_specs=[pl.BlockSpec((4, 1, Hh, Wh, C),
                                   lambda n: (0, n, 0, 0, 0))],
            out_specs=pl.BlockSpec((1, Ho, Wo, C), lambda n: (n, 0, 0, 0)),
        ),
        compiler_params=pltpu.CompilerParams(
            dimension_semantics=("parallel",),
        ),
        cost_estimate=cost,
    )(P)
    return out


# ---------------------------------------------------------------------------
# RockBlock forward (dataset='cifar'), NCHW in / NCHW out.
# ---------------------------------------------------------------------------

def rock_block_forward(x_nchw, conv_weight_oihw, branch=2):
    # TODO(synk): the dataset='imagenet' stem (7x7 s2 conv + BatchNorm2d + ReLU
    # + MaxPool) is not implemented; only the default dataset='cifar' path is.
    pred = []
    y_nhwc = conv3x3_same(x_nchw, conv_weight_oihw)
    x1 = jnp.transpose(y_nhwc, (0, 3, 1, 2))
    if branch == 1:
        return x1, None, pred
    elif branch == 2:
        p_nhwc = maxpool3x3_s2_p1(y_nhwc)
        x2 = jnp.transpose(p_nhwc, (0, 3, 1, 2))
        return x1, x2, pred
    else:
        raise ValueError('check branch must be in [1, 2, 3]!')


if __name__ == "__main__":
    key = jax.random.PRNGKey(0)
    key_x, key_w = jax.random.split(key)

    N, Cin, H, W = 2, 3, 16, 16          # cifar-style 3-channel input
    outdepth = 8

    x = jax.random.normal(key_x, (N, Cin, H, W), dtype=jnp.float32)
    weight = (jax.random.normal(key_w, (outdepth, Cin, 3, 3), dtype=jnp.float32)
              * (1.0 / (Cin * 9)) ** 0.5)

    x1, x2, pred = rock_block_forward(x, weight, branch=2)
    x1 = jax.block_until_ready(x1)
    x2 = jax.block_until_ready(x2)

    # ----- numpy (float64) reference for the forward semantics ---------------
    xn = np.asarray(x, dtype=np.float64)
    wn = np.asarray(weight, dtype=np.float64)
    xpad = np.pad(xn, ((0, 0), (0, 0), (1, 1), (1, 1)))
    ref1 = np.zeros((N, outdepth, H, W), dtype=np.float64)
    for kh in range(3):
        for kw_ in range(3):
            ref1 += np.einsum("nchw,oc->nohw",
                              xpad[:, :, kh:kh + H, kw_:kw_ + W],
                              wn[:, :, kh, kw_])

    Ho = (H - 1) // 2 + 1
    Wo = (W - 1) // 2 + 1
    # Pool reference built from the kernel's own conv output so the pool check
    # is independent of MXU matmul precision.
    ypad = np.pad(np.asarray(x1, dtype=np.float64),
                  ((0, 0), (0, 0), (1, 1), (1, 1)), constant_values=-np.inf)
    ref2 = np.full((N, outdepth, Ho, Wo), -np.inf, dtype=np.float64)
    for kh in range(3):
        for kw_ in range(3):
            ref2 = np.maximum(
                ref2, ypad[:, :, kh:kh + 2 * Ho:2, kw_:kw_ + 2 * Wo:2])

    ok = (
        pred == []
        and x1.shape == (N, outdepth, H, W)
        and x2.shape == (N, outdepth, Ho, Wo)
        and x1.dtype == x.dtype
        and x2.dtype == x.dtype
        # Loose tolerance on the conv to allow for MXU default f32 precision.
        and np.allclose(np.asarray(x1), ref1, atol=2e-2, rtol=2e-2)
        and np.allclose(np.asarray(x2), ref2, atol=1e-5, rtol=1e-5)
    )
    print("KERNEL_OK" if ok else "KERNEL_MISMATCH")
</pallas_src>

<mosaic_0001>
module attributes {stable_mosaic.version = 11 : i64} {
  func.func @_conv3x3_kernel(%arg0: i32, %arg1: memref<1x18x18x8xf32, #tpu.memory_space<vmem>>, %arg2: memref<3x3x8x8xf32, #tpu.memory_space<vmem>>, %arg3: memref<1x256x8xf32, #tpu.memory_space<vmem>>) attributes {dimension_semantics = [#tpu.dimension_semantics<parallel>], iteration_bounds = array<i64: 2>, scalar_prefetch = 0 : i64, scratch_operands = 0 : i64, tpu.core_type = #tpu.core_type<tc>, window_params = [{transform_indices = @transform_0, window_bounds = array<i64: 1, 18, 18, 8>}, {pipeline_mode = #tpu.pipeline_mode<synchronous>, transform_indices = @transform_1, window_bounds = array<i64: 3, 3, 8, 8>}, {transform_indices = @transform_2, window_bounds = array<i64: 1, 256, 8>}]} {
    %cst = arith.constant 0.000000e+00 : f32
    %0 = vector.broadcast %cst : f32 to vector<256x8xf32>
    %c0 = arith.constant 0 : index
    %c0_0 = arith.constant 0 : index
    %c0_1 = arith.constant 0 : index
    %c0_2 = arith.constant 0 : index
    %1 = vector.load %arg1[%c0, %c0_0, %c0_1, %c0_2] : memref<1x18x18x8xf32, #tpu.memory_space<vmem>>, vector<1x16x16x8xf32>
    %2 = vector.shape_cast %1 : vector<1x16x16x8xf32> to vector<16x16x8xf32>
    %3 = vector.shape_cast %2 : vector<16x16x8xf32> to vector<256x8xf32>
    %c0_3 = arith.constant 0 : index
    %c0_4 = arith.constant 0 : index
    %c0_5 = arith.constant 0 : index
    %c0_6 = arith.constant 0 : index
    %4 = vector.load %arg2[%c0_3, %c0_4, %c0_5, %c0_6] : memref<3x3x8x8xf32, #tpu.memory_space<vmem>>, vector<1x1x8x8xf32>
    %5 = vector.shape_cast %4 : vector<1x1x8x8xf32> to vector<8x8xf32>
    %cst_7 = arith.constant dense<0.000000e+00> : vector<256x8xf32>
    %6 = tpu.matmul %3, %5, %cst_7 {dimension_numbers = #tpu.dot_dimension_numbers<[1], [0], [0], [1], [0, 0, 1, 1], [], []>} : vector<256x8xf32>, vector<8x8xf32>, vector<256x8xf32> -> vector<256x8xf32>
    %7 = arith.addf %0, %6 : vector<256x8xf32>
    %c0_8 = arith.constant 0 : index
    %c0_9 = arith.constant 0 : index
    %c1 = arith.constant 1 : index
    %c0_10 = arith.constant 0 : index
    %8 = vector.load %arg1[%c0_8, %c0_9, %c1, %c0_10] : memref<1x18x18x8xf32, #tpu.memory_space<vmem>>, vector<1x16x16x8xf32>
    %9 = vector.shape_cast %8 : vector<1x16x16x8xf32> to vector<16x16x8xf32>
    %10 = vector.shape_cast %9 : vector<16x16x8xf32> to vector<256x8xf32>
    %c0_11 = arith.constant 0 : index
    %c1_12 = arith.constant 1 : index
    %c0_13 = arith.constant 0 : index
    %c0_14 = arith.constant 0 : index
    %11 = vector.load %arg2[%c0_11, %c1_12, %c0_13, %c0_14] : memref<3x3x8x8xf32, #tpu.memory_space<vmem>>, vector<1x1x8x8xf32>
    %12 = vector.shape_cast %11 : vector<1x1x8x8xf32> to vector<8x8xf32>
    %cst_15 = arith.constant dense<0.000000e+00> : vector<256x8xf32>
    %13 = tpu.matmul %10, %12, %cst_15 {dimension_numbers = #tpu.dot_dimension_numbers<[1], [0], [0], [1], [0, 0, 1, 1], [], []>} : vector<256x8xf32>, vector<8x8xf32>, vector<256x8xf32> -> vector<256x8xf32>
    %14 = arith.addf %7, %13 : vector<256x8xf32>
    %c0_16 = arith.constant 0 : index
    %c0_17 = arith.constant 0 : index
    %c2 = arith.constant 2 : index
    %c0_18 = arith.constant 0 : index
    %15 = vector.load %arg1[%c0_16, %c0_17, %c2, %c0_18] : memref<1x18x18x8xf32, #tpu.memory_space<vmem>>, vector<1x16x16x8xf32>
    %16 = vector.shape_cast %15 : vector<1x16x16x8xf32> to vector<16x16x8xf32>
    %17 = vector.shape_cast %16 : vector<16x16x8xf32> to vector<256x8xf32>
    %c0_19 = arith.constant 0 : index
    %c2_20 = arith.constant 2 : index
    %c0_21 = arith.constant 0 : index
    %c0_22 = arith.constant 0 : index
    %18 = vector.load %arg2[%c0_19, %c2_20, %c0_21, %c0_22] : memref<3x3x8x8xf32, #tpu.memory_space<vmem>>, vector<1x1x8x8xf32>
    %19 = vector.shape_cast %18 : vector<1x1x8x8xf32> to vector<8x8xf32>
    %cst_23 = arith.constant dense<0.000000e+00> : vector<256x8xf32>
    %20 = tpu.matmul %17, %19, %cst_23 {dimension_numbers = #tpu.dot_dimension_numbers<[1], [0], [0], [1], [0, 0, 1, 1], [], []>} : vector<256x8xf32>, vector<8x8xf32>, vector<256x8xf32> -> vector<256x8xf32>
    %21 = arith.addf %14, %20 : vector<256x8xf32>
    %c0_24 = arith.constant 0 : index
    %c1_25 = arith.constant 1 : index
    %c0_26 = arith.constant 0 : index
    %c0_27 = arith.constant 0 : index
    %22 = vector.load %arg1[%c0_24, %c1_25, %c0_26, %c0_27] : memref<1x18x18x8xf32, #tpu.memory_space<vmem>>, vector<1x16x16x8xf32>
    %23 = vector.shape_cast %22 : vector<1x16x16x8xf32> to vector<16x16x8xf32>
    %24 = vector.shape_cast %23 : vector<16x16x8xf32> to vector<256x8xf32>
    %c1_28 = arith.constant 1 : index
    %c0_29 = arith.constant 0 : index
    %c0_30 = arith.constant 0 : index
    %c0_31 = arith.constant 0 : index
    %25 = vector.load %arg2[%c1_28, %c0_29, %c0_30, %c0_31] : memref<3x3x8x8xf32, #tpu.memory_space<vmem>>, vector<1x1x8x8xf32>
    %26 = vector.shape_cast %25 : vector<1x1x8x8xf32> to vector<8x8xf32>
    %cst_32 = arith.constant dense<0.000000e+00> : vector<256x8xf32>
    %27 = tpu.matmul %24, %26, %cst_32 {dimension_numbers = #tpu.dot_dimension_numbers<[1], [0], [0], [1], [0, 0, 1, 1], [], []>} : vector<256x8xf32>, vector<8x8xf32>, vector<256x8xf32> -> vector<256x8xf32>
    %28 = arith.addf %21, %27 : vector<256x8xf32>
    %c0_33 = arith.constant 0 : index
    %c1_34 = arith.constant 1 : index
    %c1_35 = arith.constant 1 : index
    %c0_36 = arith.constant 0 : index
    %29 = vector.load %arg1[%c0_33, %c1_34, %c1_35, %c0_36] : memref<1x18x18x8xf32, #tpu.memory_space<vmem>>, vector<1x16x16x8xf32>
    %30 = vector.shape_cast %29 : vector<1x16x16x8xf32> to vector<16x16x8xf32>
    %31 = vector.shape_cast %30 : vector<16x16x8xf32> to vector<256x8xf32>
    %c1_37 = arith.constant 1 : index
    %c1_38 = arith.constant 1 : index
    %c0_39 = arith.constant 0 : index
    %c0_40 = arith.constant 0 : index
    %32 = vector.load %arg2[%c1_37, %c1_38, %c0_39, %c0_40] : memref<3x3x8x8xf32, #tpu.memory_space<vmem>>, vector<1x1x8x8xf32>
    %33 = vector.shape_cast %32 : vector<1x1x8x8xf32> to vector<8x8xf32>
    %cst_41 = arith.constant dense<0.000000e+00> : vector<256x8xf32>
    %34 = tpu.matmul %31, %33, %cst_41 {dimension_numbers = #tpu.dot_dimension_numbers<[1], [0], [0], [1], [0, 0, 1, 1], [], []>} : vector<256x8xf32>, vector<8x8xf32>, vector<256x8xf32> -> vector<256x8xf32>
    %35 = arith.addf %28, %34 : vector<256x8xf32>
    %c0_42 = arith.constant 0 : index
    %c1_43 = arith.constant 1 : index
    %c2_44 = arith.constant 2 : index
    %c0_45 = arith.constant 0 : index
    %36 = vector.load %arg1[%c0_42, %c1_43, %c2_44, %c0_45] : memref<1x18x18x8xf32, #tpu.memory_space<vmem>>, vector<1x16x16x8xf32>
    %37 = vector.shape_cast %36 : vector<1x16x16x8xf32> to vector<16x16x8xf32>
    %38 = vector.shape_cast %37 : vector<16x16x8xf32> to vector<256x8xf32>
    %c1_46 = arith.constant 1 : index
    %c2_47 = arith.constant 2 : index
    %c0_48 = arith.constant 0 : index
    %c0_49 = arith.constant 0 : index
    %39 = vector.load %arg2[%c1_46, %c2_47, %c0_48, %c0_49] : memref<3x3x8x8xf32, #tpu.memory_space<vmem>>, vector<1x1x8x8xf32>
    %40 = vector.shape_cast %39 : vector<1x1x8x8xf32> to vector<8x8xf32>
    %cst_50 = arith.constant dense<0.000000e+00> : vector<256x8xf32>
    %41 = tpu.matmul %38, %40, %cst_50 {dimension_numbers = #tpu.dot_dimension_numbers<[1], [0], [0], [1], [0, 0, 1, 1], [], []>} : vector<256x8xf32>, vector<8x8xf32>, vector<256x8xf32> -> vector<256x8xf32>
    %42 = arith.addf %35, %41 : vector<256x8xf32>
    %c0_51 = arith.constant 0 : index
    %c2_52 = arith.constant 2 : index
    %c0_53 = arith.constant 0 : index
    %c0_54 = arith.constant 0 : index
    %43 = vector.load %arg1[%c0_51, %c2_52, %c0_53, %c0_54] : memref<1x18x18x8xf32, #tpu.memory_space<vmem>>, vector<1x16x16x8xf32>
    %44 = vector.shape_cast %43 : vector<1x16x16x8xf32> to vector<16x16x8xf32>
    %45 = vector.shape_cast %44 : vector<16x16x8xf32> to vector<256x8xf32>
    %c2_55 = arith.constant 2 : index
    %c0_56 = arith.constant 0 : index
    %c0_57 = arith.constant 0 : index
    %c0_58 = arith.constant 0 : index
    %46 = vector.load %arg2[%c2_55, %c0_56, %c0_57, %c0_58] : memref<3x3x8x8xf32, #tpu.memory_space<vmem>>, vector<1x1x8x8xf32>
    %47 = vector.shape_cast %46 : vector<1x1x8x8xf32> to vector<8x8xf32>
    %cst_59 = arith.constant dense<0.000000e+00> : vector<256x8xf32>
    %48 = tpu.matmul %45, %47, %cst_59 {dimension_numbers = #tpu.dot_dimension_numbers<[1], [0], [0], [1], [0, 0, 1, 1], [], []>} : vector<256x8xf32>, vector<8x8xf32>, vector<256x8xf32> -> vector<256x8xf32>
    %49 = arith.addf %42, %48 : vector<256x8xf32>
    %c0_60 = arith.constant 0 : index
    %c2_61 = arith.constant 2 : index
    %c1_62 = arith.constant 1 : index
    %c0_63 = arith.constant 0 : index
    %50 = vector.load %arg1[%c0_60, %c2_61, %c1_62, %c0_63] : memref<1x18x18x8xf32, #tpu.memory_space<vmem>>, vector<1x16x16x8xf32>
    %51 = vector.shape_cast %50 : vector<1x16x16x8xf32> to vector<16x16x8xf32>
    %52 = vector.shape_cast %51 : vector<16x16x8xf32> to vector<256x8xf32>
    %c2_64 = arith.constant 2 : index
    %c1_65 = arith.constant 1 : index
    %c0_66 = arith.constant 0 : index
    %c0_67 = arith.constant 0 : index
    %53 = vector.load %arg2[%c2_64, %c1_65, %c0_66, %c0_67] : memref<3x3x8x8xf32, #tpu.memory_space<vmem>>, vector<1x1x8x8xf32>
    %54 = vector.shape_cast %53 : vector<1x1x8x8xf32> to vector<8x8xf32>
    %cst_68 = arith.constant dense<0.000000e+00> : vector<256x8xf32>
    %55 = tpu.matmul %52, %54, %cst_68 {dimension_numbers = #tpu.dot_dimension_numbers<[1], [0], [0], [1], [0, 0, 1, 1], [], []>} : vector<256x8xf32>, vector<8x8xf32>, vector<256x8xf32> -> vector<256x8xf32>
    %56 = arith.addf %49, %55 : vector<256x8xf32>
    %c0_69 = arith.constant 0 : index
    %c2_70 = arith.constant 2 : index
    %c2_71 = arith.constant 2 : index
    %c0_72 = arith.constant 0 : index
    %57 = vector.load %arg1[%c0_69, %c2_70, %c2_71, %c0_72] : memref<1x18x18x8xf32, #tpu.memory_space<vmem>>, vector<1x16x16x8xf32>
    %58 = vector.shape_cast %57 : vector<1x16x16x8xf32> to vector<16x16x8xf32>
    %59 = vector.shape_cast %58 : vector<16x16x8xf32> to vector<256x8xf32>
    %c2_73 = arith.constant 2 : index
    %c2_74 = arith.constant 2 : index
    %c0_75 = arith.constant 0 : index
    %c0_76 = arith.constant 0 : index
    %60 = vector.load %arg2[%c2_73, %c2_74, %c0_75, %c0_76] : memref<3x3x8x8xf32, #tpu.memory_space<vmem>>, vector<1x1x8x8xf32>
    %61 = vector.shape_cast %60 : vector<1x1x8x8xf32> to vector<8x8xf32>
    %cst_77 = arith.constant dense<0.000000e+00> : vector<256x8xf32>
    %62 = tpu.matmul %59, %61, %cst_77 {dimension_numbers = #tpu.dot_dimension_numbers<[1], [0], [0], [1], [0, 0, 1, 1], [], []>} : vector<256x8xf32>, vector<8x8xf32>, vector<256x8xf32> -> vector<256x8xf32>
    %63 = arith.addf %56, %62 : vector<256x8xf32>
    %c0_78 = arith.constant 0 : index
    %c0_79 = arith.constant 0 : index
    %c0_80 = arith.constant 0 : index
    %64 = vector.load %arg3[%c0_78, %c0_79, %c0_80] : memref<1x256x8xf32, #tpu.memory_space<vmem>>, vector<1x256x8xf32>
    %65 = vector.shape_cast %64 : vector<1x256x8xf32> to vector<256x8xf32>
    %66 = vector.shape_cast %63 : vector<256x8xf32> to vector<1x256x8xf32>
    tpu.vector_store %arg3[%c0_78, %c0_79, %c0_80], %66 {strides = array<i32>} : memref<1x256x8xf32, #tpu.memory_space<vmem>>, vector<1x256x8xf32>,
    return
  }
  func.func @transform_0(%arg0: i32) -> (i32, i32, i32, i32) {
    %c0_i32 = arith.constant 0 : i32
    %c0_i32_0 = arith.constant 0 : i32
    %c0_i32_1 = arith.constant 0 : i32
    %c0_i32_2 = arith.constant 0 : i32
    return %arg0, %c0_i32, %c0_i32_0, %c0_i32_1 : i32, i32, i32, i32
  }
  func.func @transform_1(%arg0: i32) -> (i32, i32, i32, i32) {
    %c0_i32 = arith.constant 0 : i32
    %c0_i32_0 = arith.constant 0 : i32
    %c0_i32_1 = arith.constant 0 : i32
    %c0_i32_2 = arith.constant 0 : i32
    %c0_i32_3 = arith.constant 0 : i32
    return %c0_i32, %c0_i32_0, %c0_i32_1, %c0_i32_2 : i32, i32, i32, i32
  }
  func.func @transform_2(%arg0: i32) -> (i32, i32, i32) {
    %c0_i32 = arith.constant 0 : i32
    %c0_i32_0 = arith.constant 0 : i32
    %c0_i32_1 = arith.constant 0 : i32
    return %arg0, %c0_i32, %c0_i32_0 : i32, i32, i32
  }
}

</mosaic_0001>

<llo_original>
// kernel: tpu_custom_call.1
$region0: #{tpu_custom_call.1}
  #allocation0 [shape = 'u32[]', space=smem, size = 0x4, offset = 0x4, fixed_abs, tag = 'smem constant byte address 0x4 - core index']
  #allocation1 [shape = 'u32[144,128]{1,0:T(1,128)}', space=vmem, size = 0x12000, scoped, tag = 'internal scratch']
  %s0 = inlined_call_operand.vmem [shape: f32[2,18,18,8], index: 0, kind: input, shape index: {}]
  %s1 = inlined_call_operand.vmem [shape: f32[3,3,8,8], index: 1, kind: input, shape index: {}]
  %s2 = inlined_call_operand.vmem [shape: f32[2,256,8], index: 2, kind: output, shape index: {}]
  %s3 = sld [smem:[#allocation0]]
  $region41: #{tpu_custom_call.1} parent=0
    _
  %s5 = ssub.s32 1, %s3
  %s6 = scalar_select 0, %s5, %s3
  loop: start=0, step=1, limit=4
  $region2: #{tpu_custom_call.1} parent=0 // loop_pre_header
    _
  $region3: #{tpu_custom_call.1} parent=0 // loop_header
    %s8 = sphi 0, %s12
    %p9 = scmp.ge.s32.totalorder %s8, 4
    %s18 = sphi 0, %s20
    %s21 = sphi 0, %s18
    %s22 = sphi 0, %s21
    %s38 = sphi 0, %s22
    %s42 = sphi 0, %s42
    %s44 = sphi 0, %s42
    %s45 = sphi 0, %s44
    %s59 = sphi 0, %s45
    %s65 = sphi 0, %s67
    %s68 = sphi 0, %s65
    %s69 = sphi 0, %s68
    %s85 = sphi 0, %s69
  $region4: #{tpu_custom_call.1} parent=0 // loop_header_branch
    %11 = sbr.rel (%p9) target = $region8
  $region5: #{tpu_custom_call.1} parent=0 // loop_body
    %s13 = ssub.s32 %s8, 1
    %s14 = ssub.s32 %s8, 2
    %s15 = sadd.s32 %s8, 1
    %s16 = ssub.s32 %s8, %s15
    %p17 = scmp.eq.s32.totalorder %s16, 0
    %s19 = sadd.s32 %s18, 1
    %s20 = scalar_select %p17, %s18, %s19
    %p23 = pneg %p17
    %p24 = scmp.eq.s32.totalorder %s8, 1
    %p25 = por %p23, %p24
    %p26 = scmp.ne.s32.totalorder %s18, %s21
    %p27 = scmp.eq.s32.totalorder %s8, 0
    %p28 = por %p26, %p27
    %p29 = scmp.ne.s32.totalorder %s18, %s21
    %p30 = scmp.eq.s32.totalorder %s13, 1
    %p31 = por %p29, %p30
    %p32 = scmp.ne.s32.totalorder %s21, %s22
    %p33 = scmp.eq.s32.totalorder %s13, 0
    %p34 = por %p32, %p33
    %p35 = scmp.ne.s32.totalorder %s21, %s22
    %p36 = scmp.eq.s32.totalorder %s14, 1
    %p37 = por %p35, %p36
    %p39 = scmp.ne.s32.totalorder %s22, %s38
    %p40 = scmp.eq.s32.totalorder %s14, 0
    %p41 = por %p39, %p40
    %s43 = sadd.s32 %s42, 1
    %p46 = scmp.eq.s32.totalorder %s8, 1
    %p47 = scmp.ne.s32.totalorder %s42, %s44
    %p48 = scmp.eq.s32.totalorder %s8, 0
    %p49 = por %p47, %p48
    %p50 = scmp.ne.s32.totalorder %s42, %s44
    %p51 = scmp.eq.s32.totalorder %s13, 1
    %p52 = por %p50, %p51
    %p53 = scmp.ne.s32.totalorder %s44, %s45
    %p54 = scmp.eq.s32.totalorder %s13, 0
    %p55 = por %p53, %p54
    %p56 = scmp.ne.s32.totalorder %s44, %s45
    %p57 = scmp.eq.s32.totalorder %s14, 1
    %p58 = por %p56, %p57
    %p60 = scmp.ne.s32.totalorder %s45, %s59
    %p61 = scmp.eq.s32.totalorder %s14, 0
    %p62 = por %p60, %p61
    %s63 = ssub.s32 %s8, %s15
    %p64 = scmp.eq.s32.totalorder %s63, 0
    %s66 = sadd.s32 %s65, 1
    %s67 = scalar_select %p64, %s65, %s66
    %p70 = pneg %p64
    %p71 = scmp.eq.s32.totalorder %s8, 1
    %p72 = por %p70, %p71
    %p73 = scmp.ne.s32.totalorder %s65, %s68
    %p74 = scmp.eq.s32.totalorder %s8, 0
    %p75 = por %p73, %p74
    %p76 = scmp.ne.s32.totalorder %s65, %s68
    %p77 = scmp.eq.s32.totalorder %s13, 1
    %p78 = por %p76, %p77
    %p79 = scmp.ne.s32.totalorder %s68, %s69
    %p80 = scmp.eq.s32.totalorder %s13, 0
    %p81 = por %p79, %p80
    %p82 = scmp.ne.s32.totalorder %s68, %s69
    %p83 = scmp.eq.s32.totalorder %s14, 1
    %p84 = por %p82, %p83
    %p86 = scmp.ne.s32.totalorder %s69, %s85
    %p87 = scmp.eq.s32.totalorder %s14, 0
    %p88 = por %p86, %p87
    %p89 = scmp.le.s32.totalorder 1, %s8
    %p90 = scmp.lt.s32.totalorder %s8, 3
    %p91 = pnand %p89, %p90
    %p92 = pneg %p91
    // Predicated region
    $region9: #{tpu_custom_call.1} parent=5 // pred_check
      _
    $region10: #{tpu_custom_call.1} parent=5 // pred_check_branch
      %94 = sbr.rel (%p91) target = $region12
    $region11: #{tpu_custom_call.1} parent=5 // pred_region
      %s95 = ssub.s32 %s8, 1
      // Predicated region
      $region13: #{tpu_custom_call.1} parent=11 // pred_check
        %p96 = pneg %p55
      $region14: #{tpu_custom_call.1} parent=11 // pred_check_branch
        %98 = sbr.rel (%p96) target = $region16
      $region15: #{tpu_custom_call.1} parent=11 // pred_region
        _
      $region16: #{tpu_custom_call.1} parent=11 // pred_fallthru
        _
    $region12: #{tpu_custom_call.1} parent=5 // pred_fallthru
      _
    %p99 = scmp.lt.s32.totalorder %s8, 2
    // Predicated region
    $region17: #{tpu_custom_call.1} parent=5 // pred_check
      %p100 = pneg %p99
    $region18: #{tpu_custom_call.1} parent=5 // pred_check_branch
      %102 = sbr.rel (%p100) target = $region20
    $region19: #{tpu_custom_call.1} parent=5 // pred_region
      // Predicated region
      $region21: #{tpu_custom_call.1} parent=19 // pred_check
        %p103 = pneg %p28
      $region22: #{tpu_custom_call.1} parent=19 // pred_check_branch
        %105 = sbr.rel (%p103) target = $region24
      $region23: #{tpu_custom_call.1} parent=19 // pred_region
        %p106 = scmp.lt.s32.totalorder %s8, 1
        %s107 = scalar_select %p106, %s8, 1
        %s108 = smul.addr %s107, 54
        %s109 = smul.addr %s108, 8
        %s110 = scalar_lea.vmem %s0, %s109
      $region24: #{tpu_custom_call.1} parent=19 // pred_fallthru
        _
    $region20: #{tpu_custom_call.1} parent=5 // pred_fallthru
      _
    %p111 = scmp.le.s32.totalorder 1, %s8
    %p112 = scmp.lt.s32.totalorder %s8, 3
    %p113 = pnand %p111, %p112
    %p114 = pneg %p113
    // Predicated region
    $region25: #{tpu_custom_call.1} parent=5 // pred_check
      _
    $region26: #{tpu_custom_call.1} parent=5 // pred_check_branch
      %116 = sbr.rel (%p113) target = $region28
    $region27: #{tpu_custom_call.1} parent=5 // pred_region
      %s117 = ssub.s32 %s8, 1
      %p118 = scmp.lt.s32.totalorder %s13, 1
      %s119 = scalar_select %p118, %s13, 1
      %s120 = smul.addr %s119, 54
      %s121 = smul.addr %s120, 8
      %s122 = scalar_lea.vmem %s0, %s121
      %p123 = pneg %p34
      %p124 = pneg %p31
      %p125 = pneg %p55
      %p126 = pneg %p52
      %p127 = pneg %p81
      %p128 = pneg %p78
      %p129 = scmp.lt.s32.totalorder %s13, 1
      %s130 = scalar_select %p129, %s13, 1
      %s131 = smul.addr %s130, 32
      %s132 = smul.addr %s131, 8
      %s133 = scalar_lea.vmem %s2, %s132
      %p134 = scmp.lt.s32.totalorder %s13, 1
      %s135 = scalar_select %p134, %s13, 1
      %s136 = smul.addr %s135, 54
      %s137 = smul.addr %s136, 8
      %s138 = scalar_lea.vmem %s0, %s137
      %p139 = scmp.lt.s32.totalorder %s13, 1
      %s140 = scalar_select %p139, %s13, 1
      %s141 = smul.addr %s140, 32
      %s142 = smul.addr %s141, 8
      %s143 = scalar_lea.vmem %s2, %s142
      %v144 = vld [vmem:[%s138] sm:$0xff]
      %v145 = vld [vmem:[%s138 + $0x8] sm:$0xff]
      %v146 = vld [vmem:[%s138 + $0x18] sm:$0xff]
      %v147 = vld [vmem:[%s138 + $0x20] sm:$0xff]
      %v148 = vld [vmem:[%s138 + $0x30] sm:$0xff]
      %v149 = vld [vmem:[%s138 + $0x38] sm:$0xff]
      %v150 = vld [vmem:[%s138 + $0x48] sm:$0xff]
      %v151 = vld [vmem:[%s138 + $0x50] sm:$0xff]
      %v152 = vld [vmem:[%s138 + $0x60] sm:$0xff]
      %v153 = vld [vmem:[%s138 + $0x68] sm:$0xff]
      %v154 = vld [vmem:[%s138 + $0x78] sm:$0xff]
      %v155 = vld [vmem:[%s138 + $0x80] sm:$0xff]
      %v156 = vld [vmem:[%s138 + $0x90] sm:$0xff]
      %v157 = vld [vmem:[%s138 + $0x98] sm:$0xff]
      %v158 = vld [vmem:[%s138 + $0xa8] sm:$0xff]
      %v159 = vld [vmem:[%s138 + $0xb0] sm:$0xff]
      %v160 = vld [vmem:[%s138 + $0xc0] sm:$0xff]
      %v161 = vld [vmem:[%s138 + $0xc8] sm:$0xff]
      %v162 = vld [vmem:[%s138 + $0xd8] sm:$0xff]
      %v163 = vld [vmem:[%s138 + $0xe0] sm:$0xff]
      %v164 = vld [vmem:[%s138 + $0xf0] sm:$0xff]
      %v165 = vld [vmem:[%s138 + $0xf8] sm:$0xff]
      %v166 = vld [vmem:[%s138 + $0x108] sm:$0xff]
      %v167 = vld [vmem:[%s138 + $0x110] sm:$0xff]
      %v168 = vld [vmem:[%s138 + $0x120] sm:$0xff]
      %v169 = vld [vmem:[%s138 + $0x128] sm:$0xff]
      %v170 = vld [vmem:[%s138 + $0x138] sm:$0xff]
      %v171 = vld [vmem:[%s138 + $0x140] sm:$0xff]
      %v172 = vld [vmem:[%s138 + $0x150] sm:$0xff]
      %v173 = vld [vmem:[%s138 + $0x158] sm:$0xff]
      %v174 = vld [vmem:[%s138 + $0x168] sm:$0xff]
      %v175 = vld [vmem:[%s138 + $0x170] sm:$0xff]
      %v176 = vld [vmem:[%s1] sm:$0xff]
      %v177 = vld [vmem:[%s138 + $0x1] sm:$0xff]
      %v178 = vld [vmem:[%s138 + $0x9] sm:$0xff]
      %v179 = vld [vmem:[%s138 + $0x19] sm:$0xff]
      %v180 = vld [vmem:[%s138 + $0x21] sm:$0xff]
      %v181 = vld [vmem:[%s138 + $0x31] sm:$0xff]
      %v182 = vld [vmem:[%s138 + $0x39] sm:$0xff]
      %v183 = vld [vmem:[%s138 + $0x49] sm:$0xff]
      %v184 = vld [vmem:[%s138 + $0x51] sm:$0xff]
      %v185 = vld [vmem:[%s138 + $0x61] sm:$0xff]
      %v186 = vld [vmem:[%s138 + $0x69] sm:$0xff]
      %v187 = vld [vmem:[%s138 + $0x79] sm:$0xff]
      %v188 = vld [vmem:[%s138 + $0x81] sm:$0xff]
      %v189 = vld [vmem:[%s138 + $0x91] sm:$0xff]
      %v190 = vld [vmem:[%s138 + $0x99] sm:$0xff]
      %v191 = vld [vmem:[%s138 + $0xa9] sm:$0xff]
      %v192 = vld [vmem:[%s138 + $0xb1] sm:$0xff]
      %v193 = vld [vmem:[%s138 + $0xc1] sm:$0xff]
      %v194 = vld [vmem:[%s138 + $0xc9] sm:$0xff]
      %v195 = vld [vmem:[%s138 + $0xd9] sm:$0xff]
      %v196 = vld [vmem:[%s138 + $0xe1] sm:$0xff]
      %v197 = vld [vmem:[%s138 + $0xf1] sm:$0xff]
      %v198 = vld [vmem:[%s138 + $0xf9] sm:$0xff]
      %v199 = vld [vmem:[%s138 + $0x109] sm:$0xff]
      %v200 = vld [vmem:[%s138 + $0x111] sm:$0xff]
      %v201 = vld [vmem:[%s138 + $0x121] sm:$0xff]
      %v202 = vld [vmem:[%s138 + $0x129] sm:$0xff]
      %v203 = vld [vmem:[%s138 + $0x139] sm:$0xff]
      %v204 = vld [vmem:[%s138 + $0x141] sm:$0xff]
      %v205 = vld [vmem:[%s138 + $0x151] sm:$0xff]
      %v206 = vld [vmem:[%s138 + $0x159] sm:$0xff]
      %v207 = vld [vmem:[%s138 + $0x169] sm:$0xff]
      %v208 = vld [vmem:[%s138 + $0x171] sm:$0xff]
      %s209 = scalar_lea.vmem %s1, 8
      %v210 = vld [vmem:[%s209] sm:$0xff]
      %vm211 = vcmask 64512
      %v213 = vsel %vm211, %v177, 0
      %v216 = vsel %vm211, %v178, 0
      %v219 = vsel %vm211, %v179, 0
      %v222 = vsel %vm211, %v180, 0
      %v225 = vsel %vm211, %v181, 0
      %v228 = vsel %vm211, %v182, 0
      %v231 = vsel %vm211, %v183, 0
      %v234 = vsel %vm211, %v184, 0
      %v237 = vsel %vm211, %v185, 0
      %v240 = vsel %vm211, %v186, 0
      %v243 = vsel %vm211, %v187, 0
      %v246 = vsel %vm211, %v188, 0
      %v249 = vsel %vm211, %v189, 0
      %v252 = vsel %vm211, %v190, 0
      %v255 = vsel %vm211, %v191, 0
      %v258 = vsel %vm211, %v192, 0
      %v261 = vsel %vm211, %v193, 0
      %v264 = vsel %vm211, %v194, 0
      %v267 = vsel %vm211, %v195, 0
      %v270 = vsel %vm211, %v196, 0
      %v273 = vsel %vm211, %v197, 0
      %v276 = vsel %vm211, %v198, 0
      %v279 = vsel %vm211, %v199, 0
      %v282 = vsel %vm211, %v200, 0
      %v285 = vsel %vm211, %v201, 0
      %v288 = vsel %vm211, %v202, 0
      %v291 = vsel %vm211, %v203, 0
      %v294 = vsel %vm211, %v204, 0
      %v297 = vsel %vm211, %v205, 0
      %v300 = vsel %vm211, %v206, 0
      %v303 = vsel %vm211, %v207, 0
      %v306 = vsel %vm211, %v208, 0
      %308 = vmatprep.subr.mxu0 0.0
      %309 = vmatpush1.msra.mxu0 0.0
      %310 = vmatprep.subr.mxu0 0.0
      %311 = vmatpush1.msra.mxu0 0.0
      %312 = vmatprep.subr.mxu0 0.0
      %313 = vmatpush1.msra.mxu0 0.0
      %314 = vmatprep.subr.mxu0 0.0
      %315 = vmatpush1.msra.mxu0 0.0
      %316 = vmatprep.subr.mxu0 0.0
      %317 = vmatpush1.msra.mxu0 0.0
      %318 = vmatprep.subr.mxu0 0.0
      %319 = vmatpush1.msra.mxu0 0.0
      %320 = vmatprep.subr.mxu0 0.0
      %321 = vmatpush1.msra.mxu0 0.0
      %322 = vmatprep.subr.mxu0 0.0
      %323 = vmatpush1.msra.mxu0 0.0
      %324 = vmatprep.subr.mxu0 0.0
      %325 = vmatpush1.msra.mxu0 0.0
      %326 = vmatprep.subr.mxu0 0.0
      %327 = vmatpush1.msra.mxu0 0.0
      %328 = vmatprep.subr.mxu0 0.0
      %329 = vmatpush1.msra.mxu0 0.0
      %330 = vmatprep.subr.mxu0 0.0
      %331 = vmatpush1.msra.mxu0 0.0
      %332 = vmatprep.subr.mxu0 0.0
      %333 = vmatpush1.msra.mxu0 0.0
      %334 = vmatprep.subr.mxu0 0.0
      %335 = vmatpush1.msra.mxu0 0.0
      %336 = vmatprep.subr.mxu0 0.0
      %337 = vmatpush1.msra.mxu0 0.0
      %338 = vmatprep.subr.mxu0 0.0
      %339 = vmatpush1.msra.mxu0 %v210
      %340 = vmatprep.subr.mxu0 0.0
      %341 = vmatpush2.msra.mxu0 0.0
      %342 = vmatprep.subr.mxu0 0.0
      %343 = vmatpush2.msra.mxu0 0.0
      %344 = vmatprep.subr.mxu0 0.0
      %345 = vmatpush2.msra.mxu0 0.0
      %346 = vmatprep.subr.mxu0 0.0
      %347 = vmatpush2.msra.mxu0 0.0
      %348 = vmatprep.subr.mxu0 0.0
      %349 = vmatpush2.msra.mxu0 0.0
      %350 = vmatprep.subr.mxu0 0.0
      %351 = vmatpush2.msra.mxu0 0.0
      %352 = vmatprep.subr.mxu0 0.0
      %353 = vmatpush2.msra.mxu0 0.0
      %354 = vmatprep.subr.mxu0 0.0
      %355 = vmatpush2.msra.mxu0 0.0
      %356 = vmatprep.subr.mxu0 0.0
      %357 = vmatpush2.msra.mxu0 0.0
      %358 = vmatprep.subr.mxu0 0.0
      %359 = vmatpush2.msra.mxu0 0.0
      %360 = vmatprep.subr.mxu0 0.0
      %361 = vmatpush2.msra.mxu0 0.0
      %362 = vmatprep.subr.mxu0 0.0
      %363 = vmatpush2.msra.mxu0 0.0
      %364 = vmatprep.subr.mxu0 0.0
      %365 = vmatpush2.msra.mxu0 0.0
      %366 = vmatprep.subr.mxu0 0.0
      %367 = vmatpush2.msra.mxu0 0.0
      %368 = vmatprep.subr.mxu0 0.0
      %369 = vmatpush2.msra.mxu0 0.0
      %370 = vmatprep.subr.mxu0 0.0
      %371 = vmatpush2.msra.mxu0 0.0
      %372 = vmatprep.mubr.f32.mxu0 0.0
      %373 = vmatmul.mubr.f32.gmra.mxu0 %v213
      %v374 = vpop.f32.mrf.mxu0
      %v375 = vadd.f32 0.0, %v374
      %v376 = vpop.f32.mrf.mxu0
      %377 = vmatprep.mubr.f32.mxu0 0.0
      %378 = vmatmul.mubr.f32.gmra.mxu0 %v216
      %v379 = vpop.f32.mrf.mxu0
      %v380 = vadd.f32 0.0, %v379
      %v381 = vpop.f32.mrf.mxu0
      %382 = vmatprep.mubr.f32.mxu0 0.0
      %383 = vmatmul.mubr.f32.gmra.mxu0 %v219
      %v384 = vpop.f32.mrf.mxu0
      %v385 = vadd.f32 0.0, %v384
      %v386 = vpop.f32.mrf.mxu0
      %387 = vmatprep.mubr.f32.mxu0 0.0
      %388 = vmatmul.mubr.f32.gmra.mxu0 %v222
      %v389 = vpop.f32.mrf.mxu0
      %v390 = vadd.f32 0.0, %v389
      %v391 = vpop.f32.mrf.mxu0
      %392 = vmatprep.mubr.f32.mxu0 0.0
      %393 = vmatmul.mubr.f32.gmra.mxu0 %v225
      %v394 = vpop.f32.mrf.mxu0
      %v395 = vadd.f32 0.0, %v394
      %v396 = vpop.f32.mrf.mxu0
      %397 = vmatprep.mubr.f32.mxu0 0.0
      %398 = vmatmul.mubr.f32.gmra.mxu0 %v228
      %v399 = vpop.f32.mrf.mxu0
      %v400 = vadd.f32 0.0, %v399
      %v401 = vpop.f32.mrf.mxu0
      %402 = vmatprep.mubr.f32.mxu0 0.0
      %403 = vmatmul.mubr.f32.gmra.mxu0 %v231
      %v404 = vpop.f32.mrf.mxu0
      %v405 = vadd.f32 0.0, %v404
      %v406 = vpop.f32.mrf.mxu0
      %407 = vmatprep.mubr.f32.mxu0 0.0
      %408 = vmatmul.mubr.f32.gmra.mxu0 %v234
      %v409 = vpop.f32.mrf.mxu0
      %v410 = vadd.f32 0.0, %v409
      %v411 = vpop.f32.mrf.mxu0
      %412 = vmatprep.mubr.f32.mxu0 0.0
      %413 = vmatmul.mubr.f32.gmra.mxu0 %v237
      %v414 = vpop.f32.mrf.mxu0
      %v415 = vadd.f32 0.0, %v414
      %v416 = vpop.f32.mrf.mxu0
      %417 = vmatprep.mubr.f32.mxu0 0.0
      %418 = vmatmul.mubr.f32.gmra.mxu0 %v240
      %v419 = vpop.f32.mrf.mxu0
      %v420 = vadd.f32 0.0, %v419
      %v421 = vpop.f32.mrf.mxu0
      %422 = vmatprep.mubr.f32.mxu0 0.0
      %423 = vmatmul.mubr.f32.gmra.mxu0 %v243
      %v424 = vpop.f32.mrf.mxu0
      %v425 = vadd.f32 0.0, %v424
      %v426 = vpop.f32.mrf.mxu0
      %427 = vmatprep.mubr.f32.mxu0 0.0
      %428 = vmatmul.mubr.f32.gmra.mxu0 %v246
      %v429 = vpop.f32.mrf.mxu0
      %v430 = vadd.f32 0.0, %v429
      %v431 = vpop.f32.mrf.mxu0
      %432 = vmatprep.mubr.f32.mxu0 0.0
      %433 = vmatmul.mubr.f32.gmra.mxu0 %v249
      %v434 = vpop.f32.mrf.mxu0
      %v435 = vadd.f32 0.0, %v434
      %v436 = vpop.f32.mrf.mxu0
      %437 = vmatprep.mubr.f32.mxu0 0.0
      %438 = vmatmul.mubr.f32.gmra.mxu0 %v252
      %v439 = vpop.f32.mrf.mxu0
      %v440 = vadd.f32 0.0, %v439
      %v441 = vpop.f32.mrf.mxu0
      %442 = vmatprep.mubr.f32.mxu0 0.0
      %443 = vmatmul.mubr.f32.gmra.mxu0 %v255
      %v444 = vpop.f32.mrf.mxu0
      %v445 = vadd.f32 0.0, %v444
      %v446 = vpop.f32.mrf.mxu0
      %447 = vmatprep.mubr.f32.mxu0 0.0
      %448 = vmatmul.mubr.f32.gmra.mxu0 %v258
      %v449 = vpop.f32.mrf.mxu0
      %v450 = vadd.f32 0.0, %v449
      %v451 = vpop.f32.mrf.mxu0
      %452 = vmatprep.mubr.f32.mxu0 0.0
      %453 = vmatmul.mubr.f32.gmra.mxu0 %v261
      %v454 = vpop.f32.mrf.mxu0
      %v455 = vadd.f32 0.0, %v454
      %v456 = vpop.f32.mrf.mxu0
      %457 = vmatprep.mubr.f32.mxu0 0.0
      %458 = vmatmul.mubr.f32.gmra.mxu0 %v264
      %v459 = vpop.f32.mrf.mxu0
      %v460 = vadd.f32 0.0, %v459
      %v461 = vpop.f32.mrf.mxu0
      %462 = vmatprep.mubr.f32.mxu0 0.0
      %463 = vmatmul.mubr.f32.gmra.mxu0 %v267
      %v464 = vpop.f32.mrf.mxu0
      %v465 = vadd.f32 0.0, %v464
      %v466 = vpop.f32.mrf.mxu0
      %467 = vmatprep.mubr.f32.mxu0 0.0
      %468 = vmatmul.mubr.f32.gmra.mxu0 %v270
      %v469 = vpop.f32.mrf.mxu0
      %v470 = vadd.f32 0.0, %v469
      %v471 = vpop.f32.mrf.mxu0
      %472 = vmatprep.mubr.f32.mxu0 0.0
      %473 = vmatmul.mubr.f32.gmra.mxu0 %v273
      %v474 = vpop.f32.mrf.mxu0
      %v475 = vadd.f32 0.0, %v474
      %v476 = vpop.f32.mrf.mxu0
      %477 = vmatprep.mubr.f32.mxu0 0.0
      %478 = vmatmul.mubr.f32.gmra.mxu0 %v276
      %v479 = vpop.f32.mrf.mxu0
      %v480 = vadd.f32 0.0, %v479
      %v481 = vpop.f32.mrf.mxu0
      %482 = vmatprep.mubr.f32.mxu0 0.0
      %483 = vmatmul.mubr.f32.gmra.mxu0 %v279
      %v484 = vpop.f32.mrf.mxu0
      %v485 = vadd.f32 0.0, %v484
      %v486 = vpop.f32.mrf.mxu0
      %487 = vmatprep.mubr.f32.mxu0 0.0
      %488 = vmatmul.mubr.f32.gmra.mxu0 %v282
      %v489 = vpop.f32.mrf.mxu0
      %v490 = vadd.f32 0.0, %v489
      %v491 = vpop.f32.mrf.mxu0
      %492 = vmatprep.mubr.f32.mxu0 0.0
      %493 = vmatmul.mubr.f32.gmra.mxu0 %v285
      %v494 = vpop.f32.mrf.mxu0
      %v495 = vadd.f32 0.0, %v494
      %v496 = vpop.f32.mrf.mxu0
      %497 = vmatprep.mubr.f32.mxu0 0.0
      %498 = vmatmul.mubr.f32.gmra.mxu0 %v288
      %v499 = vpop.f32.mrf.mxu0
      %v500 = vadd.f32 0.0, %v499
      %v501 = vpop.f32.mrf.mxu0
      %502 = vmatprep.mubr.f32.mxu0 0.0
      %503 = vmatmul.mubr.f32.gmra.mxu0 %v291
      %v504 = vpop.f32.mrf.mxu0
      %v505 = vadd.f32 0.0, %v504
      %v506 = vpop.f32.mrf.mxu0
      %507 = vmatprep.mubr.f32.mxu0 0.0
      %508 = vmatmul.mubr.f32.gmra.mxu0 %v294
      %v509 = vpop.f32.mrf.mxu0
      %v510 = vadd.f32 0.0, %v509
      %v511 = vpop.f32.mrf.mxu0
      %512 = vmatprep.mubr.f32.mxu0 0.0
      %513 = vmatmul.mubr.f32.gmra.mxu0 %v297
      %v514 = vpop.f32.mrf.mxu0
      %v515 = vadd.f32 0.0, %v514
      %v516 = vpop.f32.mrf.mxu0
      %517 = vmatprep.mubr.f32.mxu0 0.0
      %518 = vmatmul.mubr.f32.gmra.mxu0 %v300
      %v519 = vpop.f32.mrf.mxu0
      %v520 = vadd.f32 0.0, %v519
      %v521 = vpop.f32.mrf.mxu0
      %522 = vmatprep.mubr.f32.mxu0 0.0
      %523 = vmatmul.mubr.f32.gmra.mxu0 %v303
      %v524 = vpop.f32.mrf.mxu0
      %v525 = vadd.f32 0.0, %v524
      %v526 = vpop.f32.mrf.mxu0
      %527 = vmatprep.mubr.f32.mxu0 0.0
      %528 = vmatmul.mubr.f32.gmra.mxu0 %v306
      %v529 = vpop.f32.mrf.mxu0
      %v530 = vadd.f32 0.0, %v529
      %v531 = vpop.f32.mrf.mxu0
      %532 = vdwg.mxu0
      %v534 = vsel %vm211, %v144, 0
      %v537 = vsel %vm211, %v145, 0
      %v540 = vsel %vm211, %v146, 0
      %v543 = vsel %vm211, %v147, 0
      %v546 = vsel %vm211, %v148, 0
      %v549 = vsel %vm211, %v149, 0
      %v552 = vsel %vm211, %v150, 0
      %v555 = vsel %vm211, %v151, 0
      %v558 = vsel %vm211, %v152, 0
      %v561 = vsel %vm211, %v153, 0
      %v564 = vsel %vm211, %v154, 0
      %v567 = vsel %vm211, %v155, 0
      %v570 = vsel %vm211, %v156, 0
      %v573 = vsel %vm211, %v157, 0
      %v576 = vsel %vm211, %v158, 0
      %v579 = vsel %vm211, %v159, 0
      %v582 = vsel %vm211, %v160, 0
      %v585 = vsel %vm211, %v161, 0
      %v588 = vsel %vm211, %v162, 0
      %v591 = vsel %vm211, %v163, 0
      %v594 = vsel %vm211, %v164, 0
      %v597 = vsel %vm211, %v165, 0
      %v600 = vsel %vm211, %v166, 0
      %v603 = vsel %vm211, %v167, 0
      %v606 = vsel %vm211, %v168, 0
      %v609 = vsel %vm211, %v169, 0
      %v612 = vsel %vm211, %v170, 0
      %v615 = vsel %vm211, %v171, 0
      %v618 = vsel %vm211, %v172, 0
      %v621 = vsel %vm211, %v173, 0
      %v624 = vsel %vm211, %v174, 0
      %v627 = vsel %vm211, %v175, 0
      %629 = vmatprep.subr.mxu0 0.0
      %630 = vmatpush1.msra.mxu0 0.0
      %631 = vmatprep.subr.mxu0 0.0
      %632 = vmatpush1.msra.mxu0 0.0
      %633 = vmatprep.subr.mxu0 0.0
      %634 = vmatpush1.msra.mxu0 0.0
      %635 = vmatprep.subr.mxu0 0.0
      %636 = vmatpush1.msra.mxu0 0.0
      %637 = vmatprep.subr.mxu0 0.0
      %638 = vmatpush1.msra.mxu0 0.0
      %639 = vmatprep.subr.mxu0 0.0
      %640 = vmatpush1.msra.mxu0 0.0
      %641 = vmatprep.subr.mxu0 0.0
      %642 = vmatpush1.msra.mxu0 0.0
      %643 = vmatprep.subr.mxu0 0.0
      %644 = vmatpush1.msra.mxu0 0.0
      %645 = vmatprep.subr.mxu0 0.0
      %646 = vmatpush1.msra.mxu0 0.0
      %647 = vmatprep.subr.mxu0 0.0
      %648 = vmatpush1.msra.mxu0 0.0
      %649 = vmatprep.subr.mxu0 0.0
      %650 = vmatpush1.msra.mxu0 0.0
      %651 = vmatprep.subr.mxu0 0.0
      %652 = vmatpush1.msra.mxu0 0.0
      %653 = vmatprep.subr.mxu0 0.0
      %654 = vmatpush1.msra.mxu0 0.0
      %655 = vmatprep.subr.mxu0 0.0
      %656 = vmatpush1.msra.mxu0 0.0
      %657 = vmatprep.subr.mxu0 0.0
      %658 = vmatpush1.msra.mxu0 0.0
      %659 = vmatprep.subr.mxu0 0.0
      %660 = vmatpush1.msra.mxu0 %v176
      %661 = vmatprep.subr.mxu0 0.0
      %662 = vmatpush2.msra.mxu0 0.0
      %663 = vmatprep.subr.mxu0 0.0
      %664 = vmatpush2.msra.mxu0 0.0
      %665 = vmatprep.subr.mxu0 0.0
      %666 = vmatpush2.msra.mxu0 0.0
      %667 = vmatprep.subr.mxu0 0.0
      %668 = vmatpush2.msra.mxu0 0.0
      %669 = vmatprep.subr.mxu0 0.0
      %670 = vmatpush2.msra.mxu0 0.0
      %671 = vmatprep.subr.mxu0 0.0
      %672 = vmatpush2.msra.mxu0 0.0
      %673 = vmatprep.subr.mxu0 0.0
      %674 = vmatpush2.msra.mxu0 0.0
      %675 = vmatprep.subr.mxu0 0.0
      %676 = vmatpush2.msra.mxu0 0.0
      %677 = vmatprep.subr.mxu0 0.0
      %678 = vmatpush2.msra.mxu0 0.0
      %679 = vmatprep.subr.mxu0 0.0
      %680 = vmatpush2.msra.mxu0 0.0
      %681 = vmatprep.subr.mxu0 0.0
      %682 = vmatpush2.msra.mxu0 0.0
      %683 = vmatprep.subr.mxu0 0.0
      %684 = vmatpush2.msra.mxu0 0.0
      %685 = vmatprep.subr.mxu0 0.0
      %686 = vmatpush2.msra.mxu0 0.0
      %687 = vmatprep.subr.mxu0 0.0
      %688 = vmatpush2.msra.mxu0 0.0
      %689 = vmatprep.subr.mxu0 0.0
      %690 = vmatpush2.msra.mxu0 0.0
      %691 = vmatprep.subr.mxu0 0.0
      %692 = vmatpush2.msra.mxu0 0.0
      %693 = vmatprep.mubr.f32.mxu0 0.0
      %694 = vmatmul.mubr.f32.gmra.mxu0 %v534
      %v695 = vpop.f32.mrf.mxu0
      %v696 = vadd.f32 %v375, %v695
      %v697 = vpop.f32.mrf.mxu0
      %698 = vmatprep.mubr.f32.mxu0 0.0
      %699 = vmatmul.mubr.f32.gmra.mxu0 %v537
      %v700 = vpop.f32.mrf.mxu0
      %v701 = vadd.f32 %v380, %v700
      %v702 = vpop.f32.mrf.mxu0
      %703 = vmatprep.mubr.f32.mxu0 0.0
      %704 = vmatmul.mubr.f32.gmra.mxu0 %v540
      %v705 = vpop.f32.mrf.mxu0
      %v706 = vadd.f32 %v385, %v705
      %v707 = vpop.f32.mrf.mxu0
      %708 = vmatprep.mubr.f32.mxu0 0.0
      %709 = vmatmul.mubr.f32.gmra.mxu0 %v543
      %v710 = vpop.f32.mrf.mxu0
      %v711 = vadd.f32 %v390, %v710
      %v712 = vpop.f32.mrf.mxu0
      %713 = vmatprep.mubr.f32.mxu0 0.0
      %714 = vmatmul.mubr.f32.gmra.mxu0 %v546
      %v715 = vpop.f32.mrf.mxu0
      %v716 = vadd.f32 %v395, %v715
      %v717 = vpop.f32.mrf.mxu0
      %718 = vmatprep.mubr.f32.mxu0 0.0
      %719 = vmatmul.mubr.f32.gmra.mxu0 %v549
      %v720 = vpop.f32.mrf.mxu0
      %v721 = vadd.f32 %v400, %v720
      %v722 = vpop.f32.mrf.mxu0
      %723 = vmatprep.mubr.f32.mxu0 0.0
      %724 = vmatmul.mubr.f32.gmra.mxu0 %v552
      %v725 = vpop.f32.mrf.mxu0
      %v726 = vadd.f32 %v405, %v725
      %v727 = vpop.f32.mrf.mxu0
      %728 = vmatprep.mubr.f32.mxu0 0.0
      %729 = vmatmul.mubr.f32.gmra.mxu0 %v555
      %v730 = vpop.f32.mrf.mxu0
      %v731 = vadd.f32 %v410, %v730
      %v732 = vpop.f32.mrf.mxu0
      %733 = vmatprep.mubr.f32.mxu0 0.0
      %734 = vmatmul.mubr.f32.gmra.mxu0 %v558
      %v735 = vpop.f32.mrf.mxu0
      %v736 = vadd.f32 %v415, %v735
      %v737 = vpop.f32.mrf.mxu0
      %738 = vmatprep.mubr.f32.mxu0 0.0
      %739 = vmatmul.mubr.f32.gmra.mxu0 %v561
      %v740 = vpop.f32.mrf.mxu0
      %v741 = vadd.f32 %v420, %v740
      %v742 = vpop.f32.mrf.mxu0
      %743 = vmatprep.mubr.f32.mxu0 0.0
      %744 = vmatmul.mubr.f32.gmra.mxu0 %v564
      %v745 = vpop.f32.mrf.mxu0
      %v746 = vadd.f32 %v425, %v745
      %v747 = vpop.f32.mrf.mxu0
      %748 = vmatprep.mubr.f32.mxu0 0.0
      %749 = vmatmul.mubr.f32.gmra.mxu0 %v567
      %v750 = vpop.f32.mrf.mxu0
      %v751 = vadd.f32 %v430, %v750
      %v752 = vpop.f32.mrf.mxu0
      %753 = vmatprep.mubr.f32.mxu0 0.0
      %754 = vmatmul.mubr.f32.gmra.mxu0 %v570
      %v755 = vpop.f32.mrf.mxu0
      %v756 = vadd.f32 %v435, %v755
      %v757 = vpop.f32.mrf.mxu0
      %758 = vmatprep.mubr.f32.mxu0 0.0
      %759 = vmatmul.mubr.f32.gmra.mxu0 %v573
      %v760 = vpop.f32.mrf.mxu0
      %v761 = vadd.f32 %v440, %v760
      %v762 = vpop.f32.mrf.mxu0
      %763 = vmatprep.mubr.f32.mxu0 0.0
      %764 = vmatmul.mubr.f32.gmra.mxu0 %v576
      %v765 = vpop.f32.mrf.mxu0
      %v766 = vadd.f32 %v445, %v765
      %v767 = vpop.f32.mrf.mxu0
      %768 = vmatprep.mubr.f32.mxu0 0.0
      %769 = vmatmul.mubr.f32.gmra.mxu0 %v579
      %v770 = vpop.f32.mrf.mxu0
      %v771 = vadd.f32 %v450, %v770
      %v772 = vpop.f32.mrf.mxu0
      %773 = vmatprep.mubr.f32.mxu0 0.0
      %774 = vmatmul.mubr.f32.gmra.mxu0 %v582
      %v775 = vpop.f32.mrf.mxu0
      %v776 = vadd.f32 %v455, %v775
      %v777 = vpop.f32.mrf.mxu0
      %778 = vmatprep.mubr.f32.mxu0 0.0
      %779 = vmatmul.mubr.f32.gmra.mxu0 %v585
      %v780 = vpop.f32.mrf.mxu0
      %v781 = vadd.f32 %v460, %v780
      %v782 = vpop.f32.mrf.mxu0
      %783 = vmatprep.mubr.f32.mxu0 0.0
      %784 = vmatmul.mubr.f32.gmra.mxu0 %v588
      %v785 = vpop.f32.mrf.mxu0
      %v786 = vadd.f32 %v465, %v785
      %v787 = vpop.f32.mrf.mxu0
      %788 = vmatprep.mubr.f32.mxu0 0.0
      %789 = vmatmul.mubr.f32.gmra.mxu0 %v591
      %v790 = vpop.f32.mrf.mxu0
      %v791 = vadd.f32 %v470, %v790
      %v792 = vpop.f32.mrf.mxu0
      %793 = vmatprep.mubr.f32.mxu0 0.0
      %794 = vmatmul.mubr.f32.gmra.mxu0 %v594
      %v795 = vpop.f32.mrf.mxu0
      %v796 = vadd.f32 %v475, %v795
      %v797 = vpop.f32.mrf.mxu0
      %798 = vmatprep.mubr.f32.mxu0 0.0
      %799 = vmatmul.mubr.f32.gmra.mxu0 %v597
      %v800 = vpop.f32.mrf.mxu0
      %v801 = vadd.f32 %v480, %v800
      %v802 = vpop.f32.mrf.mxu0
      %803 = vmatprep.mubr.f32.mxu0 0.0
      %804 = vmatmul.mubr.f32.gmra.mxu0 %v600
      %v805 = vpop.f32.mrf.mxu0
      %v806 = vadd.f32 %v485, %v805
      %v807 = vpop.f32.mrf.mxu0
      %808 = vmatprep.mubr.f32.mxu0 0.0
      %809 = vmatmul.mubr.f32.gmra.mxu0 %v603
      %v810 = vpop.f32.mrf.mxu0
      %v811 = vadd.f32 %v490, %v810
      %v812 = vpop.f32.mrf.mxu0
      %813 = vmatprep.mubr.f32.mxu0 0.0
      %814 = vmatmul.mubr.f32.gmra.mxu0 %v606
      %v815 = vpop.f32.mrf.mxu0
      %v816 = vadd.f32 %v495, %v815
      %v817 = vpop.f32.mrf.mxu0
      %818 = vmatprep.mubr.f32.mxu0 0.0
      %819 = vmatmul.mubr.f32.gmra.mxu0 %v609
      %v820 = vpop.f32.mrf.mxu0
      %v821 = vadd.f32 %v500, %v820
      %v822 = vpop.f32.mrf.mxu0
      %823 = vmatprep.mubr.f32.mxu0 0.0
      %824 = vmatmul.mubr.f32.gmra.mxu0 %v612
      %v825 = vpop.f32.mrf.mxu0
      %v826 = vadd.f32 %v505, %v825
      %v827 = vpop.f32.mrf.mxu0
      %828 = vmatprep.mubr.f32.mxu0 0.0
      %829 = vmatmul.mubr.f32.gmra.mxu0 %v615
      %v830 = vpop.f32.mrf.mxu0
      %v831 = vadd.f32 %v510, %v830
      %v832 = vpop.f32.mrf.mxu0
      %833 = vmatprep.mubr.f32.mxu0 0.0
      %834 = vmatmul.mubr.f32.gmra.mxu0 %v618
      %v835 = vpop.f32.mrf.mxu0
      %v836 = vadd.f32 %v515, %v835
      %v837 = vpop.f32.mrf.mxu0
      %838 = vmatprep.mubr.f32.mxu0 0.0
      %839 = vmatmul.mubr.f32.gmra.mxu0 %v621
      %v840 = vpop.f32.mrf.mxu0
      %v841 = vadd.f32 %v520, %v840
      %v842 = vpop.f32.mrf.mxu0
      %843 = vmatprep.mubr.f32.mxu0 0.0
      %844 = vmatmul.mubr.f32.gmra.mxu0 %v624
      %v845 = vpop.f32.mrf.mxu0
      %v846 = vadd.f32 %v525, %v845
      %v847 = vpop.f32.mrf.mxu0
      %848 = vmatprep.mubr.f32.mxu0 0.0
      %849 = vmatmul.mubr.f32.gmra.mxu0 %v627
      %v850 = vpop.f32.mrf.mxu0
      %v851 = vadd.f32 %v530, %v850
      %v852 = vpop.f32.mrf.mxu0
      %853 = vdwg.mxu0
      %v854 = vld [vmem:[%s138 + $0x2] sm:$0xff]
      %v855 = vld [vmem:[%s138 + $0xa] sm:$0xff]
      %v856 = vld [vmem:[%s138 + $0x1a] sm:$0xff]
      %v857 = vld [vmem:[%s138 + $0x22] sm:$0xff]
      %v858 = vld [vmem:[%s138 + $0x32] sm:$0xff]
      %v859 = vld [vmem:[%s138 + $0x3a] sm:$0xff]
      %v860 = vld [vmem:[%s138 + $0x4a] sm:$0xff]
      %v861 = vld [vmem:[%s138 + $0x52] sm:$0xff]
      %v862 = vld [vmem:[%s138 + $0x62] sm:$0xff]
      %v863 = vld [vmem:[%s138 + $0x6a] sm:$0xff]
      %v864 = vld [vmem:[%s138 + $0x7a] sm:$0xff]
      %v865 = vld [vmem:[%s138 + $0x82] sm:$0xff]
      %v866 = vld [vmem:[%s138 + $0x92] sm:$0xff]
      %v867 = vld [vmem:[%s138 + $0x9a] sm:$0xff]
      %v868 = vld [vmem:[%s138 + $0xaa] sm:$0xff]
      %v869 = vld [vmem:[%s138 + $0xb2] sm:$0xff]
      %v870 = vld [vmem:[%s138 + $0xc2] sm:$0xff]
      %v871 = vld [vmem:[%s138 + $0xca] sm:$0xff]
      %v872 = vld [vmem:[%s138 + $0xda] sm:$0xff]
      %v873 = vld [vmem:[%s138 + $0xe2] sm:$0xff]
      %v874 = vld [vmem:[%s138 + $0xf2] sm:$0xff]
      %v875 = vld [vmem:[%s138 + $0xfa] sm:$0xff]
      %v876 = vld [vmem:[%s138 + $0x10a] sm:$0xff]
      %v877 = vld [vmem:[%s138 + $0x112] sm:$0xff]
      %v878 = vld [vmem:[%s138 + $0x122] sm:$0xff]
      %v879 = vld [vmem:[%s138 + $0x12a] sm:$0xff]
      %v880 = vld [vmem:[%s138 + $0x13a] sm:$0xff]
      %v881 = vld [vmem:[%s138 + $0x142] sm:$0xff]
      %v882 = vld [vmem:[%s138 + $0x152] sm:$0xff]
      %v883 = vld [vmem:[%s138 + $0x15a] sm:$0xff]
      %v884 = vld [vmem:[%s138 + $0x16a] sm:$0xff]
      %v885 = vld [vmem:[%s138 + $0x172] sm:$0xff]
      %s886 = scalar_lea.vmem %s1, 16
      %v887 = vld [vmem:[%s886] sm:$0xff]
      %v889 = vsel %vm211, %v854, 0
      %v892 = vsel %vm211, %v855, 0
      %v895 = vsel %vm211, %v856, 0
      %v898 = vsel %vm211, %v857, 0
      %v901 = vsel %vm211, %v858, 0
      %v904 = vsel %vm211, %v859, 0
      %v907 = vsel %vm211, %v860, 0
      %v910 = vsel %vm211, %v861, 0
      %v913 = vsel %vm211, %v862, 0
      %v916 = vsel %vm211, %v863, 0
      %v919 = vsel %vm211, %v864, 0
      %v922 = vsel %vm211, %v865, 0
      %v925 = vsel %vm211, %v866, 0
      %v928 = vsel %vm211, %v867, 0
      %v931 = vsel %vm211, %v868, 0
      %v934 = vsel %vm211, %v869, 0
      %v937 = vsel %vm211, %v870, 0
      %v940 = vsel %vm211, %v871, 0
      %v943 = vsel %vm211, %v872, 0
      %v946 = vsel %vm211, %v873, 0
      %v949 = vsel %vm211, %v874, 0
      %v952 = vsel %vm211, %v875, 0
      %v955 = vsel %vm211, %v876, 0
      %v958 = vsel %vm211, %v877, 0
      %v961 = vsel %vm211, %v878, 0
      %v964 = vsel %vm211, %v879, 0
      %v967 = vsel %vm211, %v880, 0
      %v970 = vsel %vm211, %v881, 0
      %v973 = vsel %vm211, %v882, 0
      %v976 = vsel %vm211, %v883, 0
      %v979 = vsel %vm211, %v884, 0
      %v982 = vsel %vm211, %v885, 0
      %984 = vmatprep.subr.mxu0 0.0
      %985 = vmatpush1.msra.mxu0 0.0
      %986 = vmatprep.subr.mxu0 0.0
      %987 = vmatpush1.msra.mxu0 0.0
      %988 = vmatprep.subr.mxu0 0.0
      %989 = vmatpush1.msra.mxu0 0.0
      %990 = vmatprep.subr.mxu0 0.0
      %991 = vmatpush1.msra.mxu0 0.0
      %992 = vmatprep.subr.mxu0 0.0
      %993 = vmatpush1.msra.mxu0 0.0
      %994 = vmatprep.subr.mxu0 0.0
      %995 = vmatpush1.msra.mxu0 0.0
      %996 = vmatprep.subr.mxu0 0.0
      %997 = vmatpush1.msra.mxu0 0.0
      %998 = vmatprep.subr.mxu0 0.0
      %999 = vmatpush1.msra.mxu0 0.0
      %1000 = vmatprep.subr.mxu0 0.0
      %1001 = vmatpush1.msra.mxu0 0.0
      %1002 = vmatprep.subr.mxu0 0.0
      %1003 = vmatpush1.msra.mxu0 0.0
      %1004 = vmatprep.subr.mxu0 0.0
      %1005 = vmatpush1.msra.mxu0 0.0
      %1006 = vmatprep.subr.mxu0 0.0
      %1007 = vmatpush1.msra.mxu0 0.0
      %1008 = vmatprep.subr.mxu0 0.0
      %1009 = vmatpush1.msra.mxu0 0.0
      %1010 = vmatprep.subr.mxu0 0.0
      %1011 = vmatpush1.msra.mxu0 0.0
      %1012 = vmatprep.subr.mxu0 0.0
      %1013 = vmatpush1.msra.mxu0 0.0
      %1014 = vmatprep.subr.mxu0 0.0
      %1015 = vmatpush1.msra.mxu0 %v887
      %1016 = vmatprep.subr.mxu0 0.0
      %1017 = vmatpush2.msra.mxu0 0.0
      %1018 = vmatprep.subr.mxu0 0.0
      %1019 = vmatpush2.msra.mxu0 0.0
      %1020 = vmatprep.subr.mxu0 0.0
      %1021 = vmatpush2.msra.mxu0 0.0
      %1022 = vmatprep.subr.mxu0 0.0
      %1023 = vmatpush2.msra.mxu0 0.0
      %1024 = vmatprep.subr.mxu0 0.0
      %1025 = vmatpush2.msra.mxu0 0.0
      %1026 = vmatprep.subr.mxu0 0.0
      %1027 = vmatpush2.msra.mxu0 0.0
      %1028 = vmatprep.subr.mxu0 0.0
      %1029 = vmatpush2.msra.mxu0 0.0
      %1030 = vmatprep.subr.mxu0 0.0
      %1031 = vmatpush2.msra.mxu0 0.0
      %1032 = vmatprep.subr.mxu0 0.0
      %1033 = vmatpush2.msra.mxu0 0.0
      %1034 = vmatprep.subr.mxu0 0.0
      %1035 = vmatpush2.msra.mxu0 0.0
      %1036 = vmatprep.subr.mxu0 0.0
      %1037 = vmatpush2.msra.mxu0 0.0
      %1038 = vmatprep.subr.mxu0 0.0
      %1039 = vmatpush2.msra.mxu0 0.0
      %1040 = vmatprep.subr.mxu0 0.0
      %1041 = vmatpush2.msra.mxu0 0.0
      %1042 = vmatprep.subr.mxu0 0.0
      %1043 = vmatpush2.msra.mxu0 0.0
      %1044 = vmatprep.subr.mxu0 0.0
      %1045 = vmatpush2.msra.mxu0 0.0
      %1046 = vmatprep.subr.mxu0 0.0
      %1047 = vmatpush2.msra.mxu0 0.0
      %1048 = vmatprep.mubr.f32.mxu0 0.0
      %1049 = vmatmul.mubr.f32.gmra.mxu0 %v889
      %v1050 = vpop.f32.mrf.mxu0
      %v1051 = vadd.f32 0.0, %v1050
      %v1052 = vpop.f32.mrf.mxu0
      %1053 = vmatprep.mubr.f32.mxu0 0.0
      %1054 = vmatmul.mubr.f32.gmra.mxu0 %v892
      %v1055 = vpop.f32.mrf.mxu0
      %v1056 = vadd.f32 0.0, %v1055
      %v1057 = vpop.f32.mrf.mxu0
      %1058 = vmatprep.mubr.f32.mxu0 0.0
      %1059 = vmatmul.mubr.f32.gmra.mxu0 %v895
      %v1060 = vpop.f32.mrf.mxu0
      %v1061 = vadd.f32 0.0, %v1060
      %v1062 = vpop.f32.mrf.mxu0
      %1063 = vmatprep.mubr.f32.mxu0 0.0
      %1064 = vmatmul.mubr.f32.gmra.mxu0 %v898
      %v1065 = vpop.f32.mrf.mxu0
      %v1066 = vadd.f32 0.0, %v1065
      %v1067 = vpop.f32.mrf.mxu0
      %1068 = vmatprep.mubr.f32.mxu0 0.0
      %1069 = vmatmul.mubr.f32.gmra.mxu0 %v901
      %v1070 = vpop.f32.mrf.mxu0
      %v1071 = vadd.f32 0.0, %v1070
      %v1072 = vpop.f32.mrf.mxu0
      %1073 = vmatprep.mubr.f32.mxu0 0.0
      %1074 = vmatmul.mubr.f32.gmra.mxu0 %v904
      %v1075 = vpop.f32.mrf.mxu0
      %v1076 = vadd.f32 0.0, %v1075
      %v1077 = vpop.f32.mrf.mxu0
      %1078 = vmatprep.mubr.f32.mxu0 0.0
      %1079 = vmatmul.mubr.f32.gmra.mxu0 %v907
      %v1080 = vpop.f32.mrf.mxu0
      %v1081 = vadd.f32 0.0, %v1080
      %v1082 = vpop.f32.mrf.mxu0
      %1083 = vmatprep.mubr.f32.mxu0 0.0
      %1084 = vmatmul.mubr.f32.gmra.mxu0 %v910
      %v1085 = vpop.f32.mrf.mxu0
      %v1086 = vadd.f32 0.0, %v1085
      %v1087 = vpop.f32.mrf.mxu0
      %1088 = vmatprep.mubr.f32.mxu0 0.0
      %1089 = vmatmul.mubr.f32.gmra.mxu0 %v913
      %v1090 = vpop.f32.mrf.mxu0
      %v1091 = vadd.f32 0.0, %v1090
      %v1092 = vpop.f32.mrf.mxu0
      %1093 = vmatprep.mubr.f32.mxu0 0.0
      %1094 = vmatmul.mubr.f32.gmra.mxu0 %v916
      %v1095 = vpop.f32.mrf.mxu0
      %v1096 = vadd.f32 0.0, %v1095
      %v1097 = vpop.f32.mrf.mxu0
      %1098 = vmatprep.mubr.f32.mxu0 0.0
      %1099 = vmatmul.mubr.f32.gmra.mxu0 %v919
      %v1100 = vpop.f32.mrf.mxu0
      %v1101 = vadd.f32 0.0, %v1100
      %v1102 = vpop.f32.mrf.mxu0
      %1103 = vmatprep.mubr.f32.mxu0 0.0
      %1104 = vmatmul.mubr.f32.gmra.mxu0 %v922
      %v1105 = vpop.f32.mrf.mxu0
      %v1106 = vadd.f32 0.0, %v1105
      %v1107 = vpop.f32.mrf.mxu0
      %1108 = vmatprep.mubr.f32.mxu0 0.0
      %1109 = vmatmul.mubr.f32.gmra.mxu0 %v925
      %v1110 = vpop.f32.mrf.mxu0
      %v1111 = vadd.f32 0.0, %v1110
      %v1112 = vpop.f32.mrf.mxu0
      %1113 = vmatprep.mubr.f32.mxu0 0.0
      %1114 = vmatmul.mubr.f32.gmra.mxu0 %v928
      %v1115 = vpop.f32.mrf.mxu0
      %v1116 = vadd.f32 0.0, %v1115
      %v1117 = vpop.f32.mrf.mxu0
      %1118 = vmatprep.mubr.f32.mxu0 0.0
      %1119 = vmatmul.mubr.f32.gmra.mxu0 %v931
      %v1120 = vpop.f32.mrf.mxu0
      %v1121 = vadd.f32 0.0, %v1120
      %v1122 = vpop.f32.mrf.mxu0
      %1123 = vmatprep.mubr.f32.mxu0 0.0
      %1124 = vmatmul.mubr.f32.gmra.mxu0 %v934
      %v1125 = vpop.f32.mrf.mxu0
      %v1126 = vadd.f32 0.0, %v1125
      %v1127 = vpop.f32.mrf.mxu0
      %1128 = vmatprep.mubr.f32.mxu0 0.0
      %1129 = vmatmul.mubr.f32.gmra.mxu0 %v937
      %v1130 = vpop.f32.mrf.mxu0
      %v1131 = vadd.f32 0.0, %v1130
      %v1132 = vpop.f32.mrf.mxu0
      %1133 = vmatprep.mubr.f32.mxu0 0.0
      %1134 = vmatmul.mubr.f32.gmra.mxu0 %v940
      %v1135 = vpop.f32.mrf.mxu0
      %v1136 = vadd.f32 0.0, %v1135
      %v1137 = vpop.f32.mrf.mxu0
      %1138 = vmatprep.mubr.f32.mxu0 0.0
      %1139 = vmatmul.mubr.f32.gmra.mxu0 %v943
      %v1140 = vpop.f32.mrf.mxu0
      %v1141 = vadd.f32 0.0, %v1140
      %v1142 = vpop.f32.mrf.mxu0
      %1143 = vmatprep.mubr.f32.mxu0 0.0
      %1144 = vmatmul.mubr.f32.gmra.mxu0 %v946
      %v1145 = vpop.f32.mrf.mxu0
      %v1146 = vadd.f32 0.0, %v1145
      %v1147 = vpop.f32.mrf.mxu0
      %1148 = vmatprep.mubr.f32.mxu0 0.0
      %1149 = vmatmul.mubr.f32.gmra.mxu0 %v949
      %v1150 = vpop.f32.mrf.mxu0
      %v1151 = vadd.f32 0.0, %v1150
      %v1152 = vpop.f32.mrf.mxu0
      %1153 = vmatprep.mubr.f32.mxu0 0.0
      %1154 = vmatmul.mubr.f32.gmra.mxu0 %v952
      %v1155 = vpop.f32.mrf.mxu0
      %v1156 = vadd.f32 0.0, %v1155
      %v1157 = vpop.f32.mrf.mxu0
      %1158 = vmatprep.mubr.f32.mxu0 0.0
      %1159 = vmatmul.mubr.f32.gmra.mxu0 %v955
      %v1160 = vpop.f32.mrf.mxu0
      %v1161 = vadd.f32 0.0, %v1160
      %v1162 = vpop.f32.mrf.mxu0
      %1163 = vmatprep.mubr.f32.mxu0 0.0
      %1164 = vmatmul.mubr.f32.gmra.mxu0 %v958
      %v1165 = vpop.f32.mrf.mxu0
      %v1166 = vadd.f32 0.0, %v1165
      %v1167 = vpop.f32.mrf.mxu0
      %1168 = vmatprep.mubr.f32.mxu0 0.0
      %1169 = vmatmul.mubr.f32.gmra.mxu0 %v961
      %v1170 = vpop.f32.mrf.mxu0
      %v1171 = vadd.f32 0.0, %v1170
      %v1172 = vpop.f32.mrf.mxu0
      %1173 = vmatprep.mubr.f32.mxu0 0.0
      %1174 = vmatmul.mubr.f32.gmra.mxu0 %v964
      %v1175 = vpop.f32.mrf.mxu0
      %v1176 = vadd.f32 0.0, %v1175
      %v1177 = vpop.f32.mrf.mxu0
      %1178 = vmatprep.mubr.f32.mxu0 0.0
      %1179 = vmatmul.mubr.f32.gmra.mxu0 %v967
      %v1180 = vpop.f32.mrf.mxu0
      %v1181 = vadd.f32 0.0, %v1180
      %v1182 = vpop.f32.mrf.mxu0
      %1183 = vmatprep.mubr.f32.mxu0 0.0
      %1184 = vmatmul.mubr.f32.gmra.mxu0 %v970
      %v1185 = vpop.f32.mrf.mxu0
      %v1186 = vadd.f32 0.0, %v1185
      %v1187 = vpop.f32.mrf.mxu0
      %1188 = vmatprep.mubr.f32.mxu0 0.0
      %1189 = vmatmul.mubr.f32.gmra.mxu0 %v973
      %v1190 = vpop.f32.mrf.mxu0
      %v1191 = vadd.f32 0.0, %v1190
      %v1192 = vpop.f32.mrf.mxu0
      %1193 = vmatprep.mubr.f32.mxu0 0.0
      %1194 = vmatmul.mubr.f32.gmra.mxu0 %v976
      %v1195 = vpop.f32.mrf.mxu0
      %v1196 = vadd.f32 0.0, %v1195
      %v1197 = vpop.f32.mrf.mxu0
      %1198 = vmatprep.mubr.f32.mxu0 0.0
      %1199 = vmatmul.mubr.f32.gmra.mxu0 %v979
      %v1200 = vpop.f32.mrf.mxu0
      %v1201 = vadd.f32 0.0, %v1200
      %v1202 = vpop.f32.mrf.mxu0
      %1203 = vmatprep.mubr.f32.mxu0 0.0
      %1204 = vmatmul.mubr.f32.gmra.mxu0 %v982
      %v1205 = vpop.f32.mrf.mxu0
      %v1206 = vadd.f32 0.0, %v1205
      %v1207 = vpop.f32.mrf.mxu0
      %1208 = vdwg.mxu0
      %v1209 = vadd.f32 %v696, %v1051
      %v1210 = vadd.f32 %v701, %v1056
      %v1211 = vadd.f32 %v706, %v1061
      %v1212 = vadd.f32 %v711, %v1066
      %v1213 = vadd.f32 %v716, %v1071
      %v1214 = vadd.f32 %v721, %v1076
      %v1215 = vadd.f32 %v726, %v1081
      %v1216 = vadd.f32 %v731, %v1086
      %v1217 = vadd.f32 %v736, %v1091
      %v1218 = vadd.f32 %v741, %v1096
      %v1219 = vadd.f32 %v746, %v1101
      %v1220 = vadd.f32 %v751, %v1106
      %v1221 = vadd.f32 %v756, %v1111
      %v1222 = vadd.f32 %v761, %v1116
      %v1223 = vadd.f32 %v766, %v1121
      %v1224 = vadd.f32 %v771, %v1126
      %v1225 = vadd.f32 %v776, %v1131
      %v1226 = vadd.f32 %v781, %v1136
      %v1227 = vadd.f32 %v786, %v1141
      %v1228 = vadd.f32 %v791, %v1146
      %v1229 = vadd.f32 %v796, %v1151
      %v1230 = vadd.f32 %v801, %v1156
      %v1231 = vadd.f32 %v806, %v1161
      %v1232 = vadd.f32 %v811, %v1166
      %v1233 = vadd.f32 %v816, %v1171
      %v1234 = vadd.f32 %v821, %v1176
      %v1235 = vadd.f32 %v826, %v1181
      %v1236 = vadd.f32 %v831, %v1186
      %v1237 = vadd.f32 %v836, %v1191
      %v1238 = vadd.f32 %v841, %v1196
      %v1239 = vadd.f32 %v846, %v1201
      %v1240 = vadd.f32 %v851, %v1206
      %s1241 = scalar_lea.vmem %s138, 24
      %v1242 = vld [vmem:[%s1241] sm:$0xff]
      %v1243 = vld [vmem:[%s1241 + $0x8] sm:$0xff]
      %v1244 = vld [vmem:[%s1241 + $0x18] sm:$0xff]
      %v1245 = vld [vmem:[%s1241 + $0x20] sm:$0xff]
      %v1246 = vld [vmem:[%s1241 + $0x30] sm:$0xff]
      %v1247 = vld [vmem:[%s1241 + $0x38] sm:$0xff]
      %v1248 = vld [vmem:[%s1241 + $0x48] sm:$0xff]
      %v1249 = vld [vmem:[%s1241 + $0x50] sm:$0xff]
      %v1250 = vld [vmem:[%s1241 + $0x60] sm:$0xff]
      %v1251 = vld [vmem:[%s1241 + $0x68] sm:$0xff]
      %v1252 = vld [vmem:[%s1241 + $0x78] sm:$0xff]
      %v1253 = vld [vmem:[%s1241 + $0x80] sm:$0xff]
      %v1254 = vld [vmem:[%s1241 + $0x90] sm:$0xff]
      %v1255 = vld [vmem:[%s1241 + $0x98] sm:$0xff]
      %v1256 = vld [vmem:[%s1241 + $0xa8] sm:$0xff]
      %v1257 = vld [vmem:[%s1241 + $0xb0] sm:$0xff]
      %v1258 = vld [vmem:[%s1241 + $0xc0] sm:$0xff]
      %v1259 = vld [vmem:[%s1241 + $0xc8] sm:$0xff]
      %v1260 = vld [vmem:[%s1241 + $0xd8] sm:$0xff]
      %v1261 = vld [vmem:[%s1241 + $0xe0] sm:$0xff]
      %v1262 = vld [vmem:[%s1241 + $0xf0] sm:$0xff]
      %v1263 = vld [vmem:[%s1241 + $0xf8] sm:$0xff]
      %v1264 = vld [vmem:[%s1241 + $0x108] sm:$0xff]
      %v1265 = vld [vmem:[%s1241 + $0x110] sm:$0xff]
      %v1266 = vld [vmem:[%s1241 + $0x120] sm:$0xff]
      %v1267 = vld [vmem:[%s1241 + $0x128] sm:$0xff]
      %v1268 = vld [vmem:[%s1241 + $0x138] sm:$0xff]
      %v1269 = vld [vmem:[%s1241 + $0x140] sm:$0xff]
      %v1270 = vld [vmem:[%s1241 + $0x150] sm:$0xff]
      %v1271 = vld [vmem:[%s1241 + $0x158] sm:$0xff]
      %v1272 = vld [vmem:[%s1241 + $0x168] sm:$0xff]
      %v1273 = vld [vmem:[%s1241 + $0x170] sm:$0xff]
      %s1274 = scalar_lea.vmem %s1, 24
      %v1275 = vld [vmem:[%s1274] sm:$0xff]
      %v1277 = vsel %vm211, %v1242, 0
      %v1280 = vsel %vm211, %v1243, 0
      %v1283 = vsel %vm211, %v1244, 0
      %v1286 = vsel %vm211, %v1245, 0
      %v1289 = vsel %vm211, %v1246, 0
      %v1292 = vsel %vm211, %v1247, 0
      %v1295 = vsel %vm211, %v1248, 0
      %v1298 = vsel %vm211, %v1249, 0
      %v1301 = vsel %vm211, %v1250, 0
      %v1304 = vsel %vm211, %v1251, 0
      %v1307 = vsel %vm211, %v1252, 0
      %v1310 = vsel %vm211, %v1253, 0
      %v1313 = vsel %vm211, %v1254, 0
      %v1316 = vsel %vm211, %v1255, 0
      %v1319 = vsel %vm211, %v1256, 0
      %v1322 = vsel %vm211, %v1257, 0
      %v1325 = vsel %vm211, %v1258, 0
      %v1328 = vsel %vm211, %v1259, 0
      %v1331 = vsel %vm211, %v1260, 0
      %v1334 = vsel %vm211, %v1261, 0
      %v1337 = vsel %vm211, %v1262, 0
      %v1340 = vsel %vm211, %v1263, 0
      %v1343 = vsel %vm211, %v1264, 0
      %v1346 = vsel %vm211, %v1265, 0
      %v1349 = vsel %vm211, %v1266, 0
      %v1352 = vsel %vm211, %v1267, 0
      %v1355 = vsel %vm211, %v1268, 0
      %v1358 = vsel %vm211, %v1269, 0
      %v1361 = vsel %vm211, %v1270, 0
      %v1364 = vsel %vm211, %v1271, 0
      %v1367 = vsel %vm211, %v1272, 0
      %v1370 = vsel %vm211, %v1273, 0
      %1372 = vmatprep.subr.mxu0 0.0
      %1373 = vmatpush1.msra.mxu0 0.0
      %1374 = vmatprep.subr.mxu0 0.0
      %1375 = vmatpush1.msra.mxu0 0.0
      %1376 = vmatprep.subr.mxu0 0.0
      %1377 = vmatpush1.msra.mxu0 0.0
      %1378 = vmatprep.subr.mxu0 0.0
      %1379 = vmatpush1.msra.mxu0 0.0
      %1380 = vmatprep.subr.mxu0 0.0
      %1381 = vmatpush1.msra.mxu0 0.0
      %1382 = vmatprep.subr.mxu0 0.0
      %1383 = vmatpush1.msra.mxu0 0.0
      %1384 = vmatprep.subr.mxu0 0.0
      %1385 = vmatpush1.msra.mxu0 0.0
      %1386 = vmatprep.subr.mxu0 0.0
      %1387 = vmatpush1.msra.mxu0 0.0
      %1388 = vmatprep.subr.mxu0 0.0
      %1389 = vmatpush1.msra.mxu0 0.0
      %1390 = vmatprep.subr.mxu0 0.0
      %1391 = vmatpush1.msra.mxu0 0.0
      %1392 = vmatprep.subr.mxu0 0.0
      %1393 = vmatpush1.msra.mxu0 0.0
      %1394 = vmatprep.subr.mxu0 0.0
      %1395 = vmatpush1.msra.mxu0 0.0
      %1396 = vmatprep.subr.mxu0 0.0
      %1397 = vmatpush1.msra.mxu0 0.0
      %1398 = vmatprep.subr.mxu0 0.0
      %1399 = vmatpush1.msra.mxu0 0.0
      %1400 = vmatprep.subr.mxu0 0.0
      %1401 = vmatpush1.msra.mxu0 0.0
      %1402 = vmatprep.subr.mxu0 0.0
      %1403 = vmatpush1.msra.mxu0 %v1275
      %1404 = vmatprep.subr.mxu0 0.0
      %1405 = vmatpush2.msra.mxu0 0.0
      %1406 = vmatprep.subr.mxu0 0.0
      %1407 = vmatpush2.msra.mxu0 0.0
      %1408 = vmatprep.subr.mxu0 0.0
      %1409 = vmatpush2.msra.mxu0 0.0
      %1410 = vmatprep.subr.mxu0 0.0
      %1411 = vmatpush2.msra.mxu0 0.0
      %1412 = vmatprep.subr.mxu0 0.0
      %1413 = vmatpush2.msra.mxu0 0.0
      %1414 = vmatprep.subr.mxu0 0.0
      %1415 = vmatpush2.msra.mxu0 0.0
      %1416 = vmatprep.subr.mxu0 0.0
      %1417 = vmatpush2.msra.mxu0 0.0
      %1418 = vmatprep.subr.mxu0 0.0
      %1419 = vmatpush2.msra.mxu0 0.0
      %1420 = vmatprep.subr.mxu0 0.0
      %1421 = vmatpush2.msra.mxu0 0.0
      %1422 = vmatprep.subr.mxu0 0.0
      %1423 = vmatpush2.msra.mxu0 0.0
      %1424 = vmatprep.subr.mxu0 0.0
      %1425 = vmatpush2.msra.mxu0 0.0
      %1426 = vmatprep.subr.mxu0 0.0
      %1427 = vmatpush2.msra.mxu0 0.0
      %1428 = vmatprep.subr.mxu0 0.0
      %1429 = vmatpush2.msra.mxu0 0.0
      %1430 = vmatprep.subr.mxu0 0.0
      %1431 = vmatpush2.msra.mxu0 0.0
      %1432 = vmatprep.subr.mxu0 0.0
      %1433 = vmatpush2.msra.mxu0 0.0
      %1434 = vmatprep.subr.mxu0 0.0
      %1435 = vmatpush2.msra.mxu0 0.0
      %1436 = vmatprep.mubr.f32.mxu0 0.0
      %1437 = vmatmul.mubr.f32.gmra.mxu0 %v1277
      %v1438 = vpop.f32.mrf.mxu0
      %v1439 = vadd.f32 0.0, %v1438
      %v1440 = vpop.f32.mrf.mxu0
      %1441 = vmatprep.mubr.f32.mxu0 0.0
      %1442 = vmatmul.mubr.f32.gmra.mxu0 %v1280
      %v1443 = vpop.f32.mrf.mxu0
      %v1444 = vadd.f32 0.0, %v1443
      %v1445 = vpop.f32.mrf.mxu0
      %1446 = vmatprep.mubr.f32.mxu0 0.0
      %1447 = vmatmul.mubr.f32.gmra.mxu0 %v1283
      %v1448 = vpop.f32.mrf.mxu0
      %v1449 = vadd.f32 0.0, %v1448
      %v1450 = vpop.f32.mrf.mxu0
      %1451 = vmatprep.mubr.f32.mxu0 0.0
      %1452 = vmatmul.mubr.f32.gmra.mxu0 %v1286
      %v1453 = vpop.f32.mrf.mxu0
      %v1454 = vadd.f32 0.0, %v1453
      %v1455 = vpop.f32.mrf.mxu0
      %1456 = vmatprep.mubr.f32.mxu0 0.0
      %1457 = vmatmul.mubr.f32.gmra.mxu0 %v1289
      %v1458 = vpop.f32.mrf.mxu0
      %v1459 = vadd.f32 0.0, %v1458
      %v1460 = vpop.f32.mrf.mxu0
      %1461 = vmatprep.mubr.f32.mxu0 0.0
      %1462 = vmatmul.mubr.f32.gmra.mxu0 %v1292
      %v1463 = vpop.f32.mrf.mxu0
      %v1464 = vadd.f32 0.0, %v1463
      %v1465 = vpop.f32.mrf.mxu0
      %1466 = vmatprep.mubr.f32.mxu0 0.0
      %1467 = vmatmul.mubr.f32.gmra.mxu0 %v1295
      %v1468 = vpop.f32.mrf.mxu0
      %v1469 = vadd.f32 0.0, %v1468
      %v1470 = vpop.f32.mrf.mxu0
      %1471 = vmatprep.mubr.f32.mxu0 0.0
      %1472 = vmatmul.mubr.f32.gmra.mxu0 %v1298
      %v1473 = vpop.f32.mrf.mxu0
      %v1474 = vadd.f32 0.0, %v1473
      %v1475 = vpop.f32.mrf.mxu0
      %1476 = vmatprep.mubr.f32.mxu0 0.0
      %1477 = vmatmul.mubr.f32.gmra.mxu0 %v1301
      %v1478 = vpop.f32.mrf.mxu0
      %v1479 = vadd.f32 0.0, %v1478
      %v1480 = vpop.f32.mrf.mxu0
      %1481 = vmatprep.mubr.f32.mxu0 0.0
      %1482 = vmatmul.mubr.f32.gmra.mxu0 %v1304
      %v1483 = vpop.f32.mrf.mxu0
      %v1484 = vadd.f32 0.0, %v1483
      %v1485 = vpop.f32.mrf.mxu0
      %1486 = vmatprep.mubr.f32.mxu0 0.0
      %1487 = vmatmul.mubr.f32.gmra.mxu0 %v1307
      %v1488 = vpop.f32.mrf.mxu0
      %v1489 = vadd.f32 0.0, %v1488
      %v1490 = vpop.f32.mrf.mxu0
      %1491 = vmatprep.mubr.f32.mxu0 0.0
      %1492 = vmatmul.mubr.f32.gmra.mxu0 %v1310
      %v1493 = vpop.f32.mrf.mxu0
      %v1494 = vadd.f32 0.0, %v1493
      %v1495 = vpop.f32.mrf.mxu0
      %1496 = vmatprep.mubr.f32.mxu0 0.0
      %1497 = vmatmul.mubr.f32.gmra.mxu0 %v1313
      %v1498 = vpop.f32.mrf.mxu0
      %v1499 = vadd.f32 0.0, %v1498
      %v1500 = vpop.f32.mrf.mxu0
      %1501 = vmatprep.mubr.f32.mxu0 0.0
      %1502 = vmatmul.mubr.f32.gmra.mxu0 %v1316
      %v1503 = vpop.f32.mrf.mxu0
      %v1504 = vadd.f32 0.0, %v1503
      %v1505 = vpop.f32.mrf.mxu0
      %1506 = vmatprep.mubr.f32.mxu0 0.0
      %1507 = vmatmul.mubr.f32.gmra.mxu0 %v1319
      %v1508 = vpop.f32.mrf.mxu0
      %v1509 = vadd.f32 0.0, %v1508
      %v1510 = vpop.f32.mrf.mxu0
      %1511 = vmatprep.mubr.f32.mxu0 0.0
      %1512 = vmatmul.mubr.f32.gmra.mxu0 %v1322
      %v1513 = vpop.f32.mrf.mxu0
      %v1514 = vadd.f32 0.0, %v1513
      %v1515 = vpop.f32.mrf.mxu0
      %1516 = vmatprep.mubr.f32.mxu0 0.0
      %1517 = vmatmul.mubr.f32.gmra.mxu0 %v1325
      %v1518 = vpop.f32.mrf.mxu0
      %v1519 = vadd.f32 0.0, %v1518
      %v1520 = vpop.f32.mrf.mxu0
      %1521 = vmatprep.mubr.f32.mxu0 0.0
      %1522 = vmatmul.mubr.f32.gmra.mxu0 %v1328
      %v1523 = vpop.f32.mrf.mxu0
      %v1524 = vadd.f32 0.0, %v1523
      %v1525 = vpop.f32.mrf.mxu0
      %1526 = vmatprep.mubr.f32.mxu0 0.0
      %1527 = vmatmul.mubr.f32.gmra.mxu0 %v1331
      %v1528 = vpop.f32.mrf.mxu0
      %v1529 = vadd.f32 0.0, %v1528
      %v1530 = vpop.f32.mrf.mxu0
      %1531 = vmatprep.mubr.f32.mxu0 0.0
      %1532 = vmatmul.mubr.f32.gmra.mxu0 %v1334
      %v1533 = vpop.f32.mrf.mxu0
      %v1534 = vadd.f32 0.0, %v1533
      %v1535 = vpop.f32.mrf.mxu0
      %1536 = vmatprep.mubr.f32.mxu0 0.0
      %1537 = vmatmul.mubr.f32.gmra.mxu0 %v1337
      %v1538 = vpop.f32.mrf.mxu0
      %v1539 = vadd.f32 0.0, %v1538
      %v1540 = vpop.f32.mrf.mxu0
      %1541 = vmatprep.mubr.f32.mxu0 0.0
      %1542 = vmatmul.mubr.f32.gmra.mxu0 %v1340
      %v1543 = vpop.f32.mrf.mxu0
      %v1544 = vadd.f32 0.0, %v1543
      %v1545 = vpop.f32.mrf.mxu0
      %1546 = vmatprep.mubr.f32.mxu0 0.0
      %1547 = vmatmul.mubr.f32.gmra.mxu0 %v1343
      %v1548 = vpop.f32.mrf.mxu0
      %v1549 = vadd.f32 0.0, %v1548
      %v1550 = vpop.f32.mrf.mxu0
      %1551 = vmatprep.mubr.f32.mxu0 0.0
      %1552 = vmatmul.mubr.f32.gmra.mxu0 %v1346
      %v1553 = vpop.f32.mrf.mxu0
      %v1554 = vadd.f32 0.0, %v1553
      %v1555 = vpop.f32.mrf.mxu0
      %1556 = vmatprep.mubr.f32.mxu0 0.0
      %1557 = vmatmul.mubr.f32.gmra.mxu0 %v1349
      %v1558 = vpop.f32.mrf.mxu0
      %v1559 = vadd.f32 0.0, %v1558
      %v1560 = vpop.f32.mrf.mxu0
      %1561 = vmatprep.mubr.f32.mxu0 0.0
      %1562 = vmatmul.mubr.f32.gmra.mxu0 %v1352
      %v1563 = vpop.f32.mrf.mxu0
      %v1564 = vadd.f32 0.0, %v1563
      %v1565 = vpop.f32.mrf.mxu0
      %1566 = vmatprep.mubr.f32.mxu0 0.0
      %1567 = vmatmul.mubr.f32.gmra.mxu0 %v1355
      %v1568 = vpop.f32.mrf.mxu0
      %v1569 = vadd.f32 0.0, %v1568
      %v1570 = vpop.f32.mrf.mxu0
      %1571 = vmatprep.mubr.f32.mxu0 0.0
      %1572 = vmatmul.mubr.f32.gmra.mxu0 %v1358
      %v1573 = vpop.f32.mrf.mxu0
      %v1574 = vadd.f32 0.0, %v1573
      %v1575 = vpop.f32.mrf.mxu0
      %1576 = vmatprep.mubr.f32.mxu0 0.0
      %1577 = vmatmul.mubr.f32.gmra.mxu0 %v1361
      %v1578 = vpop.f32.mrf.mxu0
      %v1579 = vadd.f32 0.0, %v1578
      %v1580 = vpop.f32.mrf.mxu0
      %1581 = vmatprep.mubr.f32.mxu0 0.0
      %1582 = vmatmul.mubr.f32.gmra.mxu0 %v1364
      %v1583 = vpop.f32.mrf.mxu0
      %v1584 = vadd.f32 0.0, %v1583
      %v1585 = vpop.f32.mrf.mxu0
      %1586 = vmatprep.mubr.f32.mxu0 0.0
      %1587 = vmatmul.mubr.f32.gmra.mxu0 %v1367
      %v1588 = vpop.f32.mrf.mxu0
      %v1589 = vadd.f32 0.0, %v1588
      %v1590 = vpop.f32.mrf.mxu0
      %1591 = vmatprep.mubr.f32.mxu0 0.0
      %1592 = vmatmul.mubr.f32.gmra.mxu0 %v1370
      %v1593 = vpop.f32.mrf.mxu0
      %v1594 = vadd.f32 0.0, %v1593
      %v1595 = vpop.f32.mrf.mxu0
      %1596 = vdwg.mxu0
      %v1597 = vadd.f32 %v1209, %v1439
      %v1598 = vadd.f32 %v1210, %v1444
      %v1599 = vadd.f32 %v1211, %v1449
      %v1600 = vadd.f32 %v1212, %v1454
      %v1601 = vadd.f32 %v1213, %v1459
      %v1602 = vadd.f32 %v1214, %v1464
      %v1603 = vadd.f32 %v1215, %v1469
      %v1604 = vadd.f32 %v1216, %v1474
      %v1605 = vadd.f32 %v1217, %v1479
      %v1606 = vadd.f32 %v1218, %v1484
      %v1607 = vadd.f32 %v1219, %v1489
      %v1608 = vadd.f32 %v1220, %v1494
      %v1609 = vadd.f32 %v1221, %v1499
      %v1610 = vadd.f32 %v1222, %v1504
      %v1611 = vadd.f32 %v1223, %v1509
      %v1612 = vadd.f32 %v1224, %v1514
      %v1613 = vadd.f32 %v1225, %v1519
      %v1614 = vadd.f32 %v1226, %v1524
      %v1615 = vadd.f32 %v1227, %v1529
      %v1616 = vadd.f32 %v1228, %v1534
      %v1617 = vadd.f32 %v1229, %v1539
      %v1618 = vadd.f32 %v1230, %v1544
      %v1619 = vadd.f32 %v1231, %v1549
      %v1620 = vadd.f32 %v1232, %v1554
      %v1621 = vadd.f32 %v1233, %v1559
      %v1622 = vadd.f32 %v1234, %v1564
      %v1623 = vadd.f32 %v1235, %v1569
      %v1624 = vadd.f32 %v1236, %v1574
      %v1625 = vadd.f32 %v1237, %v1579
      %v1626 = vadd.f32 %v1238, %v1584
      %v1627 = vadd.f32 %v1239, %v1589
      %v1628 = vadd.f32 %v1240, %v1594
      %v1629 = vld [vmem:[%s1241 + $0x1] sm:$0xff]
      %v1630 = vld [vmem:[%s1241 + $0x9] sm:$0xff]
      %v1631 = vld [vmem:[%s1241 + $0x19] sm:$0xff]
      %v1632 = vld [vmem:[%s1241 + $0x21] sm:$0xff]
      %v1633 = vld [vmem:[%s1241 + $0x31] sm:$0xff]
      %v1634 = vld [vmem:[%s1241 + $0x39] sm:$0xff]
      %v1635 = vld [vmem:[%s1241 + $0x49] sm:$0xff]
      %v1636 = vld [vmem:[%s1241 + $0x51] sm:$0xff]
      %v1637 = vld [vmem:[%s1241 + $0x61] sm:$0xff]
      %v1638 = vld [vmem:[%s1241 + $0x69] sm:$0xff]
      %v1639 = vld [vmem:[%s1241 + $0x79] sm:$0xff]
      %v1640 = vld [vmem:[%s1241 + $0x81] sm:$0xff]
      %v1641 = vld [vmem:[%s1241 + $0x91] sm:$0xff]
      %v1642 = vld [vmem:[%s1241 + $0x99] sm:$0xff]
      %v1643 = vld [vmem:[%s1241 + $0xa9] sm:$0xff]
      %v1644 = vld [vmem:[%s1241 + $0xb1] sm:$0xff]
      %v1645 = vld [vmem:[%s1241 + $0xc1] sm:$0xff]
      %v1646 = vld [vmem:[%s1241 + $0xc9] sm:$0xff]
      %v1647 = vld [vmem:[%s1241 + $0xd9] sm:$0xff]
      %v1648 = vld [vmem:[%s1241 + $0xe1] sm:$0xff]
      %v1649 = vld [vmem:[%s1241 + $0xf1] sm:$0xff]
      %v1650 = vld [vmem:[%s1241 + $0xf9] sm:$0xff]
      %v1651 = vld [vmem:[%s1241 + $0x109] sm:$0xff]
      %v1652 = vld [vmem:[%s1241 + $0x111] sm:$0xff]
      %v1653 = vld [vmem:[%s1241 + $0x121] sm:$0xff]
      %v1654 = vld [vmem:[%s1241 + $0x129] sm:$0xff]
      %v1655 = vld [vmem:[%s1241 + $0x139] sm:$0xff]
      %v1656 = vld [vmem:[%s1241 + $0x141] sm:$0xff]
      %v1657 = vld [vmem:[%s1241 + $0x151] sm:$0xff]
      %v1658 = vld [vmem:[%s1241 + $0x159] sm:$0xff]
      %v1659 = vld [vmem:[%s1241 + $0x169] sm:$0xff]
      %v1660 = vld [vmem:[%s1241 + $0x171] sm:$0xff]
      %s1661 = scalar_lea.vmem %s1, 32
      %v1662 = vld [vmem:[%s1661] sm:$0xff]
      %v1664 = vsel %vm211, %v1629, 0
      %v1667 = vsel %vm211, %v1630, 0
      %v1670 = vsel %vm211, %v1631, 0
      %v1673 = vsel %vm211, %v1632, 0
      %v1676 = vsel %vm211, %v1633, 0
      %v1679 = vsel %vm211, %v1634, 0
      %v1682 = vsel %vm211, %v1635, 0
      %v1685 = vsel %vm211, %v1636, 0
      %v1688 = vsel %vm211, %v1637, 0
      %v1691 = vsel %vm211, %v1638, 0
      %v1694 = vsel %vm211, %v1639, 0
      %v1697 = vsel %vm211, %v1640, 0
      %v1700 = vsel %vm211, %v1641, 0
      %v1703 = vsel %vm211, %v1642, 0
      %v1706 = vsel %vm211, %v1643, 0
      %v1709 = vsel %vm211, %v1644, 0
      %v1712 = vsel %vm211, %v1645, 0
      %v1715 = vsel %vm211, %v1646, 0
      %v1718 = vsel %vm211, %v1647, 0
      %v1721 = vsel %vm211, %v1648, 0
      %v1724 = vsel %vm211, %v1649, 0
      %v1727 = vsel %vm211, %v1650, 0
      %v1730 = vsel %vm211, %v1651, 0
      %v1733 = vsel %vm211, %v1652, 0
      %v1736 = vsel %vm211, %v1653, 0
      %v1739 = vsel %vm211, %v1654, 0
      %v1742 = vsel %vm211, %v1655, 0
      %v1745 = vsel %vm211, %v1656, 0
      %v1748 = vsel %vm211, %v1657, 0
      %v1751 = vsel %vm211, %v1658, 0
      %v1754 = vsel %vm211, %v1659, 0
      %v1757 = vsel %vm211, %v1660, 0
      %1759 = vmatprep.subr.mxu0 0.0
      %1760 = vmatpush1.msra.mxu0 0.0
      %1761 = vmatprep.subr.mxu0 0.0
      %1762 = vmatpush1.msra.mxu0 0.0
      %1763 = vmatprep.subr.mxu0 0.0
      %1764 = vmatpush1.msra.mxu0 0.0
      %1765 = vmatprep.subr.mxu0 0.0
      %1766 = vmatpush1.msra.mxu0 0.0
      %1767 = vmatprep.subr.mxu0 0.0
      %1768 = vmatpush1.msra.mxu0 0.0
      %1769 = vmatprep.subr.mxu0 0.0
      %1770 = vmatpush1.msra.mxu0 0.0
      %1771 = vmatprep.subr.mxu0 0.0
      %1772 = vmatpush1.msra.mxu0 0.0
      %1773 = vmatprep.subr.mxu0 0.0
      %1774 = vmatpush1.msra.mxu0 0.0
      %1775 = vmatprep.subr.mxu0 0.0
      %1776 = vmatpush1.msra.mxu0 0.0
      %1777 = vmatprep.subr.mxu0 0.0
      %1778 = vmatpush1.msra.mxu0 0.0
      %1779 = vmatprep.subr.mxu0 0.0
      %1780 = vmatpush1.msra.mxu0 0.0
      %1781 = vmatprep.subr.mxu0 0.0
      %1782 = vmatpush1.msra.mxu0 0.0
      %1783 = vmatprep.subr.mxu0 0.0
      %1784 = vmatpush1.msra.mxu0 0.0
      %1785 = vmatprep.subr.mxu0 0.0
      %1786 = vmatpush1.msra.mxu0 0.0
      %1787 = vmatprep.subr.mxu0 0.0
      %1788 = vmatpush1.msra.mxu0 0.0
      %1789 = vmatprep.subr.mxu0 0.0
      %1790 = vmatpush1.msra.mxu0 %v1662
      %1791 = vmatprep.subr.mxu0 0.0
      %1792 = vmatpush2.msra.mxu0 0.0
      %1793 = vmatprep.subr.mxu0 0.0
      %1794 = vmatpush2.msra.mxu0 0.0
      %1795 = vmatprep.subr.mxu0 0.0
      %1796 = vmatpush2.msra.mxu0 0.0
      %1797 = vmatprep.subr.mxu0 0.0
      %1798 = vmatpush2.msra.mxu0 0.0
      %1799 = vmatprep.subr.mxu0 0.0
      %1800 = vmatpush2.msra.mxu0 0.0
      %1801 = vmatprep.subr.mxu0 0.0
      %1802 = vmatpush2.msra.mxu0 0.0
      %1803 = vmatprep.subr.mxu0 0.0
      %1804 = vmatpush2.msra.mxu0 0.0
      %1805 = vmatprep.subr.mxu0 0.0
      %1806 = vmatpush2.msra.mxu0 0.0
      %1807 = vmatprep.subr.mxu0 0.0
      %1808 = vmatpush2.msra.mxu0 0.0
      %1809 = vmatprep.subr.mxu0 0.0
      %1810 = vmatpush2.msra.mxu0 0.0
      %1811 = vmatprep.subr.mxu0 0.0
      %1812 = vmatpush2.msra.mxu0 0.0
      %1813 = vmatprep.subr.mxu0 0.0
      %1814 = vmatpush2.msra.mxu0 0.0
      %1815 = vmatprep.subr.mxu0 0.0
      %1816 = vmatpush2.msra.mxu0 0.0
      %1817 = vmatprep.subr.mxu0 0.0
      %1818 = vmatpush2.msra.mxu0 0.0
      %1819 = vmatprep.subr.mxu0 0.0
      %1820 = vmatpush2.msra.mxu0 0.0
      %1821 = vmatprep.subr.mxu0 0.0
      %1822 = vmatpush2.msra.mxu0 0.0
      %1823 = vmatprep.mubr.f32.mxu0 0.0
      %1824 = vmatmul.mubr.f32.gmra.mxu0 %v1664
      %v1825 = vpop.f32.mrf.mxu0
      %v1826 = vadd.f32 0.0, %v1825
      %v1827 = vpop.f32.mrf.mxu0
      %1828 = vmatprep.mubr.f32.mxu0 0.0
      %1829 = vmatmul.mubr.f32.gmra.mxu0 %v1667
      %v1830 = vpop.f32.mrf.mxu0
      %v1831 = vadd.f32 0.0, %v1830
      %v1832 = vpop.f32.mrf.mxu0
      %1833 = vmatprep.mubr.f32.mxu0 0.0
      %1834 = vmatmul.mubr.f32.gmra.mxu0 %v1670
      %v1835 = vpop.f32.mrf.mxu0
      %v1836 = vadd.f32 0.0, %v1835
      %v1837 = vpop.f32.mrf.mxu0
      %1838 = vmatprep.mubr.f32.mxu0 0.0
      %1839 = vmatmul.mubr.f32.gmra.mxu0 %v1673
      %v1840 = vpop.f32.mrf.mxu0
      %v1841 = vadd.f32 0.0, %v1840
      %v1842 = vpop.f32.mrf.mxu0
      %1843 = vmatprep.mubr.f32.mxu0 0.0
      %1844 = vmatmul.mubr.f32.gmra.mxu0 %v1676
      %v1845 = vpop.f32.mrf.mxu0
      %v1846 = vadd.f32 0.0, %v1845
      %v1847 = vpop.f32.mrf.mxu0
      %1848 = vmatprep.mubr.f32.mxu0 0.0
      %1849 = vmatmul.mubr.f32.gmra.mxu0 %v1679
      %v1850 = vpop.f32.mrf.mxu0
      %v1851 = vadd.f32 0.0, %v1850
      %v1852 = vpop.f32.mrf.mxu0
      %1853 = vmatprep.mubr.f32.mxu0 0.0
      %1854 = vmatmul.mubr.f32.gmra.mxu0 %v1682
      %v1855 = vpop.f32.mrf.mxu0
      %v1856 = vadd.f32 0.0, %v1855
      %v1857 = vpop.f32.mrf.mxu0
      %1858 = vmatprep.mubr.f32.mxu0 0.0
      %1859 = vmatmul.mubr.f32.gmra.mxu0 %v1685
      %v1860 = vpop.f32.mrf.mxu0
      %v1861 = vadd.f32 0.0, %v1860
      %v1862 = vpop.f32.mrf.mxu0
      %1863 = vmatprep.mubr.f32.mxu0 0.0
      %1864 = vmatmul.mubr.f32.gmra.mxu0 %v1688
      %v1865 = vpop.f32.mrf.mxu0
      %v1866 = vadd.f32 0.0, %v1865
      %v1867 = vpop.f32.mrf.mxu0
      %1868 = vmatprep.mubr.f32.mxu0 0.0
      %1869 = vmatmul.mubr.f32.gmra.mxu0 %v1691
      %v1870 = vpop.f32.mrf.mxu0
      %v1871 = vadd.f32 0.0, %v1870
      %v1872 = vpop.f32.mrf.mxu0
      %1873 = vmatprep.mubr.f32.mxu0 0.0
      %1874 = vmatmul.mubr.f32.gmra.mxu0 %v1694
      %v1875 = vpop.f32.mrf.mxu0
      %v1876 = vadd.f32 0.0, %v1875
      %v1877 = vpop.f32.mrf.mxu0
      %1878 = vmatprep.mubr.f32.mxu0 0.0
      %1879 = vmatmul.mubr.f32.gmra.mxu0 %v1697
      %v1880 = vpop.f32.mrf.mxu0
      %v1881 = vadd.f32 0.0, %v1880
      %v1882 = vpop.f32.mrf.mxu0
      %1883 = vmatprep.mubr.f32.mxu0 0.0
      %1884 = vmatmul.mubr.f32.gmra.mxu0 %v1700
      %v1885 = vpop.f32.mrf.mxu0
      %v1886 = vadd.f32 0.0, %v1885
      %v1887 = vpop.f32.mrf.mxu0
      %1888 = vmatprep.mubr.f32.mxu0 0.0
      %1889 = vmatmul.mubr.f32.gmra.mxu0 %v1703
      %v1890 = vpop.f32.mrf.mxu0
      %v1891 = vadd.f32 0.0, %v1890
      %v1892 = vpop.f32.mrf.mxu0
      %1893 = vmatprep.mubr.f32.mxu0 0.0
      %1894 = vmatmul.mubr.f32.gmra.mxu0 %v1706
      %v1895 = vpop.f32.mrf.mxu0
      %v1896 = vadd.f32 0.0, %v1895
      %v1897 = vpop.f32.mrf.mxu0
      %1898 = vmatprep.mubr.f32.mxu0 0.0
      %1899 = vmatmul.mubr.f32.gmra.mxu0 %v1709
      %v1900 = vpop.f32.mrf.mxu0
      %v1901 = vadd.f32 0.0, %v1900
      %v1902 = vpop.f32.mrf.mxu0
      %1903 = vmatprep.mubr.f32.mxu0 0.0
      %1904 = vmatmul.mubr.f32.gmra.mxu0 %v1712
      %v1905 = vpop.f32.mrf.mxu0
      %v1906 = vadd.f32 0.0, %v1905
      %v1907 = vpop.f32.mrf.mxu0
      %1908 = vmatprep.mubr.f32.mxu0 0.0
      %1909 = vmatmul.mubr.f32.gmra.mxu0 %v1715
      %v1910 = vpop.f32.mrf.mxu0
      %v1911 = vadd.f32 0.0, %v1910
      %v1912 = vpop.f32.mrf.mxu0
      %1913 = vmatprep.mubr.f32.mxu0 0.0
      %1914 = vmatmul.mubr.f32.gmra.mxu0 %v1718
      %v1915 = vpop.f32.mrf.mxu0
      %v1916 = vadd.f32 0.0, %v1915
      %v1917 = vpop.f32.mrf.mxu0
      %1918 = vmatprep.mubr.f32.mxu0 0.0
      %1919 = vmatmul.mubr.f32.gmra.mxu0 %v1721
      %v1920 = vpop.f32.mrf.mxu0
      %v1921 = vadd.f32 0.0, %v1920
      %v1922 = vpop.f32.mrf.mxu0
      %1923 = vmatprep.mubr.f32.mxu0 0.0
      %1924 = vmatmul.mubr.f32.gmra.mxu0 %v1724
      %v1925 = vpop.f32.mrf.mxu0
      %v1926 = vadd.f32 0.0, %v1925
      %v1927 = vpop.f32.mrf.mxu0
      %1928 = vmatprep.mubr.f32.mxu0 0.0
      %1929 = vmatmul.mubr.f32.gmra.mxu0 %v1727
      %v1930 = vpop.f32.mrf.mxu0
      %v1931 = vadd.f32 0.0, %v1930
      %v1932 = vpop.f32.mrf.mxu0
      %1933 = vmatprep.mubr.f32.mxu0 0.0
      %1934 = vmatmul.mubr.f32.gmra.mxu0 %v1730
      %v1935 = vpop.f32.mrf.mxu0
      %v1936 = vadd.f32 0.0, %v1935
      %v1937 = vpop.f32.mrf.mxu0
      %1938 = vmatprep.mubr.f32.mxu0 0.0
      %1939 = vmatmul.mubr.f32.gmra.mxu0 %v1733
      %v1940 = vpop.f32.mrf.mxu0
      %v1941 = vadd.f32 0.0, %v1940
      %v1942 = vpop.f32.mrf.mxu0
      %1943 = vmatprep.mubr.f32.mxu0 0.0
      %1944 = vmatmul.mubr.f32.gmra.mxu0 %v1736
      %v1945 = vpop.f32.mrf.mxu0
      %v1946 = vadd.f32 0.0, %v1945
      %v1947 = vpop.f32.mrf.mxu0
      %1948 = vmatprep.mubr.f32.mxu0 0.0
      %1949 = vmatmul.mubr.f32.gmra.mxu0 %v1739
      %v1950 = vpop.f32.mrf.mxu0
      %v1951 = vadd.f32 0.0, %v1950
      %v1952 = vpop.f32.mrf.mxu0
      %1953 = vmatprep.mubr.f32.mxu0 0.0
      %1954 = vmatmul.mubr.f32.gmra.mxu0 %v1742
      %v1955 = vpop.f32.mrf.mxu0
      %v1956 = vadd.f32 0.0, %v1955
      %v1957 = vpop.f32.mrf.mxu0
      %1958 = vmatprep.mubr.f32.mxu0 0.0
      %1959 = vmatmul.mubr.f32.gmra.mxu0 %v1745
      %v1960 = vpop.f32.mrf.mxu0
      %v1961 = vadd.f32 0.0, %v1960
      %v1962 = vpop.f32.mrf.mxu0
      %1963 = vmatprep.mubr.f32.mxu0 0.0
      %1964 = vmatmul.mubr.f32.gmra.mxu0 %v1748
      %v1965 = vpop.f32.mrf.mxu0
      %v1966 = vadd.f32 0.0, %v1965
      %v1967 = vpop.f32.mrf.mxu0
      %1968 = vmatprep.mubr.f32.mxu0 0.0
      %1969 = vmatmul.mubr.f32.gmra.mxu0 %v1751
      %v1970 = vpop.f32.mrf.mxu0
      %v1971 = vadd.f32 0.0, %v1970
      %v1972 = vpop.f32.mrf.mxu0
      %1973 = vmatprep.mubr.f32.mxu0 0.0
      %1974 = vmatmul.mubr.f32.gmra.mxu0 %v1754
      %v1975 = vpop.f32.mrf.mxu0
      %v1976 = vadd.f32 0.0, %v1975
      %v1977 = vpop.f32.mrf.mxu0
      %1978 = vmatprep.mubr.f32.mxu0 0.0
      %1979 = vmatmul.mubr.f32.gmra.mxu0 %v1757
      %v1980 = vpop.f32.mrf.mxu0
      %v1981 = vadd.f32 0.0, %v1980
      %v1982 = vpop.f32.mrf.mxu0
      %1983 = vdwg.mxu0
      %v1984 = vadd.f32 %v1597, %v1826
      %v1985 = vadd.f32 %v1598, %v1831
      %v1986 = vadd.f32 %v1599, %v1836
      %v1987 = vadd.f32 %v1600, %v1841
      %v1988 = vadd.f32 %v1601, %v1846
      %v1989 = vadd.f32 %v1602, %v1851
      %v1990 = vadd.f32 %v1603, %v1856
      %v1991 = vadd.f32 %v1604, %v1861
      %v1992 = vadd.f32 %v1605, %v1866
      %v1993 = vadd.f32 %v1606, %v1871
      %v1994 = vadd.f32 %v1607, %v1876
      %v1995 = vadd.f32 %v1608, %v1881
      %v1996 = vadd.f32 %v1609, %v1886
      %v1997 = vadd.f32 %v1610, %v1891
      %v1998 = vadd.f32 %v1611, %v1896
      %v1999 = vadd.f32 %v1612, %v1901
      %v2000 = vadd.f32 %v1613, %v1906
      %v2001 = vadd.f32 %v1614, %v1911
      %v2002 = vadd.f32 %v1615, %v1916
      %v2003 = vadd.f32 %v1616, %v1921
      %v2004 = vadd.f32 %v1617, %v1926
      %v2005 = vadd.f32 %v1618, %v1931
      %v2006 = vadd.f32 %v1619, %v1936
      %v2007 = vadd.f32 %v1620, %v1941
      %v2008 = vadd.f32 %v1621, %v1946
      %v2009 = vadd.f32 %v1622, %v1951
      %v2010 = vadd.f32 %v1623, %v1956
      %v2011 = vadd.f32 %v1624, %v1961
      %v2012 = vadd.f32 %v1625, %v1966
      %v2013 = vadd.f32 %v1626, %v1971
      %v2014 = vadd.f32 %v1627, %v1976
      %v2015 = vadd.f32 %v1628, %v1981
      %v2016 = vld [vmem:[%s1241 + $0x2] sm:$0xff]
      %v2017 = vld [vmem:[%s1241 + $0xa] sm:$0xff]
      %v2018 = vld [vmem:[%s1241 + $0x1a] sm:$0xff]
      %v2019 = vld [vmem:[%s1241 + $0x22] sm:$0xff]
      %v2020 = vld [vmem:[%s1241 + $0x32] sm:$0xff]
      %v2021 = vld [vmem:[%s1241 + $0x3a] sm:$0xff]
      %v2022 = vld [vmem:[%s1241 + $0x4a] sm:$0xff]
      %v2023 = vld [vmem:[%s1241 + $0x52] sm:$0xff]
      %v2024 = vld [vmem:[%s1241 + $0x62] sm:$0xff]
      %v2025 = vld [vmem:[%s1241 + $0x6a] sm:$0xff]
      %v2026 = vld [vmem:[%s1241 + $0x7a] sm:$0xff]
      %v2027 = vld [vmem:[%s1241 + $0x82] sm:$0xff]
      %v2028 = vld [vmem:[%s1241 + $0x92] sm:$0xff]
      %v2029 = vld [vmem:[%s1241 + $0x9a] sm:$0xff]
      %v2030 = vld [vmem:[%s1241 + $0xaa] sm:$0xff]
      %v2031 = vld [vmem:[%s1241 + $0xb2] sm:$0xff]
      %v2032 = vld [vmem:[%s1241 + $0xc2] sm:$0xff]
      %v2033 = vld [vmem:[%s1241 + $0xca] sm:$0xff]
      %v2034 = vld [vmem:[%s1241 + $0xda] sm:$0xff]
      %v2035 = vld [vmem:[%s1241 + $0xe2] sm:$0xff]
      %v2036 = vld [vmem:[%s1241 + $0xf2] sm:$0xff]
      %v2037 = vld [vmem:[%s1241 + $0xfa] sm:$0xff]
      %v2038 = vld [vmem:[%s1241 + $0x10a] sm:$0xff]
      %v2039 = vld [vmem:[%s1241 + $0x112] sm:$0xff]
      %v2040 = vld [vmem:[%s1241 + $0x122] sm:$0xff]
      %v2041 = vld [vmem:[%s1241 + $0x12a] sm:$0xff]
      %v2042 = vld [vmem:[%s1241 + $0x13a] sm:$0xff]
      %v2043 = vld [vmem:[%s1241 + $0x142] sm:$0xff]
      %v2044 = vld [vmem:[%s1241 + $0x152] sm:$0xff]
      %v2045 = vld [vmem:[%s1241 + $0x15a] sm:$0xff]
      %v2046 = vld [vmem:[%s1241 + $0x16a] sm:$0xff]
      %v2047 = vld [vmem:[%s1241 + $0x172] sm:$0xff]
      %s2048 = scalar_lea.vmem %s1, 40
      %v2049 = vld [vmem:[%s2048] sm:$0xff]
      %v2051 = vsel %vm211, %v2016, 0
      %v2054 = vsel %vm211, %v2017, 0
      %v2057 = vsel %vm211, %v2018, 0
      %v2060 = vsel %vm211, %v2019, 0
      %v2063 = vsel %vm211, %v2020, 0
      %v2066 = vsel %vm211, %v2021, 0
      %v2069 = vsel %vm211, %v2022, 0
      %v2072 = vsel %vm211, %v2023, 0
      %v2075 = vsel %vm211, %v2024, 0
      %v2078 = vsel %vm211, %v2025, 0
      %v2081 = vsel %vm211, %v2026, 0
      %v2084 = vsel %vm211, %v2027, 0
      %v2087 = vsel %vm211, %v2028, 0
      %v2090 = vsel %vm211, %v2029, 0
      %v2093 = vsel %vm211, %v2030, 0
      %v2096 = vsel %vm211, %v2031, 0
      %v2099 = vsel %vm211, %v2032, 0
      %v2102 = vsel %vm211, %v2033, 0
      %v2105 = vsel %vm211, %v2034, 0
      %v2108 = vsel %vm211, %v2035, 0
      %v2111 = vsel %vm211, %v2036, 0
      %v2114 = vsel %vm211, %v2037, 0
      %v2117 = vsel %vm211, %v2038, 0
      %v2120 = vsel %vm211, %v2039, 0
      %v2123 = vsel %vm211, %v2040, 0
      %v2126 = vsel %vm211, %v2041, 0
      %v2129 = vsel %vm211, %v2042, 0
      %v2132 = vsel %vm211, %v2043, 0
      %v2135 = vsel %vm211, %v2044, 0
      %v2138 = vsel %vm211, %v2045, 0
      %v2141 = vsel %vm211, %v2046, 0
      %v2144 = vsel %vm211, %v2047, 0
      %2146 = vmatprep.subr.mxu0 0.0
      %2147 = vmatpush1.msra.mxu0 0.0
      %2148 = vmatprep.subr.mxu0 0.0
      %2149 = vmatpush1.msra.mxu0 0.0
      %2150 = vmatprep.subr.mxu0 0.0
      %2151 = vmatpush1.msra.mxu0 0.0
      %2152 = vmatprep.subr.mxu0 0.0
      %2153 = vmatpush1.msra.mxu0 0.0
      %2154 = vmatprep.subr.mxu0 0.0
      %2155 = vmatpush1.msra.mxu0 0.0
      %2156 = vmatprep.subr.mxu0 0.0
      %2157 = vmatpush1.msra.mxu0 0.0
      %2158 = vmatprep.subr.mxu0 0.0
      %2159 = vmatpush1.msra.mxu0 0.0
      %2160 = vmatprep.subr.mxu0 0.0
      %2161 = vmatpush1.msra.mxu0 0.0
      %2162 = vmatprep.subr.mxu0 0.0
      %2163 = vmatpush1.msra.mxu0 0.0
      %2164 = vmatprep.subr.mxu0 0.0
      %2165 = vmatpush1.msra.mxu0 0.0
      %2166 = vmatprep.subr.mxu0 0.0
      %2167 = vmatpush1.msra.mxu0 0.0
      %2168 = vmatprep.subr.mxu0 0.0
      %2169 = vmatpush1.msra.mxu0 0.0
      %2170 = vmatprep.subr.mxu0 0.0
      %2171 = vmatpush1.msra.mxu0 0.0
      %2172 = vmatprep.subr.mxu0 0.0
      %2173 = vmatpush1.msra.mxu0 0.0
      %2174 = vmatprep.subr.mxu0 0.0
      %2175 = vmatpush1.msra.mxu0 0.0
      %2176 = vmatprep.subr.mxu0 0.0
      %2177 = vmatpush1.msra.mxu0 %v2049
      %2178 = vmatprep.subr.mxu0 0.0
      %2179 = vmatpush2.msra.mxu0 0.0
      %2180 = vmatprep.subr.mxu0 0.0
      %2181 = vmatpush2.msra.mxu0 0.0
      %2182 = vmatprep.subr.mxu0 0.0
      %2183 = vmatpush2.msra.mxu0 0.0
      %2184 = vmatprep.subr.mxu0 0.0
      %2185 = vmatpush2.msra.mxu0 0.0
      %2186 = vmatprep.subr.mxu0 0.0
      %2187 = vmatpush2.msra.mxu0 0.0
      %2188 = vmatprep.subr.mxu0 0.0
      %2189 = vmatpush2.msra.mxu0 0.0
      %2190 = vmatprep.subr.mxu0 0.0
      %2191 = vmatpush2.msra.mxu0 0.0
      %2192 = vmatprep.subr.mxu0 0.0
      %2193 = vmatpush2.msra.mxu0 0.0
      %2194 = vmatprep.subr.mxu0 0.0
      %2195 = vmatpush2.msra.mxu0 0.0
      %2196 = vmatprep.subr.mxu0 0.0
      %2197 = vmatpush2.msra.mxu0 0.0
      %2198 = vmatprep.subr.mxu0 0.0
      %2199 = vmatpush2.msra.mxu0 0.0
      %2200 = vmatprep.subr.mxu0 0.0
      %2201 = vmatpush2.msra.mxu0 0.0
      %2202 = vmatprep.subr.mxu0 0.0
      %2203 = vmatpush2.msra.mxu0 0.0
      %2204 = vmatprep.subr.mxu0 0.0
      %2205 = vmatpush2.msra.mxu0 0.0
      %2206 = vmatprep.subr.mxu0 0.0
      %2207 = vmatpush2.msra.mxu0 0.0
      %2208 = vmatprep.subr.mxu0 0.0
      %2209 = vmatpush2.msra.mxu0 0.0
      %2210 = vmatprep.mubr.f32.mxu0 0.0
      %2211 = vmatmul.mubr.f32.gmra.mxu0 %v2051
      %v2212 = vpop.f32.mrf.mxu0
      %v2213 = vadd.f32 0.0, %v2212
      %v2214 = vpop.f32.mrf.mxu0
      %2215 = vmatprep.mubr.f32.mxu0 0.0
      %2216 = vmatmul.mubr.f32.gmra.mxu0 %v2054
      %v2217 = vpop.f32.mrf.mxu0
      %v2218 = vadd.f32 0.0, %v2217
      %v2219 = vpop.f32.mrf.mxu0
      %2220 = vmatprep.mubr.f32.mxu0 0.0
      %2221 = vmatmul.mubr.f32.gmra.mxu0 %v2057
      %v2222 = vpop.f32.mrf.mxu0
      %v2223 = vadd.f32 0.0, %v2222
      %v2224 = vpop.f32.mrf.mxu0
      %2225 = vmatprep.mubr.f32.mxu0 0.0
      %2226 = vmatmul.mubr.f32.gmra.mxu0 %v2060
      %v2227 = vpop.f32.mrf.mxu0
      %v2228 = vadd.f32 0.0, %v2227
      %v2229 = vpop.f32.mrf.mxu0
      %2230 = vmatprep.mubr.f32.mxu0 0.0
      %2231 = vmatmul.mubr.f32.gmra.mxu0 %v2063
      %v2232 = vpop.f32.mrf.mxu0
      %v2233 = vadd.f32 0.0, %v2232
      %v2234 = vpop.f32.mrf.mxu0
      %2235 = vmatprep.mubr.f32.mxu0 0.0
      %2236 = vmatmul.mubr.f32.gmra.mxu0 %v2066
      %v2237 = vpop.f32.mrf.mxu0
      %v2238 = vadd.f32 0.0, %v2237
      %v2239 = vpop.f32.mrf.mxu0
      %2240 = vmatprep.mubr.f32.mxu0 0.0
      %2241 = vmatmul.mubr.f32.gmra.mxu0 %v2069
      %v2242 = vpop.f32.mrf.mxu0
      %v2243 = vadd.f32 0.0, %v2242
      %v2244 = vpop.f32.mrf.mxu0
      %2245 = vmatprep.mubr.f32.mxu0 0.0
      %2246 = vmatmul.mubr.f32.gmra.mxu0 %v2072
      %v2247 = vpop.f32.mrf.mxu0
      %v2248 = vadd.f32 0.0, %v2247
      %v2249 = vpop.f32.mrf.mxu0
      %2250 = vmatprep.mubr.f32.mxu0 0.0
      %2251 = vmatmul.mubr.f32.gmra.mxu0 %v2075
      %v2252 = vpop.f32.mrf.mxu0
      %v2253 = vadd.f32 0.0, %v2252
      %v2254 = vpop.f32.mrf.mxu0
      %2255 = vmatprep.mubr.f32.mxu0 0.0
      %2256 = vmatmul.mubr.f32.gmra.mxu0 %v2078
      %v2257 = vpop.f32.mrf.mxu0
      %v2258 = vadd.f32 0.0, %v2257
      %v2259 = vpop.f32.mrf.mxu0
      %2260 = vmatprep.mubr.f32.mxu0 0.0
      %2261 = vmatmul.mubr.f32.gmra.mxu0 %v2081
      %v2262 = vpop.f32.mrf.mxu0
      %v2263 = vadd.f32 0.0, %v2262
      %v2264 = vpop.f32.mrf.mxu0
      %2265 = vmatprep.mubr.f32.mxu0 0.0
      %2266 = vmatmul.mubr.f32.gmra.mxu0 %v2084
      %v2267 = vpop.f32.mrf.mxu0
      %v2268 = vadd.f32 0.0, %v2267
      %v2269 = vpop.f32.mrf.mxu0
      %2270 = vmatprep.mubr.f32.mxu0 0.0
      %2271 = vmatmul.mubr.f32.gmra.mxu0 %v2087
      %v2272 = vpop.f32.mrf.mxu0
      %v2273 = vadd.f32 0.0, %v2272
      %v2274 = vpop.f32.mrf.mxu0
      %2275 = vmatprep.mubr.f32.mxu0 0.0
      %2276 = vmatmul.mubr.f32.gmra.mxu0 %v2090
      %v2277 = vpop.f32.mrf.mxu0
      %v2278 = vadd.f32 0.0, %v2277
      %v2279 = vpop.f32.mrf.mxu0
      %2280 = vmatprep.mubr.f32.mxu0 0.0
      %2281 = vmatmul.mubr.f32.gmra.mxu0 %v2093
      %v2282 = vpop.f32.mrf.mxu0
      %v2283 = vadd.f32 0.0, %v2282
      %v2284 = vpop.f32.mrf.mxu0
      %2285 = vmatprep.mubr.f32.mxu0 0.0
      %2286 = vmatmul.mubr.f32.gmra.mxu0 %v2096
      %v2287 = vpop.f32.mrf.mxu0
      %v2288 = vadd.f32 0.0, %v2287
      %v2289 = vpop.f32.mrf.mxu0
      %2290 = vmatprep.mubr.f32.mxu0 0.0
      %2291 = vmatmul.mubr.f32.gmra.mxu0 %v2099
      %v2292 = vpop.f32.mrf.mxu0
      %v2293 = vadd.f32 0.0, %v2292
      %v2294 = vpop.f32.mrf.mxu0
      %2295 = vmatprep.mubr.f32.mxu0 0.0
      %2296 = vmatmul.mubr.f32.gmra.mxu0 %v2102
      %v2297 = vpop.f32.mrf.mxu0
      %v2298 = vadd.f32 0.0, %v2297
      %v2299 = vpop.f32.mrf.mxu0
      %2300 = vmatprep.mubr.f32.mxu0 0.0
      %2301 = vmatmul.mubr.f32.gmra.mxu0 %v2105
      %v2302 = vpop.f32.mrf.mxu0
      %v2303 = vadd.f32 0.0, %v2302
      %v2304 = vpop.f32.mrf.mxu0
      %2305 = vmatprep.mubr.f32.mxu0 0.0
      %2306 = vmatmul.mubr.f32.gmra.mxu0 %v2108
      %v2307 = vpop.f32.mrf.mxu0
      %v2308 = vadd.f32 0.0, %v2307
      %v2309 = vpop.f32.mrf.mxu0
      %2310 = vmatprep.mubr.f32.mxu0 0.0
      %2311 = vmatmul.mubr.f32.gmra.mxu0 %v2111
      %v2312 = vpop.f32.mrf.mxu0
      %v2313 = vadd.f32 0.0, %v2312
      %v2314 = vpop.f32.mrf.mxu0
      %2315 = vmatprep.mubr.f32.mxu0 0.0
      %2316 = vmatmul.mubr.f32.gmra.mxu0 %v2114
      %v2317 = vpop.f32.mrf.mxu0
      %v2318 = vadd.f32 0.0, %v2317
      %v2319 = vpop.f32.mrf.mxu0
      %2320 = vmatprep.mubr.f32.mxu0 0.0
      %2321 = vmatmul.mubr.f32.gmra.mxu0 %v2117
      %v2322 = vpop.f32.mrf.mxu0
      %v2323 = vadd.f32 0.0, %v2322
      %v2324 = vpop.f32.mrf.mxu0
      %2325 = vmatprep.mubr.f32.mxu0 0.0
      %2326 = vmatmul.mubr.f32.gmra.mxu0 %v2120
      %v2327 = vpop.f32.mrf.mxu0
      %v2328 = vadd.f32 0.0, %v2327
      %v2329 = vpop.f32.mrf.mxu0
      %2330 = vmatprep.mubr.f32.mxu0 0.0
      %2331 = vmatmul.mubr.f32.gmra.mxu0 %v2123
      %v2332 = vpop.f32.mrf.mxu0
      %v2333 = vadd.f32 0.0, %v2332
      %v2334 = vpop.f32.mrf.mxu0
      %2335 = vmatprep.mubr.f32.mxu0 0.0
      %2336 = vmatmul.mubr.f32.gmra.mxu0 %v2126
      %v2337 = vpop.f32.mrf.mxu0
      %v2338 = vadd.f32 0.0, %v2337
      %v2339 = vpop.f32.mrf.mxu0
      %2340 = vmatprep.mubr.f32.mxu0 0.0
      %2341 = vmatmul.mubr.f32.gmra.mxu0 %v2129
      %v2342 = vpop.f32.mrf.mxu0
      %v2343 = vadd.f32 0.0, %v2342
      %v2344 = vpop.f32.mrf.mxu0
      %2345 = vmatprep.mubr.f32.mxu0 0.0
      %2346 = vmatmul.mubr.f32.gmra.mxu0 %v2132
      %v2347 = vpop.f32.mrf.mxu0
      %v2348 = vadd.f32 0.0, %v2347
      %v2349 = vpop.f32.mrf.mxu0
      %2350 = vmatprep.mubr.f32.mxu0 0.0
      %2351 = vmatmul.mubr.f32.gmra.mxu0 %v2135
      %v2352 = vpop.f32.mrf.mxu0
      %v2353 = vadd.f32 0.0, %v2352
      %v2354 = vpop.f32.mrf.mxu0
      %2355 = vmatprep.mubr.f32.mxu0 0.0
      %2356 = vmatmul.mubr.f32.gmra.mxu0 %v2138
      %v2357 = vpop.f32.mrf.mxu0
      %v2358 = vadd.f32 0.0, %v2357
      %v2359 = vpop.f32.mrf.mxu0
      %2360 = vmatprep.mubr.f32.mxu0 0.0
      %2361 = vmatmul.mubr.f32.gmra.mxu0 %v2141
      %v2362 = vpop.f32.mrf.mxu0
      %v2363 = vadd.f32 0.0, %v2362
      %v2364 = vpop.f32.mrf.mxu0
      %2365 = vmatprep.mubr.f32.mxu0 0.0
      %2366 = vmatmul.mubr.f32.gmra.mxu0 %v2144
      %v2367 = vpop.f32.mrf.mxu0
      %v2368 = vadd.f32 0.0, %v2367
      %v2369 = vpop.f32.mrf.mxu0
      %2370 = vdwg.mxu0
      %v2371 = vadd.f32 %v1984, %v2213
      %v2372 = vadd.f32 %v1985, %v2218
      %v2373 = vadd.f32 %v1986, %v2223
      %v2374 = vadd.f32 %v1987, %v2228
      %v2375 = vadd.f32 %v1988, %v2233
      %v2376 = vadd.f32 %v1989, %v2238
      %v2377 = vadd.f32 %v1990, %v2243
      %v2378 = vadd.f32 %v1991, %v2248
      %v2379 = vadd.f32 %v1992, %v2253
      %v2380 = vadd.f32 %v1993, %v2258
      %v2381 = vadd.f32 %v1994, %v2263
      %v2382 = vadd.f32 %v1995, %v2268
      %v2383 = vadd.f32 %v1996, %v2273
      %v2384 = vadd.f32 %v1997, %v2278
      %v2385 = vadd.f32 %v1998, %v2283
      %v2386 = vadd.f32 %v1999, %v2288
      %v2387 = vadd.f32 %v2000, %v2293
      %v2388 = vadd.f32 %v2001, %v2298
      %v2389 = vadd.f32 %v2002, %v2303
      %v2390 = vadd.f32 %v2003, %v2308
      %v2391 = vadd.f32 %v2004, %v2313
      %v2392 = vadd.f32 %v2005, %v2318
      %v2393 = vadd.f32 %v2006, %v2323
      %v2394 = vadd.f32 %v2007, %v2328
      %v2395 = vadd.f32 %v2008, %v2333
      %v2396 = vadd.f32 %v2009, %v2338
      %v2397 = vadd.f32 %v2010, %v2343
      %v2398 = vadd.f32 %v2011, %v2348
      %v2399 = vadd.f32 %v2012, %v2353
      %v2400 = vadd.f32 %v2013, %v2358
      %v2401 = vadd.f32 %v2014, %v2363
      %v2402 = vadd.f32 %v2015, %v2368
      %s2403 = scalar_lea.vmem %s138, 48
      %v2404 = vld [vmem:[%s2403] sm:$0xff]
      %v2405 = vld [vmem:[%s2403 + $0x8] sm:$0xff]
      %v2406 = vld [vmem:[%s2403 + $0x18] sm:$0xff]
      %v2407 = vld [vmem:[%s2403 + $0x20] sm:$0xff]
      %v2408 = vld [vmem:[%s2403 + $0x30] sm:$0xff]
      %v2409 = vld [vmem:[%s2403 + $0x38] sm:$0xff]
      %v2410 = vld [vmem:[%s2403 + $0x48] sm:$0xff]
      %v2411 = vld [vmem:[%s2403 + $0x50] sm:$0xff]
      %v2412 = vld [vmem:[%s2403 + $0x60] sm:$0xff]
      %v2413 = vld [vmem:[%s2403 + $0x68] sm:$0xff]
      %v2414 = vld [vmem:[%s2403 + $0x78] sm:$0xff]
      %v2415 = vld [vmem:[%s2403 + $0x80] sm:$0xff]
      %v2416 = vld [vmem:[%s2403 + $0x90] sm:$0xff]
      %v2417 = vld [vmem:[%s2403 + $0x98] sm:$0xff]
      %v2418 = vld [vmem:[%s2403 + $0xa8] sm:$0xff]
      %v2419 = vld [vmem:[%s2403 + $0xb0] sm:$0xff]
      %v2420 = vld [vmem:[%s2403 + $0xc0] sm:$0xff]
      %v2421 = vld [vmem:[%s2403 + $0xc8] sm:$0xff]
      %v2422 = vld [vmem:[%s2403 + $0xd8] sm:$0xff]
      %v2423 = vld [vmem:[%s2403 + $0xe0] sm:$0xff]
      %v2424 = vld [vmem:[%s2403 + $0xf0] sm:$0xff]
      %v2425 = vld [vmem:[%s2403 + $0xf8] sm:$0xff]
      %v2426 = vld [vmem:[%s2403 + $0x108] sm:$0xff]
      %v2427 = vld [vmem:[%s2403 + $0x110] sm:$0xff]
      %v2428 = vld [vmem:[%s2403 + $0x120] sm:$0xff]
      %v2429 = vld [vmem:[%s2403 + $0x128] sm:$0xff]
      %v2430 = vld [vmem:[%s2403 + $0x138] sm:$0xff]
      %v2431 = vld [vmem:[%s2403 + $0x140] sm:$0xff]
      %v2432 = vld [vmem:[%s2403 + $0x150] sm:$0xff]
      %v2433 = vld [vmem:[%s2403 + $0x158] sm:$0xff]
      %v2434 = vld [vmem:[%s2403 + $0x168] sm:$0xff]
      %v2435 = vld [vmem:[%s2403 + $0x170] sm:$0xff]
      %s2436 = scalar_lea.vmem %s1, 48
      %v2437 = vld [vmem:[%s2436] sm:$0xff]
      %v2439 = vsel %vm211, %v2404, 0
      %v2442 = vsel %vm211, %v2405, 0
      %v2445 = vsel %vm211, %v2406, 0
      %v2448 = vsel %vm211, %v2407, 0
      %v2451 = vsel %vm211, %v2408, 0
      %v2454 = vsel %vm211, %v2409, 0
      %v2457 = vsel %vm211, %v2410, 0
      %v2460 = vsel %vm211, %v2411, 0
      %v2463 = vsel %vm211, %v2412, 0
      %v2466 = vsel %vm211, %v2413, 0
      %v2469 = vsel %vm211, %v2414, 0
      %v2472 = vsel %vm211, %v2415, 0
      %v2475 = vsel %vm211, %v2416, 0
      %v2478 = vsel %vm211, %v2417, 0
      %v2481 = vsel %vm211, %v2418, 0
      %v2484 = vsel %vm211, %v2419, 0
      %v2487 = vsel %vm211, %v2420, 0
      %v2490 = vsel %vm211, %v2421, 0
      %v2493 = vsel %vm211, %v2422, 0
      %v2496 = vsel %vm211, %v2423, 0
      %v2499 = vsel %vm211, %v2424, 0
      %v2502 = vsel %vm211, %v2425, 0
      %v2505 = vsel %vm211, %v2426, 0
      %v2508 = vsel %vm211, %v2427, 0
      %v2511 = vsel %vm211, %v2428, 0
      %v2514 = vsel %vm211, %v2429, 0
      %v2517 = vsel %vm211, %v2430, 0
      %v2520 = vsel %vm211, %v2431, 0
      %v2523 = vsel %vm211, %v2432, 0
      %v2526 = vsel %vm211, %v2433, 0
      %v2529 = vsel %vm211, %v2434, 0
      %v2532 = vsel %vm211, %v2435, 0
      %2534 = vmatprep.subr.mxu0 0.0
      %2535 = vmatpush1.msra.mxu0 0.0
      %2536 = vmatprep.subr.mxu0 0.0
      %2537 = vmatpush1.msra.mxu0 0.0
      %2538 = vmatprep.subr.mxu0 0.0
      %2539 = vmatpush1.msra.mxu0 0.0
      %2540 = vmatprep.subr.mxu0 0.0
      %2541 = vmatpush1.msra.mxu0 0.0
      %2542 = vmatprep.subr.mxu0 0.0
      %2543 = vmatpush1.msra.mxu0 0.0
      %2544 = vmatprep.subr.mxu0 0.0
      %2545 = vmatpush1.msra.mxu0 0.0
      %2546 = vmatprep.subr.mxu0 0.0
      %2547 = vmatpush1.msra.mxu0 0.0
      %2548 = vmatprep.subr.mxu0 0.0
      %2549 = vmatpush1.msra.mxu0 0.0
      %2550 = vmatprep.subr.mxu0 0.0
      %2551 = vmatpush1.msra.mxu0 0.0
      %2552 = vmatprep.subr.mxu0 0.0
      %2553 = vmatpush1.msra.mxu0 0.0
      %2554 = vmatprep.subr.mxu0 0.0
      %2555 = vmatpush1.msra.mxu0 0.0
      %2556 = vmatprep.subr.mxu0 0.0
      %2557 = vmatpush1.msra.mxu0 0.0
      %2558 = vmatprep.subr.mxu0 0.0
      %2559 = vmatpush1.msra.mxu0 0.0
      %2560 = vmatprep.subr.mxu0 0.0
      %2561 = vmatpush1.msra.mxu0 0.0
      %2562 = vmatprep.subr.mxu0 0.0
      %2563 = vmatpush1.msra.mxu0 0.0
      %2564 = vmatprep.subr.mxu0 0.0
      %2565 = vmatpush1.msra.mxu0 %v2437
      %2566 = vmatprep.subr.mxu0 0.0
      %2567 = vmatpush2.msra.mxu0 0.0
      %2568 = vmatprep.subr.mxu0 0.0
      %2569 = vmatpush2.msra.mxu0 0.0
      %2570 = vmatprep.subr.mxu0 0.0
      %2571 = vmatpush2.msra.mxu0 0.0
      %2572 = vmatprep.subr.mxu0 0.0
      %2573 = vmatpush2.msra.mxu0 0.0
      %2574 = vmatprep.subr.mxu0 0.0
      %2575 = vmatpush2.msra.mxu0 0.0
      %2576 = vmatprep.subr.mxu0 0.0
      %2577 = vmatpush2.msra.mxu0 0.0
      %2578 = vmatprep.subr.mxu0 0.0
      %2579 = vmatpush2.msra.mxu0 0.0
      %2580 = vmatprep.subr.mxu0 0.0
      %2581 = vmatpush2.msra.mxu0 0.0
      %2582 = vmatprep.subr.mxu0 0.0
      %2583 = vmatpush2.msra.mxu0 0.0
      %2584 = vmatprep.subr.mxu0 0.0
      %2585 = vmatpush2.msra.mxu0 0.0
      %2586 = vmatprep.subr.mxu0 0.0
      %2587 = vmatpush2.msra.mxu0 0.0
      %2588 = vmatprep.subr.mxu0 0.0
      %2589 = vmatpush2.msra.mxu0 0.0
      %2590 = vmatprep.subr.mxu0 0.0
      %2591 = vmatpush2.msra.mxu0 0.0
      %2592 = vmatprep.subr.mxu0 0.0
      %2593 = vmatpush2.msra.mxu0 0.0
      %2594 = vmatprep.subr.mxu0 0.0
      %2595 = vmatpush2.msra.mxu0 0.0
      %2596 = vmatprep.subr.mxu0 0.0
      %2597 = vmatpush2.msra.mxu0 0.0
      %2598 = vmatprep.mubr.f32.mxu0 0.0
      %2599 = vmatmul.mubr.f32.gmra.mxu0 %v2439
      %v2600 = vpop.f32.mrf.mxu0
      %v2601 = vadd.f32 0.0, %v2600
      %v2602 = vpop.f32.mrf.mxu0
      %2603 = vmatprep.mubr.f32.mxu0 0.0
      %2604 = vmatmul.mubr.f32.gmra.mxu0 %v2442
      %v2605 = vpop.f32.mrf.mxu0
      %v2606 = vadd.f32 0.0, %v2605
      %v2607 = vpop.f32.mrf.mxu0
      %2608 = vmatprep.mubr.f32.mxu0 0.0
      %2609 = vmatmul.mubr.f32.gmra.mxu0 %v2445
      %v2610 = vpop.f32.mrf.mxu0
      %v2611 = vadd.f32 0.0, %v2610
      %v2612 = vpop.f32.mrf.mxu0
      %2613 = vmatprep.mubr.f32.mxu0 0.0
      %2614 = vmatmul.mubr.f32.gmra.mxu0 %v2448
      %v2615 = vpop.f32.mrf.mxu0
      %v2616 = vadd.f32 0.0, %v2615
      %v2617 = vpop.f32.mrf.mxu0
      %2618 = vmatprep.mubr.f32.mxu0 0.0
      %2619 = vmatmul.mubr.f32.gmra.mxu0 %v2451
      %v2620 = vpop.f32.mrf.mxu0
      %v2621 = vadd.f32 0.0, %v2620
      %v2622 = vpop.f32.mrf.mxu0
      %2623 = vmatprep.mubr.f32.mxu0 0.0
      %2624 = vmatmul.mubr.f32.gmra.mxu0 %v2454
      %v2625 = vpop.f32.mrf.mxu0
      %v2626 = vadd.f32 0.0, %v2625
      %v2627 = vpop.f32.mrf.mxu0
      %2628 = vmatprep.mubr.f32.mxu0 0.0
      %2629 = vmatmul.mubr.f32.gmra.mxu0 %v2457
      %v2630 = vpop.f32.mrf.mxu0
      %v2631 = vadd.f32 0.0, %v2630
      %v2632 = vpop.f32.mrf.mxu0
      %2633 = vmatprep.mubr.f32.mxu0 0.0
      %2634 = vmatmul.mubr.f32.gmra.mxu0 %v2460
      %v2635 = vpop.f32.mrf.mxu0
      %v2636 = vadd.f32 0.0, %v2635
      %v2637 = vpop.f32.mrf.mxu0
      %2638 = vmatprep.mubr.f32.mxu0 0.0
      %2639 = vmatmul.mubr.f32.gmra.mxu0 %v2463
      %v2640 = vpop.f32.mrf.mxu0
      %v2641 = vadd.f32 0.0, %v2640
      %v2642 = vpop.f32.mrf.mxu0
      %2643 = vmatprep.mubr.f32.mxu0 0.0
      %2644 = vmatmul.mubr.f32.gmra.mxu0 %v2466
      %v2645 = vpop.f32.mrf.mxu0
      %v2646 = vadd.f32 0.0, %v2645
      %v2647 = vpop.f32.mrf.mxu0
      %2648 = vmatprep.mubr.f32.mxu0 0.0
      %2649 = vmatmul.mubr.f32.gmra.mxu0 %v2469
      %v2650 = vpop.f32.mrf.mxu0
      %v2651 = vadd.f32 0.0, %v2650
      %v2652 = vpop.f32.mrf.mxu0
      %2653 = vmatprep.mubr.f32.mxu0 0.0
      %2654 = vmatmul.mubr.f32.gmra.mxu0 %v2472
      %v2655 = vpop.f32.mrf.mxu0
      %v2656 = vadd.f32 0.0, %v2655
      %v2657 = vpop.f32.mrf.mxu0
      %2658 = vmatprep.mubr.f32.mxu0 0.0
      %2659 = vmatmul.mubr.f32.gmra.mxu0 %v2475
      %v2660 = vpop.f32.mrf.mxu0
      %v2661 = vadd.f32 0.0, %v2660
      %v2662 = vpop.f32.mrf.mxu0
      %2663 = vmatprep.mubr.f32.mxu0 0.0
      %2664 = vmatmul.mubr.f32.gmra.mxu0 %v2478
      %v2665 = vpop.f32.mrf.mxu0
      %v2666 = vadd.f32 0.0, %v2665
      %v2667 = vpop.f32.mrf.mxu0
      %2668 = vmatprep.mubr.f32.mxu0 0.0
      %2669 = vmatmul.mubr.f32.gmra.mxu0 %v2481
      %v2670 = vpop.f32.mrf.mxu0
      %v2671 = vadd.f32 0.0, %v2670
      %v2672 = vpop.f32.mrf.mxu0
      %2673 = vmatprep.mubr.f32.mxu0 0.0
      %2674 = vmatmul.mubr.f32.gmra.mxu0 %v2484
      %v2675 = vpop.f32.mrf.mxu0
      %v2676 = vadd.f32 0.0, %v2675
      %v2677 = vpop.f32.mrf.mxu0
      %2678 = vmatprep.mubr.f32.mxu0 0.0
      %2679 = vmatmul.mubr.f32.gmra.mxu0 %v2487
      %v2680 = vpop.f32.mrf.mxu0
      %v2681 = vadd.f32 0.0, %v2680
      %v2682 = vpop.f32.mrf.mxu0
      %2683 = vmatprep.mubr.f32.mxu0 0.0
      %2684 = vmatmul.mubr.f32.gmra.mxu0 %v2490
      %v2685 = vpop.f32.mrf.mxu0
      %v2686 = vadd.f32 0.0, %v2685
      %v2687 = vpop.f32.mrf.mxu0
      %2688 = vmatprep.mubr.f32.mxu0 0.0
      %2689 = vmatmul.mubr.f32.gmra.mxu0 %v2493
      %v2690 = vpop.f32.mrf.mxu0
      %v2691 = vadd.f32 0.0, %v2690
      %v2692 = vpop.f32.mrf.mxu0
      %2693 = vmatprep.mubr.f32.mxu0 0.0
      %2694 = vmatmul.mubr.f32.gmra.mxu0 %v2496
      %v2695 = vpop.f32.mrf.mxu0
      %v2696 = vadd.f32 0.0, %v2695
      %v2697 = vpop.f32.mrf.mxu0
      %2698 = vmatprep.mubr.f32.mxu0 0.0
      %2699 = vmatmul.mubr.f32.gmra.mxu0 %v2499
      %v2700 = vpop.f32.mrf.mxu0
      %v2701 = vadd.f32 0.0, %v2700
      %v2702 = vpop.f32.mrf.mxu0
      %2703 = vmatprep.mubr.f32.mxu0 0.0
      %2704 = vmatmul.mubr.f32.gmra.mxu0 %v2502
      %v2705 = vpop.f32.mrf.mxu0
      %v2706 = vadd.f32 0.0, %v2705
      %v2707 = vpop.f32.mrf.mxu0
      %2708 = vmatprep.mubr.f32.mxu0 0.0
      %2709 = vmatmul.mubr.f32.gmra.mxu0 %v2505
      %v2710 = vpop.f32.mrf.mxu0
      %v2711 = vadd.f32 0.0, %v2710
      %v2712 = vpop.f32.mrf.mxu0
      %2713 = vmatprep.mubr.f32.mxu0 0.0
      %2714 = vmatmul.mubr.f32.gmra.mxu0 %v2508
      %v2715 = vpop.f32.mrf.mxu0
      %v2716 = vadd.f32 0.0, %v2715
      %v2717 = vpop.f32.mrf.mxu0
      %2718 = vmatprep.mubr.f32.mxu0 0.0
      %2719 = vmatmul.mubr.f32.gmra.mxu0 %v2511
      %v2720 = vpop.f32.mrf.mxu0
      %v2721 = vadd.f32 0.0, %v2720
      %v2722 = vpop.f32.mrf.mxu0
      %2723 = vmatprep.mubr.f32.mxu0 0.0
      %2724 = vmatmul.mubr.f32.gmra.mxu0 %v2514
      %v2725 = vpop.f32.mrf.mxu0
      %v2726 = vadd.f32 0.0, %v2725
      %v2727 = vpop.f32.mrf.mxu0
      %2728 = vmatprep.mubr.f32.mxu0 0.0
      %2729 = vmatmul.mubr.f32.gmra.mxu0 %v2517
      %v2730 = vpop.f32.mrf.mxu0
      %v2731 = vadd.f32 0.0, %v2730
      %v2732 = vpop.f32.mrf.mxu0
      %2733 = vmatprep.mubr.f32.mxu0 0.0
      %2734 = vmatmul.mubr.f32.gmra.mxu0 %v2520
      %v2735 = vpop.f32.mrf.mxu0
      %v2736 = vadd.f32 0.0, %v2735
      %v2737 = vpop.f32.mrf.mxu0
      %2738 = vmatprep.mubr.f32.mxu0 0.0
      %2739 = vmatmul.mubr.f32.gmra.mxu0 %v2523
      %v2740 = vpop.f32.mrf.mxu0
      %v2741 = vadd.f32 0.0, %v2740
      %v2742 = vpop.f32.mrf.mxu0
      %2743 = vmatprep.mubr.f32.mxu0 0.0
      %2744 = vmatmul.mubr.f32.gmra.mxu0 %v2526
      %v2745 = vpop.f32.mrf.mxu0
      %v2746 = vadd.f32 0.0, %v2745
      %v2747 = vpop.f32.mrf.mxu0
      %2748 = vmatprep.mubr.f32.mxu0 0.0
      %2749 = vmatmul.mubr.f32.gmra.mxu0 %v2529
      %v2750 = vpop.f32.mrf.mxu0
      %v2751 = vadd.f32 0.0, %v2750
      %v2752 = vpop.f32.mrf.mxu0
      %2753 = vmatprep.mubr.f32.mxu0 0.0
      %2754 = vmatmul.mubr.f32.gmra.mxu0 %v2532
      %v2755 = vpop.f32.mrf.mxu0
      %v2756 = vadd.f32 0.0, %v2755
      %v2757 = vpop.f32.mrf.mxu0
      %2758 = vdwg.mxu0
      %v2759 = vadd.f32 %v2371, %v2601
      %v2760 = vadd.f32 %v2372, %v2606
      %v2761 = vadd.f32 %v2373, %v2611
      %v2762 = vadd.f32 %v2374, %v2616
      %v2763 = vadd.f32 %v2375, %v2621
      %v2764 = vadd.f32 %v2376, %v2626
      %v2765 = vadd.f32 %v2377, %v2631
      %v2766 = vadd.f32 %v2378, %v2636
      %v2767 = vadd.f32 %v2379, %v2641
      %v2768 = vadd.f32 %v2380, %v2646
      %v2769 = vadd.f32 %v2381, %v2651
      %v2770 = vadd.f32 %v2382, %v2656
      %v2771 = vadd.f32 %v2383, %v2661
      %v2772 = vadd.f32 %v2384, %v2666
      %v2773 = vadd.f32 %v2385, %v2671
      %v2774 = vadd.f32 %v2386, %v2676
      %v2775 = vadd.f32 %v2387, %v2681
      %v2776 = vadd.f32 %v2388, %v2686
      %v2777 = vadd.f32 %v2389, %v2691
      %v2778 = vadd.f32 %v2390, %v2696
      %v2779 = vadd.f32 %v2391, %v2701
      %v2780 = vadd.f32 %v2392, %v2706
      %v2781 = vadd.f32 %v2393, %v2711
      %v2782 = vadd.f32 %v2394, %v2716
      %v2783 = vadd.f32 %v2395, %v2721
      %v2784 = vadd.f32 %v2396, %v2726
      %v2785 = vadd.f32 %v2397, %v2731
      %v2786 = vadd.f32 %v2398, %v2736
      %v2787 = vadd.f32 %v2399, %v2741
      %v2788 = vadd.f32 %v2400, %v2746
      %v2789 = vadd.f32 %v2401, %v2751
      %v2790 = vadd.f32 %v2402, %v2756
      %v2791 = vld [vmem:[%s2403 + $0x1] sm:$0xff]
      %v2792 = vld [vmem:[%s2403 + $0x9] sm:$0xff]
      %v2793 = vld [vmem:[%s2403 + $0x19] sm:$0xff]
      %v2794 = vld [vmem:[%s2403 + $0x21] sm:$0xff]
      %v2795 = vld [vmem:[%s2403 + $0x31] sm:$0xff]
      %v2796 = vld [vmem:[%s2403 + $0x39] sm:$0xff]
      %v2797 = vld [vmem:[%s2403 + $0x49] sm:$0xff]
      %v2798 = vld [vmem:[%s2403 + $0x51] sm:$0xff]
      %v2799 = vld [vmem:[%s2403 + $0x61] sm:$0xff]
      %v2800 = vld [vmem:[%s2403 + $0x69] sm:$0xff]
      %v2801 = vld [vmem:[%s2403 + $0x79] sm:$0xff]
      %v2802 = vld [vmem:[%s2403 + $0x81] sm:$0xff]
      %v2803 = vld [vmem:[%s2403 + $0x91] sm:$0xff]
      %v2804 = vld [vmem:[%s2403 + $0x99] sm:$0xff]
      %v2805 = vld [vmem:[%s2403 + $0xa9] sm:$0xff]
      %v2806 = vld [vmem:[%s2403 + $0xb1] sm:$0xff]
      %v2807 = vld [vmem:[%s2403 + $0xc1] sm:$0xff]
      %v2808 = vld [vmem:[%s2403 + $0xc9] sm:$0xff]
      %v2809 = vld [vmem:[%s2403 + $0xd9] sm:$0xff]
      %v2810 = vld [vmem:[%s2403 + $0xe1] sm:$0xff]
      %v2811 = vld [vmem:[%s2403 + $0xf1] sm:$0xff]
      %v2812 = vld [vmem:[%s2403 + $0xf9] sm:$0xff]
      %v2813 = vld [vmem:[%s2403 + $0x109] sm:$0xff]
      %v2814 = vld [vmem:[%s2403 + $0x111] sm:$0xff]
      %v2815 = vld [vmem:[%s2403 + $0x121] sm:$0xff]
      %v2816 = vld [vmem:[%s2403 + $0x129] sm:$0xff]
      %v2817 = vld [vmem:[%s2403 + $0x139] sm:$0xff]
      %v2818 = vld [vmem:[%s2403 + $0x141] sm:$0xff]
      %v2819 = vld [vmem:[%s2403 + $0x151] sm:$0xff]
      %v2820 = vld [vmem:[%s2403 + $0x159] sm:$0xff]
      %v2821 = vld [vmem:[%s2403 + $0x169] sm:$0xff]
      %v2822 = vld [vmem:[%s2403 + $0x171] sm:$0xff]
      %s2823 = scalar_lea.vmem %s1, 56
      %v2824 = vld [vmem:[%s2823] sm:$0xff]
      %v2826 = vsel %vm211, %v2791, 0
      %v2829 = vsel %vm211, %v2792, 0
      %v2832 = vsel %vm211, %v2793, 0
      %v2835 = vsel %vm211, %v2794, 0
      %v2838 = vsel %vm211, %v2795, 0
      %v2841 = vsel %vm211, %v2796, 0
      %v2844 = vsel %vm211, %v2797, 0
      %v2847 = vsel %vm211, %v2798, 0
      %v2850 = vsel %vm211, %v2799, 0
      %v2853 = vsel %vm211, %v2800, 0
      %v2856 = vsel %vm211, %v2801, 0
      %v2859 = vsel %vm211, %v2802, 0
      %v2862 = vsel %vm211, %v2803, 0
      %v2865 = vsel %vm211, %v2804, 0
      %v2868 = vsel %vm211, %v2805, 0
      %v2871 = vsel %vm211, %v2806, 0
      %v2874 = vsel %vm211, %v2807, 0
      %v2877 = vsel %vm211, %v2808, 0
      %v2880 = vsel %vm211, %v2809, 0
      %v2883 = vsel %vm211, %v2810, 0
      %v2886 = vsel %vm211, %v2811, 0
      %v2889 = vsel %vm211, %v2812, 0
      %v2892 = vsel %vm211, %v2813, 0
      %v2895 = vsel %vm211, %v2814, 0
      %v2898 = vsel %vm211, %v2815, 0
      %v2901 = vsel %vm211, %v2816, 0
      %v2904 = vsel %vm211, %v2817, 0
      %v2907 = vsel %vm211, %v2818, 0
      %v2910 = vsel %vm211, %v2819, 0
      %v2913 = vsel %vm211, %v2820, 0
      %v2916 = vsel %vm211, %v2821, 0
      %v2919 = vsel %vm211, %v2822, 0
      %2921 = vmatprep.subr.mxu0 0.0
      %2922 = vmatpush1.msra.mxu0 0.0
      %2923 = vmatprep.subr.mxu0 0.0
      %2924 = vmatpush1.msra.mxu0 0.0
      %2925 = vmatprep.subr.mxu0 0.0
      %2926 = vmatpush1.msra.mxu0 0.0
      %2927 = vmatprep.subr.mxu0 0.0
      %2928 = vmatpush1.msra.mxu0 0.0
      %2929 = vmatprep.subr.mxu0 0.0
      %2930 = vmatpush1.msra.mxu0 0.0
      %2931 = vmatprep.subr.mxu0 0.0
      %2932 = vmatpush1.msra.mxu0 0.0
      %2933 = vmatprep.subr.mxu0 0.0
      %2934 = vmatpush1.msra.mxu0 0.0
      %2935 = vmatprep.subr.mxu0 0.0
      %2936 = vmatpush1.msra.mxu0 0.0
      %2937 = vmatprep.subr.mxu0 0.0
      %2938 = vmatpush1.msra.mxu0 0.0
      %2939 = vmatprep.subr.mxu0 0.0
      %2940 = vmatpush1.msra.mxu0 0.0
      %2941 = vmatprep.subr.mxu0 0.0
      %2942 = vmatpush1.msra.mxu0 0.0
      %2943 = vmatprep.subr.mxu0 0.0
      %2944 = vmatpush1.msra.mxu0 0.0
      %2945 = vmatprep.subr.mxu0 0.0
      %2946 = vmatpush1.msra.mxu0 0.0
      %2947 = vmatprep.subr.mxu0 0.0
      %2948 = vmatpush1.msra.mxu0 0.0
      %2949 = vmatprep.subr.mxu0 0.0
      %2950 = vmatpush1.msra.mxu0 0.0
      %2951 = vmatprep.subr.mxu0 0.0
      %2952 = vmatpush1.msra.mxu0 %v2824
      %2953 = vmatprep.subr.mxu0 0.0
      %2954 = vmatpush2.msra.mxu0 0.0
      %2955 = vmatprep.subr.mxu0 0.0
      %2956 = vmatpush2.msra.mxu0 0.0
      %2957 = vmatprep.subr.mxu0 0.0
      %2958 = vmatpush2.msra.mxu0 0.0
      %2959 = vmatprep.subr.mxu0 0.0
      %2960 = vmatpush2.msra.mxu0 0.0
      %2961 = vmatprep.subr.mxu0 0.0
      %2962 = vmatpush2.msra.mxu0 0.0
      %2963 = vmatprep.subr.mxu0 0.0
      %2964 = vmatpush2.msra.mxu0 0.0
      %2965 = vmatprep.subr.mxu0 0.0
      %2966 = vmatpush2.msra.mxu0 0.0
      %2967 = vmatprep.subr.mxu0 0.0
      %2968 = vmatpush2.msra.mxu0 0.0
      %2969 = vmatprep.subr.mxu0 0.0
      %2970 = vmatpush2.msra.mxu0 0.0
      %2971 = vmatprep.subr.mxu0 0.0
      %2972 = vmatpush2.msra.mxu0 0.0
      %2973 = vmatprep.subr.mxu0 0.0
      %2974 = vmatpush2.msra.mxu0 0.0
      %2975 = vmatprep.subr.mxu0 0.0
      %2976 = vmatpush2.msra.mxu0 0.0
      %2977 = vmatprep.subr.mxu0 0.0
      %2978 = vmatpush2.msra.mxu0 0.0
      %2979 = vmatprep.subr.mxu0 0.0
      %2980 = vmatpush2.msra.mxu0 0.0
      %2981 = vmatprep.subr.mxu0 0.0
      %2982 = vmatpush2.msra.mxu0 0.0
      %2983 = vmatprep.subr.mxu0 0.0
      %2984 = vmatpush2.msra.mxu0 0.0
      %2985 = vmatprep.mubr.f32.mxu0 0.0
      %2986 = vmatmul.mubr.f32.gmra.mxu0 %v2826
      %v2987 = vpop.f32.mrf.mxu0
      %v2988 = vadd.f32 0.0, %v2987
      %v2989 = vpop.f32.mrf.mxu0
      %2990 = vmatprep.mubr.f32.mxu0 0.0
      %2991 = vmatmul.mubr.f32.gmra.mxu0 %v2829
      %v2992 = vpop.f32.mrf.mxu0
      %v2993 = vadd.f32 0.0, %v2992
      %v2994 = vpop.f32.mrf.mxu0
      %2995 = vmatprep.mubr.f32.mxu0 0.0
      %2996 = vmatmul.mubr.f32.gmra.mxu0 %v2832
      %v2997 = vpop.f32.mrf.mxu0
      %v2998 = vadd.f32 0.0, %v2997
      %v2999 = vpop.f32.mrf.mxu0
      %3000 = vmatprep.mubr.f32.mxu0 0.0
      %3001 = vmatmul.mubr.f32.gmra.mxu0 %v2835
      %v3002 = vpop.f32.mrf.mxu0
      %v3003 = vadd.f32 0.0, %v3002
      %v3004 = vpop.f32.mrf.mxu0
      %3005 = vmatprep.mubr.f32.mxu0 0.0
      %3006 = vmatmul.mubr.f32.gmra.mxu0 %v2838
      %v3007 = vpop.f32.mrf.mxu0
      %v3008 = vadd.f32 0.0, %v3007
      %v3009 = vpop.f32.mrf.mxu0
      %3010 = vmatprep.mubr.f32.mxu0 0.0
      %3011 = vmatmul.mubr.f32.gmra.mxu0 %v2841
      %v3012 = vpop.f32.mrf.mxu0
      %v3013 = vadd.f32 0.0, %v3012
      %v3014 = vpop.f32.mrf.mxu0
      %3015 = vmatprep.mubr.f32.mxu0 0.0
      %3016 = vmatmul.mubr.f32.gmra.mxu0 %v2844
      %v3017 = vpop.f32.mrf.mxu0
      %v3018 = vadd.f32 0.0, %v3017
      %v3019 = vpop.f32.mrf.mxu0
      %3020 = vmatprep.mubr.f32.mxu0 0.0
      %3021 = vmatmul.mubr.f32.gmra.mxu0 %v2847
      %v3022 = vpop.f32.mrf.mxu0
      %v3023 = vadd.f32 0.0, %v3022
      %v3024 = vpop.f32.mrf.mxu0
      %3025 = vmatprep.mubr.f32.mxu0 0.0
      %3026 = vmatmul.mubr.f32.gmra.mxu0 %v2850
      %v3027 = vpop.f32.mrf.mxu0
      %v3028 = vadd.f32 0.0, %v3027
      %v3029 = vpop.f32.mrf.mxu0
      %3030 = vmatprep.mubr.f32.mxu0 0.0
      %3031 = vmatmul.mubr.f32.gmra.mxu0 %v2853
      %v3032 = vpop.f32.mrf.mxu0
      %v3033 = vadd.f32 0.0, %v3032
      %v3034 = vpop.f32.mrf.mxu0
      %3035 = vmatprep.mubr.f32.mxu0 0.0
      %3036 = vmatmul.mubr.f32.gmra.mxu0 %v2856
      %v3037 = vpop.f32.mrf.mxu0
      %v3038 = vadd.f32 0.0, %v3037
      %v3039 = vpop.f32.mrf.mxu0
      %3040 = vmatprep.mubr.f32.mxu0 0.0
      %3041 = vmatmul.mubr.f32.gmra.mxu0 %v2859
      %v3042 = vpop.f32.mrf.mxu0
      %v3043 = vadd.f32 0.0, %v3042
      %v3044 = vpop.f32.mrf.mxu0
      %3045 = vmatprep.mubr.f32.mxu0 0.0
      %3046 = vmatmul.mubr.f32.gmra.mxu0 %v2862
      %v3047 = vpop.f32.mrf.mxu0
      %v3048 = vadd.f32 0.0, %v3047
      %v3049 = vpop.f32.mrf.mxu0
      %3050 = vmatprep.mubr.f32.mxu0 0.0
      %3051 = vmatmul.mubr.f32.gmra.mxu0 %v2865
      %v3052 = vpop.f32.mrf.mxu0
      %v3053 = vadd.f32 0.0, %v3052
      %v3054 = vpop.f32.mrf.mxu0
      %3055 = vmatprep.mubr.f32.mxu0 0.0
      %3056 = vmatmul.mubr.f32.gmra.mxu0 %v2868
      %v3057 = vpop.f32.mrf.mxu0
      %v3058 = vadd.f32 0.0, %v3057
      %v3059 = vpop.f32.mrf.mxu0
      %3060 = vmatprep.mubr.f32.mxu0 0.0
      %3061 = vmatmul.mubr.f32.gmra.mxu0 %v2871
      %v3062 = vpop.f32.mrf.mxu0
      %v3063 = vadd.f32 0.0, %v3062
      %v3064 = vpop.f32.mrf.mxu0
      %3065 = vmatprep.mubr.f32.mxu0 0.0
      %3066 = vmatmul.mubr.f32.gmra.mxu0 %v2874
      %v3067 = vpop.f32.mrf.mxu0
      %v3068 = vadd.f32 0.0, %v3067
      %v3069 = vpop.f32.mrf.mxu0
      %3070 = vmatprep.mubr.f32.mxu0 0.0
      %3071 = vmatmul.mubr.f32.gmra.mxu0 %v2877
      %v3072 = vpop.f32.mrf.mxu0
      %v3073 = vadd.f32 0.0, %v3072
      %v3074 = vpop.f32.mrf.mxu0
      %3075 = vmatprep.mubr.f32.mxu0 0.0
      %3076 = vmatmul.mubr.f32.gmra.mxu0 %v2880
      %v3077 = vpop.f32.mrf.mxu0
      %v3078 = vadd.f32 0.0, %v3077
      %v3079 = vpop.f32.mrf.mxu0
      %3080 = vmatprep.mubr.f32.mxu0 0.0
      %3081 = vmatmul.mubr.f32.gmra.mxu0 %v2883
      %v3082 = vpop.f32.mrf.mxu0
      %v3083 = vadd.f32 0.0, %v3082
      %v3084 = vpop.f32.mrf.mxu0
      %3085 = vmatprep.mubr.f32.mxu0 0.0
      %3086 = vmatmul.mubr.f32.gmra.mxu0 %v2886
      %v3087 = vpop.f32.mrf.mxu0
      %v3088 = vadd.f32 0.0, %v3087
      %v3089 = vpop.f32.mrf.mxu0
      %3090 = vmatprep.mubr.f32.mxu0 0.0
      %3091 = vmatmul.mubr.f32.gmra.mxu0 %v2889
      %v3092 = vpop.f32.mrf.mxu0
      %v3093 = vadd.f32 0.0, %v3092
      %v3094 = vpop.f32.mrf.mxu0
      %3095 = vmatprep.mubr.f32.mxu0 0.0
      %3096 = vmatmul.mubr.f32.gmra.mxu0 %v2892
      %v3097 = vpop.f32.mrf.mxu0
      %v3098 = vadd.f32 0.0, %v3097
      %v3099 = vpop.f32.mrf.mxu0
      %3100 = vmatprep.mubr.f32.mxu0 0.0
      %3101 = vmatmul.mubr.f32.gmra.mxu0 %v2895
      %v3102 = vpop.f32.mrf.mxu0
      %v3103 = vadd.f32 0.0, %v3102
      %v3104 = vpop.f32.mrf.mxu0
      %3105 = vmatprep.mubr.f32.mxu0 0.0
      %3106 = vmatmul.mubr.f32.gmra.mxu0 %v2898
      %v3107 = vpop.f32.mrf.mxu0
      %v3108 = vadd.f32 0.0, %v3107
      %v3109 = vpop.f32.mrf.mxu0
      %3110 = vmatprep.mubr.f32.mxu0 0.0
      %3111 = vmatmul.mubr.f32.gmra.mxu0 %v2901
      %v3112 = vpop.f32.mrf.mxu0
      %v3113 = vadd.f32 0.0, %v3112
      %v3114 = vpop.f32.mrf.mxu0
      %3115 = vmatprep.mubr.f32.mxu0 0.0
      %3116 = vmatmul.mubr.f32.gmra.mxu0 %v2904
      %v3117 = vpop.f32.mrf.mxu0
      %v3118 = vadd.f32 0.0, %v3117
      %v3119 = vpop.f32.mrf.mxu0
      %3120 = vmatprep.mubr.f32.mxu0 0.0
      %3121 = vmatmul.mubr.f32.gmra.mxu0 %v2907
      %v3122 = vpop.f32.mrf.mxu0
      %v3123 = vadd.f32 0.0, %v3122
      %v3124 = vpop.f32.mrf.mxu0
      %3125 = vmatprep.mubr.f32.mxu0 0.0
      %3126 = vmatmul.mubr.f32.gmra.mxu0 %v2910
      %v3127 = vpop.f32.mrf.mxu0
      %v3128 = vadd.f32 0.0, %v3127
      %v3129 = vpop.f32.mrf.mxu0
      %3130 = vmatprep.mubr.f32.mxu0 0.0
      %3131 = vmatmul.mubr.f32.gmra.mxu0 %v2913
      %v3132 = vpop.f32.mrf.mxu0
      %v3133 = vadd.f32 0.0, %v3132
      %v3134 = vpop.f32.mrf.mxu0
      %3135 = vmatprep.mubr.f32.mxu0 0.0
      %3136 = vmatmul.mubr.f32.gmra.mxu0 %v2916
      %v3137 = vpop.f32.mrf.mxu0
      %v3138 = vadd.f32 0.0, %v3137
      %v3139 = vpop.f32.mrf.mxu0
      %3140 = vmatprep.mubr.f32.mxu0 0.0
      %3141 = vmatmul.mubr.f32.gmra.mxu0 %v2919
      %v3142 = vpop.f32.mrf.mxu0
      %v3143 = vadd.f32 0.0, %v3142
      %v3144 = vpop.f32.mrf.mxu0
      %3145 = vdwg.mxu0
      %v3146 = vadd.f32 %v2759, %v2988
      %v3147 = vadd.f32 %v2760, %v2993
      %v3148 = vadd.f32 %v2761, %v2998
      %v3149 = vadd.f32 %v2762, %v3003
      %v3150 = vadd.f32 %v2763, %v3008
      %v3151 = vadd.f32 %v2764, %v3013
      %v3152 = vadd.f32 %v2765, %v3018
      %v3153 = vadd.f32 %v2766, %v3023
      %v3154 = vadd.f32 %v2767, %v3028
      %v3155 = vadd.f32 %v2768, %v3033
      %v3156 = vadd.f32 %v2769, %v3038
      %v3157 = vadd.f32 %v2770, %v3043
      %v3158 = vadd.f32 %v2771, %v3048
      %v3159 = vadd.f32 %v2772, %v3053
      %v3160 = vadd.f32 %v2773, %v3058
      %v3161 = vadd.f32 %v2774, %v3063
      %v3162 = vadd.f32 %v2775, %v3068
      %v3163 = vadd.f32 %v2776, %v3073
      %v3164 = vadd.f32 %v2777, %v3078
      %v3165 = vadd.f32 %v2778, %v3083
      %v3166 = vadd.f32 %v2779, %v3088
      %v3167 = vadd.f32 %v2780, %v3093
      %v3168 = vadd.f32 %v2781, %v3098
      %v3169 = vadd.f32 %v2782, %v3103
      %v3170 = vadd.f32 %v2783, %v3108
      %v3171 = vadd.f32 %v2784, %v3113
      %v3172 = vadd.f32 %v2785, %v3118
      %v3173 = vadd.f32 %v2786, %v3123
      %v3174 = vadd.f32 %v2787, %v3128
      %v3175 = vadd.f32 %v2788, %v3133
      %v3176 = vadd.f32 %v2789, %v3138
      %v3177 = vadd.f32 %v2790, %v3143
      %v3178 = vld [vmem:[%s2403 + $0x2] sm:$0xff]
      %v3179 = vld [vmem:[%s2403 + $0xa] sm:$0xff]
      %v3180 = vld [vmem:[%s2403 + $0x1a] sm:$0xff]
      %v3181 = vld [vmem:[%s2403 + $0x22] sm:$0xff]
      %v3182 = vld [vmem:[%s2403 + $0x32] sm:$0xff]
      %v3183 = vld [vmem:[%s2403 + $0x3a] sm:$0xff]
      %v3184 = vld [vmem:[%s2403 + $0x4a] sm:$0xff]
      %v3185 = vld [vmem:[%s2403 + $0x52] sm:$0xff]
      %v3186 = vld [vmem:[%s2403 + $0x62] sm:$0xff]
      %v3187 = vld [vmem:[%s2403 + $0x6a] sm:$0xff]
      %v3188 = vld [vmem:[%s2403 + $0x7a] sm:$0xff]
      %v3189 = vld [vmem:[%s2403 + $0x82] sm:$0xff]
      %v3190 = vld [vmem:[%s2403 + $0x92] sm:$0xff]
      %v3191 = vld [vmem:[%s2403 + $0x9a] sm:$0xff]
      %v3192 = vld [vmem:[%s2403 + $0xaa] sm:$0xff]
      %v3193 = vld [vmem:[%s2403 + $0xb2] sm:$0xff]
      %v3194 = vld [vmem:[%s2403 + $0xc2] sm:$0xff]
      %v3195 = vld [vmem:[%s2403 + $0xca] sm:$0xff]
      %v3196 = vld [vmem:[%s2403 + $0xda] sm:$0xff]
      %v3197 = vld [vmem:[%s2403 + $0xe2] sm:$0xff]
      %v3198 = vld [vmem:[%s2403 + $0xf2] sm:$0xff]
      %v3199 = vld [vmem:[%s2403 + $0xfa] sm:$0xff]
      %v3200 = vld [vmem:[%s2403 + $0x10a] sm:$0xff]
      %v3201 = vld [vmem:[%s2403 + $0x112] sm:$0xff]
      %v3202 = vld [vmem:[%s2403 + $0x122] sm:$0xff]
      %v3203 = vld [vmem:[%s2403 + $0x12a] sm:$0xff]
      %v3204 = vld [vmem:[%s2403 + $0x13a] sm:$0xff]
      %v3205 = vld [vmem:[%s2403 + $0x142] sm:$0xff]
      %v3206 = vld [vmem:[%s2403 + $0x152] sm:$0xff]
      %v3207 = vld [vmem:[%s2403 + $0x15a] sm:$0xff]
      %v3208 = vld [vmem:[%s2403 + $0x16a] sm:$0xff]
      %v3209 = vld [vmem:[%s2403 + $0x172] sm:$0xff]
      %s3210 = scalar_lea.vmem %s1, 64
      %v3211 = vld [vmem:[%s3210] sm:$0xff]
      %v3213 = vsel %vm211, %v3178, 0
      %v3216 = vsel %vm211, %v3179, 0
      %v3219 = vsel %vm211, %v3180, 0
      %v3222 = vsel %vm211, %v3181, 0
      %v3225 = vsel %vm211, %v3182, 0
      %v3228 = vsel %vm211, %v3183, 0
      %v3231 = vsel %vm211, %v3184, 0
      %v3234 = vsel %vm211, %v3185, 0
      %v3237 = vsel %vm211, %v3186, 0
      %v3240 = vsel %vm211, %v3187, 0
      %v3243 = vsel %vm211, %v3188, 0
      %v3246 = vsel %vm211, %v3189, 0
      %v3249 = vsel %vm211, %v3190, 0
      %v3252 = vsel %vm211, %v3191, 0
      %v3255 = vsel %vm211, %v3192, 0
      %v3258 = vsel %vm211, %v3193, 0
      %v3261 = vsel %vm211, %v3194, 0
      %v3264 = vsel %vm211, %v3195, 0
      %v3267 = vsel %vm211, %v3196, 0
      %v3270 = vsel %vm211, %v3197, 0
      %v3273 = vsel %vm211, %v3198, 0
      %v3276 = vsel %vm211, %v3199, 0
      %v3279 = vsel %vm211, %v3200, 0
      %v3282 = vsel %vm211, %v3201, 0
      %v3285 = vsel %vm211, %v3202, 0
      %v3288 = vsel %vm211, %v3203, 0
      %v3291 = vsel %vm211, %v3204, 0
      %v3294 = vsel %vm211, %v3205, 0
      %v3297 = vsel %vm211, %v3206, 0
      %v3300 = vsel %vm211, %v3207, 0
      %v3303 = vsel %vm211, %v3208, 0
      %v3306 = vsel %vm211, %v3209, 0
      %3308 = vmatprep.subr.mxu0 0.0
      %3309 = vmatpush1.msra.mxu0 0.0
      %3310 = vmatprep.subr.mxu0 0.0
      %3311 = vmatpush1.msra.mxu0 0.0
      %3312 = vmatprep.subr.mxu0 0.0
      %3313 = vmatpush1.msra.mxu0 0.0
      %3314 = vmatprep.subr.mxu0 0.0
      %3315 = vmatpush1.msra.mxu0 0.0
      %3316 = vmatprep.subr.mxu0 0.0
      %3317 = vmatpush1.msra.mxu0 0.0
      %3318 = vmatprep.subr.mxu0 0.0
      %3319 = vmatpush1.msra.mxu0 0.0
      %3320 = vmatprep.subr.mxu0 0.0
      %3321 = vmatpush1.msra.mxu0 0.0
      %3322 = vmatprep.subr.mxu0 0.0
      %3323 = vmatpush1.msra.mxu0 0.0
      %3324 = vmatprep.subr.mxu0 0.0
      %3325 = vmatpush1.msra.mxu0 0.0
      %3326 = vmatprep.subr.mxu0 0.0
      %3327 = vmatpush1.msra.mxu0 0.0
      %3328 = vmatprep.subr.mxu0 0.0
      %3329 = vmatpush1.msra.mxu0 0.0
      %3330 = vmatprep.subr.mxu0 0.0
      %3331 = vmatpush1.msra.mxu0 0.0
      %3332 = vmatprep.subr.mxu0 0.0
      %3333 = vmatpush1.msra.mxu0 0.0
      %3334 = vmatprep.subr.mxu0 0.0
      %3335 = vmatpush1.msra.mxu0 0.0
      %3336 = vmatprep.subr.mxu0 0.0
      %3337 = vmatpush1.msra.mxu0 0.0
      %3338 = vmatprep.subr.mxu0 0.0
      %3339 = vmatpush1.msra.mxu0 %v3211
      %3340 = vmatprep.subr.mxu0 0.0
      %3341 = vmatpush2.msra.mxu0 0.0
      %3342 = vmatprep.subr.mxu0 0.0
      %3343 = vmatpush2.msra.mxu0 0.0
      %3344 = vmatprep.subr.mxu0 0.0
      %3345 = vmatpush2.msra.mxu0 0.0
      %3346 = vmatprep.subr.mxu0 0.0
      %3347 = vmatpush2.msra.mxu0 0.0
      %3348 = vmatprep.subr.mxu0 0.0
      %3349 = vmatpush2.msra.mxu0 0.0
      %3350 = vmatprep.subr.mxu0 0.0
      %3351 = vmatpush2.msra.mxu0 0.0
      %3352 = vmatprep.subr.mxu0 0.0
      %3353 = vmatpush2.msra.mxu0 0.0
      %3354 = vmatprep.subr.mxu0 0.0
      %3355 = vmatpush2.msra.mxu0 0.0
      %3356 = vmatprep.subr.mxu0 0.0
      %3357 = vmatpush2.msra.mxu0 0.0
      %3358 = vmatprep.subr.mxu0 0.0
      %3359 = vmatpush2.msra.mxu0 0.0
      %3360 = vmatprep.subr.mxu0 0.0
      %3361 = vmatpush2.msra.mxu0 0.0
      %3362 = vmatprep.subr.mxu0 0.0
      %3363 = vmatpush2.msra.mxu0 0.0
      %3364 = vmatprep.subr.mxu0 0.0
      %3365 = vmatpush2.msra.mxu0 0.0
      %3366 = vmatprep.subr.mxu0 0.0
      %3367 = vmatpush2.msra.mxu0 0.0
      %3368 = vmatprep.subr.mxu0 0.0
      %3369 = vmatpush2.msra.mxu0 0.0
      %3370 = vmatprep.subr.mxu0 0.0
      %3371 = vmatpush2.msra.mxu0 0.0
      %3372 = vmatprep.mubr.f32.mxu0 0.0
      %3373 = vmatmul.mubr.f32.gmra.mxu0 %v3213
      %v3374 = vpop.f32.mrf.mxu0
      %v3375 = vadd.f32 0.0, %v3374
      %v3376 = vpop.f32.mrf.mxu0
      %3377 = vmatprep.mubr.f32.mxu0 0.0
      %3378 = vmatmul.mubr.f32.gmra.mxu0 %v3216
      %v3379 = vpop.f32.mrf.mxu0
      %v3380 = vadd.f32 0.0, %v3379
      %v3381 = vpop.f32.mrf.mxu0
      %3382 = vmatprep.mubr.f32.mxu0 0.0
      %3383 = vmatmul.mubr.f32.gmra.mxu0 %v3219
      %v3384 = vpop.f32.mrf.mxu0
      %v3385 = vadd.f32 0.0, %v3384
      %v3386 = vpop.f32.mrf.mxu0
      %3387 = vmatprep.mubr.f32.mxu0 0.0
      %3388 = vmatmul.mubr.f32.gmra.mxu0 %v3222
      %v3389 = vpop.f32.mrf.mxu0
      %v3390 = vadd.f32 0.0, %v3389
      %v3391 = vpop.f32.mrf.mxu0
      %3392 = vmatprep.mubr.f32.mxu0 0.0
      %3393 = vmatmul.mubr.f32.gmra.mxu0 %v3225
      %v3394 = vpop.f32.mrf.mxu0
      %v3395 = vadd.f32 0.0, %v3394
      %v3396 = vpop.f32.mrf.mxu0
      %3397 = vmatprep.mubr.f32.mxu0 0.0
      %3398 = vmatmul.mubr.f32.gmra.mxu0 %v3228
      %v3399 = vpop.f32.mrf.mxu0
      %v3400 = vadd.f32 0.0, %v3399
      %v3401 = vpop.f32.mrf.mxu0
      %3402 = vmatprep.mubr.f32.mxu0 0.0
      %3403 = vmatmul.mubr.f32.gmra.mxu0 %v3231
      %v3404 = vpop.f32.mrf.mxu0
      %v3405 = vadd.f32 0.0, %v3404
      %v3406 = vpop.f32.mrf.mxu0
      %3407 = vmatprep.mubr.f32.mxu0 0.0
      %3408 = vmatmul.mubr.f32.gmra.mxu0 %v3234
      %v3409 = vpop.f32.mrf.mxu0
      %v3410 = vadd.f32 0.0, %v3409
      %v3411 = vpop.f32.mrf.mxu0
      %3412 = vmatprep.mubr.f32.mxu0 0.0
      %3413 = vmatmul.mubr.f32.gmra.mxu0 %v3237
      %v3414 = vpop.f32.mrf.mxu0
      %v3415 = vadd.f32 0.0, %v3414
      %v3416 = vpop.f32.mrf.mxu0
      %3417 = vmatprep.mubr.f32.mxu0 0.0
      %3418 = vmatmul.mubr.f32.gmra.mxu0 %v3240
      %v3419 = vpop.f32.mrf.mxu0
      %v3420 = vadd.f32 0.0, %v3419
      %v3421 = vpop.f32.mrf.mxu0
      %3422 = vmatprep.mubr.f32.mxu0 0.0
      %3423 = vmatmul.mubr.f32.gmra.mxu0 %v3243
      %v3424 = vpop.f32.mrf.mxu0
      %v3425 = vadd.f32 0.0, %v3424
      %v3426 = vpop.f32.mrf.mxu0
      %3427 = vmatprep.mubr.f32.mxu0 0.0
      %3428 = vmatmul.mubr.f32.gmra.mxu0 %v3246
      %v3429 = vpop.f32.mrf.mxu0
      %v3430 = vadd.f32 0.0, %v3429
      %v3431 = vpop.f32.mrf.mxu0
      %3432 = vmatprep.mubr.f32.mxu0 0.0
      %3433 = vmatmul.mubr.f32.gmra.mxu0 %v3249
      %v3434 = vpop.f32.mrf.mxu0
      %v3435 = vadd.f32 0.0, %v3434
      %v3436 = vpop.f32.mrf.mxu0
      %3437 = vmatprep.mubr.f32.mxu0 0.0
      %3438 = vmatmul.mubr.f32.gmra.mxu0 %v3252
      %v3439 = vpop.f32.mrf.mxu0
      %v3440 = vadd.f32 0.0, %v3439
      %v3441 = vpop.f32.mrf.mxu0
      %3442 = vmatprep.mubr.f32.mxu0 0.0
      %3443 = vmatmul.mubr.f32.gmra.mxu0 %v3255
      %v3444 = vpop.f32.mrf.mxu0
      %v3445 = vadd.f32 0.0, %v3444
      %v3446 = vpop.f32.mrf.mxu0
      %3447 = vmatprep.mubr.f32.mxu0 0.0
      %3448 = vmatmul.mubr.f32.gmra.mxu0 %v3258
      %v3449 = vpop.f32.mrf.mxu0
      %v3450 = vadd.f32 0.0, %v3449
      %v3451 = vpop.f32.mrf.mxu0
      %3452 = vmatprep.mubr.f32.mxu0 0.0
      %3453 = vmatmul.mubr.f32.gmra.mxu0 %v3261
      %v3454 = vpop.f32.mrf.mxu0
      %v3455 = vadd.f32 0.0, %v3454
      %v3456 = vpop.f32.mrf.mxu0
      %3457 = vmatprep.mubr.f32.mxu0 0.0
      %3458 = vmatmul.mubr.f32.gmra.mxu0 %v3264
      %v3459 = vpop.f32.mrf.mxu0
      %v3460 = vadd.f32 0.0, %v3459
      %v3461 = vpop.f32.mrf.mxu0
      %3462 = vmatprep.mubr.f32.mxu0 0.0
      %3463 = vmatmul.mubr.f32.gmra.mxu0 %v3267
      %v3464 = vpop.f32.mrf.mxu0
      %v3465 = vadd.f32 0.0, %v3464
      %v3466 = vpop.f32.mrf.mxu0
      %3467 = vmatprep.mubr.f32.mxu0 0.0
      %3468 = vmatmul.mubr.f32.gmra.mxu0 %v3270
      %v3469 = vpop.f32.mrf.mxu0
      %v3470 = vadd.f32 0.0, %v3469
      %v3471 = vpop.f32.mrf.mxu0
      %3472 = vmatprep.mubr.f32.mxu0 0.0
      %3473 = vmatmul.mubr.f32.gmra.mxu0 %v3273
      %v3474 = vpop.f32.mrf.mxu0
      %v3475 = vadd.f32 0.0, %v3474
      %v3476 = vpop.f32.mrf.mxu0
      %3477 = vmatprep.mubr.f32.mxu0 0.0
      %3478 = vmatmul.mubr.f32.gmra.mxu0 %v3276
      %v3479 = vpop.f32.mrf.mxu0
      %v3480 = vadd.f32 0.0, %v3479
      %v3481 = vpop.f32.mrf.mxu0
      %3482 = vmatprep.mubr.f32.mxu0 0.0
      %3483 = vmatmul.mubr.f32.gmra.mxu0 %v3279
      %v3484 = vpop.f32.mrf.mxu0
      %v3485 = vadd.f32 0.0, %v3484
      %v3486 = vpop.f32.mrf.mxu0
      %3487 = vmatprep.mubr.f32.mxu0 0.0
      %3488 = vmatmul.mubr.f32.gmra.mxu0 %v3282
      %v3489 = vpop.f32.mrf.mxu0
      %v3490 = vadd.f32 0.0, %v3489
      %v3491 = vpop.f32.mrf.mxu0
      %3492 = vmatprep.mubr.f32.mxu0 0.0
      %3493 = vmatmul.mubr.f32.gmra.mxu0 %v3285
      %v3494 = vpop.f32.mrf.mxu0
      %v3495 = vadd.f32 0.0, %v3494
      %v3496 = vpop.f32.mrf.mxu0
      %3497 = vmatprep.mubr.f32.mxu0 0.0
      %3498 = vmatmul.mubr.f32.gmra.mxu0 %v3288
      %v3499 = vpop.f32.mrf.mxu0
      %v3500 = vadd.f32 0.0, %v3499
      %v3501 = vpop.f32.mrf.mxu0
      %3502 = vmatprep.mubr.f32.mxu0 0.0
      %3503 = vmatmul.mubr.f32.gmra.mxu0 %v3291
      %v3504 = vpop.f32.mrf.mxu0
      %v3505 = vadd.f32 0.0, %v3504
      %v3506 = vpop.f32.mrf.mxu0
      %3507 = vmatprep.mubr.f32.mxu0 0.0
      %3508 = vmatmul.mubr.f32.gmra.mxu0 %v3294
      %v3509 = vpop.f32.mrf.mxu0
      %v3510 = vadd.f32 0.0, %v3509
      %v3511 = vpop.f32.mrf.mxu0
      %3512 = vmatprep.mubr.f32.mxu0 0.0
      %3513 = vmatmul.mubr.f32.gmra.mxu0 %v3297
      %v3514 = vpop.f32.mrf.mxu0
      %v3515 = vadd.f32 0.0, %v3514
      %v3516 = vpop.f32.mrf.mxu0
      %3517 = vmatprep.mubr.f32.mxu0 0.0
      %3518 = vmatmul.mubr.f32.gmra.mxu0 %v3300
      %v3519 = vpop.f32.mrf.mxu0
      %v3520 = vadd.f32 0.0, %v3519
      %v3521 = vpop.f32.mrf.mxu0
      %3522 = vmatprep.mubr.f32.mxu0 0.0
      %3523 = vmatmul.mubr.f32.gmra.mxu0 %v3303
      %v3524 = vpop.f32.mrf.mxu0
      %v3525 = vadd.f32 0.0, %v3524
      %v3526 = vpop.f32.mrf.mxu0
      %3527 = vmatprep.mubr.f32.mxu0 0.0
      %3528 = vmatmul.mubr.f32.gmra.mxu0 %v3306
      %v3529 = vpop.f32.mrf.mxu0
      %v3530 = vadd.f32 0.0, %v3529
      %v3531 = vpop.f32.mrf.mxu0
      %3532 = vdwg.mxu0
      %v3533 = vadd.f32 %v3146, %v3375
      %v3534 = vadd.f32 %v3147, %v3380
      %v3535 = vadd.f32 %v3148, %v3385
      %v3536 = vadd.f32 %v3149, %v3390
      %v3537 = vadd.f32 %v3150, %v3395
      %v3538 = vadd.f32 %v3151, %v3400
      %v3539 = vadd.f32 %v3152, %v3405
      %v3540 = vadd.f32 %v3153, %v3410
      %v3541 = vadd.f32 %v3154, %v3415
      %v3542 = vadd.f32 %v3155, %v3420
      %v3543 = vadd.f32 %v3156, %v3425
      %v3544 = vadd.f32 %v3157, %v3430
      %v3545 = vadd.f32 %v3158, %v3435
      %v3546 = vadd.f32 %v3159, %v3440
      %v3547 = vadd.f32 %v3160, %v3445
      %v3548 = vadd.f32 %v3161, %v3450
      %v3549 = vadd.f32 %v3162, %v3455
      %v3550 = vadd.f32 %v3163, %v3460
      %v3551 = vadd.f32 %v3164, %v3465
      %v3552 = vadd.f32 %v3165, %v3470
      %v3553 = vadd.f32 %v3166, %v3475
      %v3554 = vadd.f32 %v3167, %v3480
      %v3555 = vadd.f32 %v3168, %v3485
      %v3556 = vadd.f32 %v3169, %v3490
      %v3557 = vadd.f32 %v3170, %v3495
      %v3558 = vadd.f32 %v3171, %v3500
      %v3559 = vadd.f32 %v3172, %v3505
      %v3560 = vadd.f32 %v3173, %v3510
      %v3561 = vadd.f32 %v3174, %v3515
      %v3562 = vadd.f32 %v3175, %v3520
      %v3563 = vadd.f32 %v3176, %v3525
      %v3564 = vadd.f32 %v3177, %v3530
      %3565 = vst.msk [vmem:[%s143] sm:$0xff] %vm211, %v3533
      %3566 = vst.msk [vmem:[%s143 + $0x8] sm:$0xff] %vm211, %v3534
      %3567 = vst.msk [vmem:[%s143 + $0x10] sm:$0xff] %vm211, %v3535
      %3568 = vst.msk [vmem:[%s143 + $0x18] sm:$0xff] %vm211, %v3536
      %3569 = vst.msk [vmem:[%s143 + $0x20] sm:$0xff] %vm211, %v3537
      %3570 = vst.msk [vmem:[%s143 + $0x28] sm:$0xff] %vm211, %v3538
      %3571 = vst.msk [vmem:[%s143 + $0x30] sm:$0xff] %vm211, %v3539
      %3572 = vst.msk [vmem:[%s143 + $0x38] sm:$0xff] %vm211, %v3540
      %3573 = vst.msk [vmem:[%s143 + $0x40] sm:$0xff] %vm211, %v3541
      %3574 = vst.msk [vmem:[%s143 + $0x48] sm:$0xff] %vm211, %v3542
      %3575 = vst.msk [vmem:[%s143 + $0x50] sm:$0xff] %vm211, %v3543
      %3576 = vst.msk [vmem:[%s143 + $0x58] sm:$0xff] %vm211, %v3544
      %3577 = vst.msk [vmem:[%s143 + $0x60] sm:$0xff] %vm211, %v3545
      %3578 = vst.msk [vmem:[%s143 + $0x68] sm:$0xff] %vm211, %v3546
      %3579 = vst.msk [vmem:[%s143 + $0x70] sm:$0xff] %vm211, %v3547
      %3580 = vst.msk [vmem:[%s143 + $0x78] sm:$0xff] %vm211, %v3548
      %3581 = vst.msk [vmem:[%s143 + $0x80] sm:$0xff] %vm211, %v3549
      %3582 = vst.msk [vmem:[%s143 + $0x88] sm:$0xff] %vm211, %v3550
      %3583 = vst.msk [vmem:[%s143 + $0x90] sm:$0xff] %vm211, %v3551
      %3584 = vst.msk [vmem:[%s143 + $0x98] sm:$0xff] %vm211, %v3552
      %3585 = vst.msk [vmem:[%s143 + $0xa0] sm:$0xff] %vm211, %v3553
      %3586 = vst.msk [vmem:[%s143 + $0xa8] sm:$0xff] %vm211, %v3554
      %3587 = vst.msk [vmem:[%s143 + $0xb0] sm:$0xff] %vm211, %v3555
      %3588 = vst.msk [vmem:[%s143 + $0xb8] sm:$0xff] %vm211, %v3556
      %3589 = vst.msk [vmem:[%s143 + $0xc0] sm:$0xff] %vm211, %v3557
      %3590 = vst.msk [vmem:[%s143 + $0xc8] sm:$0xff] %vm211, %v3558
      %3591 = vst.msk [vmem:[%s143 + $0xd0] sm:$0xff] %vm211, %v3559
      %3592 = vst.msk [vmem:[%s143 + $0xd8] sm:$0xff] %vm211, %v3560
      %3593 = vst.msk [vmem:[%s143 + $0xe0] sm:$0xff] %vm211, %v3561
      %3594 = vst.msk [vmem:[%s143 + $0xe8] sm:$0xff] %vm211, %v3562
      %3595 = vst.msk [vmem:[%s143 + $0xf0] sm:$0xff] %vm211, %v3563
      %3596 = vst.msk [vmem:[%s143 + $0xf8] sm:$0xff] %vm211, %v3564
      %p3597 = scmp.lt.s32.totalorder %s13, 1
      %s3598 = scalar_select %p3597, %s13, 1
      %s3599 = smul.addr %s3598, 32
      %s3600 = smul.addr %s3599, 8
      %s3601 = scalar_lea.vmem %s2, %s3600
      // Predicated region
      $region29: #{tpu_custom_call.1} parent=27 // pred_check
        %p3602 = pneg %p78
      $region30: #{tpu_custom_call.1} parent=27 // pred_check_branch
        %3604 = sbr.rel (%p3602) target = $region32
      $region31: #{tpu_custom_call.1} parent=27 // pred_region
        _
      $region32: #{tpu_custom_call.1} parent=27 // pred_fallthru
        _
    $region28: #{tpu_custom_call.1} parent=5 // pred_fallthru
      _
    %p3605 = scmp.le.s32.totalorder 2, %s8
    // Predicated region
    $region33: #{tpu_custom_call.1} parent=5 // pred_check
      %p3606 = pneg %p3605
    $region34: #{tpu_custom_call.1} parent=5 // pred_check_branch
      %3608 = sbr.rel (%p3606) target = $region36
    $region35: #{tpu_custom_call.1} parent=5 // pred_region
      %s3609 = ssub.s32 %s8, 2
      // Predicated region
      $region37: #{tpu_custom_call.1} parent=35 // pred_check
        %p3610 = pneg %p84
      $region38: #{tpu_custom_call.1} parent=35 // pred_check_branch
        %3612 = sbr.rel (%p3610) target = $region40
      $region39: #{tpu_custom_call.1} parent=35 // pred_region
        %p3613 = scmp.lt.s32.totalorder %s14, 1
        %s3614 = scalar_select %p3613, %s14, 1
        %s3615 = smul.addr %s3614, 32
        %s3616 = smul.addr %s3615, 8
        %s3617 = scalar_lea.vmem %s2, %s3616
      $region40: #{tpu_custom_call.1} parent=35 // pred_fallthru
        _
    $region36: #{tpu_custom_call.1} parent=5 // pred_fallthru
      _
  $region6: #{tpu_custom_call.1} parent=0 // loop_footer
    %s12 = sadd.s32 1, %s8
  $region7: #{tpu_custom_call.1} parent=0 // loop_footer_branch
    %7 = sbr.rel target = $region3
  $region8: #{tpu_custom_call.1} parent=0 // loop_exit
    _

</llo_original>
